<compile_context>
chip_gen: v6e
topology: v6e:2x2x1
jax: 0.10.0
libtpu: 0.0.40
codegen_flags: <defaults>
</compile_context>

<pallas_src>
import functools
import numpy as np
import jax
import jax.numpy as jnp
from jax import lax
from jax.experimental import pallas as pl
from jax.experimental.pallas import tpu as pltpu

NOUT_PAD = 128  # lane-dense padded output width


# --------------------------------------------------------------------------
# Fused Pallas kernel: whole Seq2SeqRegressor forward in one grid-less call.
# All arrays are tiny (< 100 KiB total) and live fully in VMEM.
# --------------------------------------------------------------------------
def _seq2seq_kernel(B, Ts, Td, Hh, nhid,
                    src_ids_ref, tgt_ids_ref, emb_src_ref, emb_tgt_ref,
                    wih_fr_ref, b_fr_ref, whh_f_ref, whh_r_ref,
                    wih_d_ref, whh_d_ref, b_d_ref,
                    wq_ref, want_ref, wreg_ref, breg_ref,
                    bias_ref, out_ref):
    f32 = jnp.float32

    # ---- Embedding lookup as one-hot matmul (keeps the gather on the MXU).
    def embed(ids, table):                    # ids (rows, 1) int32
        rows = ids.shape[0]
        ntok = table.shape[0]
        iota = lax.broadcasted_iota(jnp.int32, (rows, ntok), 1)
        onehot = (ids == iota).astype(f32)    # exact row selection
        return jnp.dot(onehot, table, preferred_element_type=f32)

    emb_s = embed(src_ids_ref[...], emb_src_ref[...])     # (Ts*B, nemb)
    emb_t = embed(tgt_ids_ref[...], emb_tgt_ref[...])     # (Td*B, nemb)

    # ---- Hoisted input projections.
    # Encoder fwd+rev share one lane-dense (nemb, 8*Hh) matmul, split once.
    xg_fr = jnp.dot(emb_s, wih_fr_ref[...], preferred_element_type=f32) + b_fr_ref[...]
    xg_f = xg_fr[:, :4 * Hh]
    xg_r = xg_fr[:, 4 * Hh:]
    xg_d = jnp.dot(emb_t, wih_d_ref[...], preferred_element_type=f32) + b_d_ref[...]

    # ---- LSTM recurrence (fully unrolled; only h @ W_hh per step).
    # PyTorch gate order: i, f, g, o.
    def lstm(xg, whh, h0, c0, T, H, reverse=False):
        h, c = h0, c0
        outs = [None] * T
        order = range(T - 1, -1, -1) if reverse else range(T)
        for t in order:
            g = xg[t * B:(t + 1) * B, :] + jnp.dot(
                h, whh, preferred_element_type=f32)        # (B, 4H)
            i_g = jax.nn.sigmoid(g[:, 0:H])
            f_g = jax.nn.sigmoid(g[:, H:2 * H])
            g_g = jnp.tanh(g[:, 2 * H:3 * H])
            o_g = jax.nn.sigmoid(g[:, 3 * H:4 * H])
            c = f_g * c + i_g * g_g
            h = o_g * jnp.tanh(c)
            outs[t] = h
        return outs, h, c

    z_h = jnp.zeros((B, Hh), f32)
    outs_f, hf, cf = lstm(xg_f, whh_f_ref[...], z_h, z_h, Ts, Hh)
    outs_r, hr, cr = lstm(xg_r, whh_r_ref[...], z_h, z_h, Ts, Hh, reverse=True)

    # init_dec_hidden (bi_enc=True, nlayer=1): concat fwd/rev final states.
    h0_d = jnp.concatenate([hf, hr], axis=1)               # (B, nhid)
    c0_d = jnp.concatenate([cf, cr], axis=1)
    outs_d, _, _ = lstm(xg_d, whh_d_ref[...], h0_d, c0_d, Td, nhid)

    # ---- Time-major stacks: row index = t * B + b.
    C = jnp.concatenate([jnp.concatenate(outs_f, axis=0),
                         jnp.concatenate(outs_r, axis=0)], axis=1)   # (Ts*B, nhid)
    Q = jnp.concatenate(outs_d, axis=0)                              # (Td*B, nhid)

    # ---- Dot-product attention over ALL batches at once.
    # bias_ref kills cross-batch blocks and padded source positions (-1e30).
    score = lax.dot_general(Q, C, (((1,), (1,)), ((), ())),
                            preferred_element_type=f32)              # (Td*B, Ts*B)
    score = score + bias_ref[...]
    m = jnp.max(score, axis=-1, keepdims=True)
    e = jnp.exp(score - m)
    denom = jnp.sum(e, axis=-1, keepdims=True)
    prob = e * pl.reciprocal(denom, approx=True)                     # softmax over src
    ant = jnp.dot(prob, C, preferred_element_type=f32)               # (Td*B, nhid)

    # ---- concat_proj (split weights, no lane concat of [q, ant]) + regressor.
    proj = jnp.tanh(jnp.dot(Q, wq_ref[...], preferred_element_type=f32)
                    + jnp.dot(ant, want_ref[...], preferred_element_type=f32))
    out = jnp.dot(proj, wreg_ref[...], preferred_element_type=f32) + breg_ref[...]
    out_ref[...] = out                                               # (Td*B, 128)


# --------------------------------------------------------------------------
# Wrapper: prepares fused / lane-dense weight views and calls the kernel.
# --------------------------------------------------------------------------
def seq2seq_forward_pallas(src, tgt, params, cfg):
    Ts, bs = src.shape
    Td = tgt.shape[0] - 1
    nhid = cfg["nhid"]
    Hh = nhid // 2
    nout = cfg["nout"]
    natthid = cfg["natthid"]

    # TODO(synk): pack_padded_sequence / variable-length batches and the
    # replicate() branch (tgt batch > src batch) are not modeled; inputs here
    # contain no pad tokens and matching batch sizes, so both are identities.
    src_ids = src.reshape(Ts * bs, 1).astype(jnp.int32)
    tgt_ids = tgt[:-1].reshape(Td * bs, 1).astype(jnp.int32)

    # Block-structured additive attention bias: row i <-> (t=i//bs, b=i%bs),
    # col j <-> (t_s=j//bs, b_s=j%bs). Allowed iff same batch and not pad.
    rows = jnp.arange(bs * Td)
    cols = jnp.arange(bs * Ts)
    same_b = (rows[:, None] % bs) == (cols[None, :] % bs)
    valid_src = (src.reshape(-1) != cfg["src_pad_idx"])
    bias_big = jnp.where(same_b & valid_src[None, :], 0.0, -1e30).astype(jnp.float32)

    # Fuse encoder fwd/rev input projections into one lane-dense matmul.
    wih_fr = jnp.concatenate([params["enc_f_wih"], params["enc_r_wih"]], axis=1)
    b_fr = jnp.concatenate([params["enc_f_b"], params["enc_r_b"]], axis=1)

    # Split concat_proj weight to avoid the in-kernel lane concat of [q, ant].
    wcat = params["wcat"]                                  # (2*nhid, natthid)
    w_q = wcat[:nhid]
    w_ant = wcat[nhid:]

    # Pad regressor to 128 output lanes -> single unmasked vector store.
    wreg_pad = jnp.zeros((natthid, NOUT_PAD), jnp.float32).at[:, :nout].set(params["wreg"])
    breg_pad = jnp.zeros((1, NOUT_PAD), jnp.float32).at[:, :nout].set(params["breg"])

    kern = functools.partial(_seq2seq_kernel, bs, Ts, Td, Hh, nhid)
    out_pad = pl.pallas_call(
        kern,
        out_shape=jax.ShapeDtypeStruct((bs * Td, NOUT_PAD), jnp.float32),
        compiler_params=pltpu.CompilerParams(vmem_limit_bytes=32 * 1024 * 1024),
    )(src_ids, tgt_ids, params["emb_src"], params["emb_tgt"],
      wih_fr, b_fr, params["enc_f_whh"], params["enc_r_whh"],
      params["dec_wih"], params["dec_whh"], params["dec_b"],
      w_q, w_ant, wreg_pad, breg_pad, bias_big)

    # Rows are time-major (t, b) -> direct reshape to (Td, B, nout).
    return out_pad[:, :nout].reshape(Td, bs, nout)


# --------------------------------------------------------------------------
# Pure-JAX reference (mirrors the PyTorch forward) for validation.
# --------------------------------------------------------------------------
def seq2seq_forward_ref(src, tgt, params, cfg):
    nhid = cfg["nhid"]
    Hh = nhid // 2
    Ts, bs = src.shape

    def lstm_scan(x, h0, c0, wih_t, whh_t, b):
        H = h0.shape[-1]

        def step(carry, x_t):
            h, c = carry
            g = x_t @ wih_t + h @ whh_t + b[0]
            i = jax.nn.sigmoid(g[:, :H])
            f = jax.nn.sigmoid(g[:, H:2 * H])
            gg = jnp.tanh(g[:, 2 * H:3 * H])
            o = jax.nn.sigmoid(g[:, 3 * H:])
            c = f * c + i * gg
            h = o * jnp.tanh(c)
            return (h, c), h

        (hN, cN), out = jax.lax.scan(step, (h0, c0), x)
        return out, hN, cN

    src_emb = jnp.take(params["emb_src"], src, axis=0)
    z = jnp.zeros((bs, Hh), jnp.float32)
    out_f, hf, cf = lstm_scan(src_emb, z, z, params["enc_f_wih"],
                              params["enc_f_whh"], params["enc_f_b"])
    out_r, hr, cr = lstm_scan(src_emb[::-1], z, z, params["enc_r_wih"],
                              params["enc_r_whh"], params["enc_r_b"])
    enc_out = jnp.concatenate([out_f, out_r[::-1]], axis=-1)          # (Ts, B, nhid)
    h0 = jnp.concatenate([hf, hr], axis=-1)
    c0 = jnp.concatenate([cf, cr], axis=-1)

    tgt_emb = jnp.take(params["emb_tgt"], tgt[:-1], axis=0)
    rnn_out, _, _ = lstm_scan(tgt_emb, h0, c0, params["dec_wih"],
                              params["dec_whh"], params["dec_b"])

    mask = (src == cfg["src_pad_idx"])
    score = jnp.sum(enc_out[:, None] * rnn_out[None], axis=3)         # (Ts, Td, B)
    score = jnp.where(mask[:, None, :], -jnp.inf, score)
    prob = jax.nn.softmax(score, axis=0)
    ant = jnp.sum(prob[..., None] * enc_out[:, None], axis=0)         # (Td, B, nhid)
    cat = jnp.concatenate([rnn_out, ant], axis=-1)
    proj = jnp.tanh(cat @ params["wcat"])
    return proj @ params["wreg"] + params["breg"]


# --------------------------------------------------------------------------
def make_params(key, cfg):
    ntok_s, ntok_t = cfg["ntoken_src"], cfg["ntoken_tgt"]
    nemb, nhid, natthid, nout = cfg["nemb"], cfg["nhid"], cfg["natthid"], cfg["nout"]
    Hh = nhid // 2
    ks = jax.random.split(key, 20)
    nrm = lambda k, s: 0.1 * jax.random.normal(k, s, jnp.float32)

    def lstm_params(k, nin, H):
        k1, k2, k3, k4 = jax.random.split(k, 4)
        wih = nrm(k1, (4 * H, nin))     # PyTorch layout (4H, nin)
        whh = nrm(k2, (4 * H, H))
        bih = nrm(k3, (4 * H,))
        bhh = nrm(k4, (4 * H,))
        return wih.T, whh.T, (bih + bhh).reshape(1, 4 * H)

    emb_src = nrm(ks[0], (ntok_s, nemb)).at[cfg["src_pad_idx"]].set(0.0)
    emb_tgt = nrm(ks[1], (ntok_t, nemb)).at[cfg["tgt_pad_idx"]].set(0.0)

    ef_wih, ef_whh, ef_b = lstm_params(ks[2], nemb, Hh)   # encoder fwd dir
    er_wih, er_whh, er_b = lstm_params(ks[3], nemb, Hh)   # encoder bwd dir
    d_wih, d_whh, d_b = lstm_params(ks[4], nemb, nhid)    # decoder

    wcat = nrm(ks[5], (natthid, 2 * nhid)).T              # (2*nhid, natthid), no bias
    wreg = nrm(ks[6], (nout, natthid)).T                  # (natthid, nout)
    breg = nrm(ks[7], (nout,)).reshape(1, nout)

    return dict(emb_src=emb_src, emb_tgt=emb_tgt,
                enc_f_wih=ef_wih, enc_f_whh=ef_whh, enc_f_b=ef_b,
                enc_r_wih=er_wih, enc_r_whh=er_whh, enc_r_b=er_b,
                dec_wih=d_wih, dec_whh=d_whh, dec_b=d_b,
                wcat=wcat, wreg=wreg, breg=breg)


if __name__ == "__main__":
    cfg = dict(ntoken_src=20, ntoken_tgt=20, nemb=16, nhid=32, natthid=32,
               nout=4, src_pad_idx=0, tgt_pad_idx=0)

    key = jax.random.PRNGKey(0)
    kp, ks, kt = jax.random.split(key, 3)
    params = make_params(kp, cfg)

    T_src, T_tgt, bs = 8, 9, 2
    # No padding tokens -> packed sequence path is the identity; the
    # replicate() branch is a no-op because src/tgt batch sizes match.
    src = jax.random.randint(ks, (T_src, bs), 1, cfg["ntoken_src"], jnp.int32)
    tgt = jax.random.randint(kt, (T_tgt, bs), 1, cfg["ntoken_tgt"], jnp.int32)

    fwd_pallas = jax.jit(functools.partial(seq2seq_forward_pallas,
                                           params=params, cfg=cfg))
    fwd_ref = jax.jit(functools.partial(seq2seq_forward_ref,
                                        params=params, cfg=cfg))

    out = jax.block_until_ready(fwd_pallas(src, tgt))
    ref = jax.block_until_ready(fwd_ref(src, tgt))

    assert out.shape == (T_tgt - 1, bs, cfg["nout"]), out.shape
    assert np.all(np.isfinite(np.asarray(out)))
    max_diff = float(np.max(np.abs(np.asarray(out) - np.asarray(ref))))
    assert max_diff < 1e-2, f"mismatch vs reference: {max_diff}"
    print("KERNEL_OK")
</pallas_src>

<mosaic_0001>
module attributes {stable_mosaic.version = 11 : i64} {
  func.func @_seq2seq_kernel(%arg0: memref<16x1xi32, #tpu.memory_space<vmem>>, %arg1: memref<16x1xi32, #tpu.memory_space<vmem>>, %arg2: memref<20x16xf32, #tpu.memory_space<vmem>>, %arg3: memref<20x16xf32, #tpu.memory_space<vmem>>, %arg4: memref<16x128xf32, #tpu.memory_space<vmem>>, %arg5: memref<1x128xf32, #tpu.memory_space<vmem>>, %arg6: memref<16x64xf32, #tpu.memory_space<vmem>>, %arg7: memref<16x64xf32, #tpu.memory_space<vmem>>, %arg8: memref<16x128xf32, #tpu.memory_space<vmem>>, %arg9: memref<32x128xf32, #tpu.memory_space<vmem>>, %arg10: memref<1x128xf32, #tpu.memory_space<vmem>>, %arg11: memref<32x32xf32, #tpu.memory_space<vmem>>, %arg12: memref<32x32xf32, #tpu.memory_space<vmem>>, %arg13: memref<32x128xf32, #tpu.memory_space<vmem>>, %arg14: memref<1x128xf32, #tpu.memory_space<vmem>>, %arg15: memref<16x16xf32, #tpu.memory_space<vmem>>, %arg16: memref<16x128xf32, #tpu.memory_space<vmem>>) attributes {dimension_semantics = [], scalar_prefetch = 0 : i64, scratch_operands = 0 : i64, tpu.core_type = #tpu.core_type<tc>} {
    %c0 = arith.constant 0 : index
    %c0_0 = arith.constant 0 : index
    %0 = vector.load %arg0[%c0, %c0_0] : memref<16x1xi32, #tpu.memory_space<vmem>>, vector<16x1xi32>
    %c0_1 = arith.constant 0 : index
    %c0_2 = arith.constant 0 : index
    %1 = vector.load %arg2[%c0_1, %c0_2] : memref<20x16xf32, #tpu.memory_space<vmem>>, vector<20x16xf32>
    %2 = tpu.iota {dimensions = array<i32: 1>} : vector<16x20xi32>
    %3 = vector.broadcast %0 : vector<16x1xi32> to vector<16x20xi32>
    %4 = arith.cmpi eq, %3, %2 : vector<16x20xi32>
    %5 = arith.extui %4 : vector<16x20xi1> to vector<16x20xi32>
    %6 = arith.sitofp %5 : vector<16x20xi32> to vector<16x20xf32>
    %cst = arith.constant dense<0.000000e+00> : vector<16x16xf32>
    %7 = tpu.matmul %6, %1, %cst {dimension_numbers = #tpu.dot_dimension_numbers<[1], [0], [0], [1], [0, 0, 1, 1], [], []>} : vector<16x20xf32>, vector<20x16xf32>, vector<16x16xf32> -> vector<16x16xf32>
    %c0_3 = arith.constant 0 : index
    %c0_4 = arith.constant 0 : index
    %8 = vector.load %arg1[%c0_3, %c0_4] : memref<16x1xi32, #tpu.memory_space<vmem>>, vector<16x1xi32>
    %c0_5 = arith.constant 0 : index
    %c0_6 = arith.constant 0 : index
    %9 = vector.load %arg3[%c0_5, %c0_6] : memref<20x16xf32, #tpu.memory_space<vmem>>, vector<20x16xf32>
    %10 = tpu.iota {dimensions = array<i32: 1>} : vector<16x20xi32>
    %11 = vector.broadcast %8 : vector<16x1xi32> to vector<16x20xi32>
    %12 = arith.cmpi eq, %11, %10 : vector<16x20xi32>
    %13 = arith.extui %12 : vector<16x20xi1> to vector<16x20xi32>
    %14 = arith.sitofp %13 : vector<16x20xi32> to vector<16x20xf32>
    %cst_7 = arith.constant dense<0.000000e+00> : vector<16x16xf32>
    %15 = tpu.matmul %14, %9, %cst_7 {dimension_numbers = #tpu.dot_dimension_numbers<[1], [0], [0], [1], [0, 0, 1, 1], [], []>} : vector<16x20xf32>, vector<20x16xf32>, vector<16x16xf32> -> vector<16x16xf32>
    %c0_8 = arith.constant 0 : index
    %c0_9 = arith.constant 0 : index
    %16 = vector.load %arg4[%c0_8, %c0_9] : memref<16x128xf32, #tpu.memory_space<vmem>>, vector<16x128xf32>
    %cst_10 = arith.constant dense<0.000000e+00> : vector<16x128xf32>
    %17 = tpu.matmul %7, %16, %cst_10 {dimension_numbers = #tpu.dot_dimension_numbers<[1], [0], [0], [1], [0, 0, 1, 1], [], []>} : vector<16x16xf32>, vector<16x128xf32>, vector<16x128xf32> -> vector<16x128xf32>
    %c0_11 = arith.constant 0 : index
    %c0_12 = arith.constant 0 : index
    %18 = vector.load %arg5[%c0_11, %c0_12] : memref<1x128xf32, #tpu.memory_space<vmem>>, vector<1x128xf32>
    %19 = vector.broadcast %18 : vector<1x128xf32> to vector<16x128xf32>
    %20 = arith.addf %17, %19 : vector<16x128xf32>
    %21 = vector.extract_strided_slice %20 {offsets = [0, 0], sizes = [16, 64], strides = [1, 1]} : vector<16x128xf32> to vector<16x64xf32>
    %22 = vector.extract_strided_slice %20 {offsets = [0, 64], sizes = [16, 64], strides = [1, 1]} : vector<16x128xf32> to vector<16x64xf32>
    %c0_13 = arith.constant 0 : index
    %c0_14 = arith.constant 0 : index
    %23 = vector.load %arg8[%c0_13, %c0_14] : memref<16x128xf32, #tpu.memory_space<vmem>>, vector<16x128xf32>
    %cst_15 = arith.constant dense<0.000000e+00> : vector<16x128xf32>
    %24 = tpu.matmul %15, %23, %cst_15 {dimension_numbers = #tpu.dot_dimension_numbers<[1], [0], [0], [1], [0, 0, 1, 1], [], []>} : vector<16x16xf32>, vector<16x128xf32>, vector<16x128xf32> -> vector<16x128xf32>
    %c0_16 = arith.constant 0 : index
    %c0_17 = arith.constant 0 : index
    %25 = vector.load %arg10[%c0_16, %c0_17] : memref<1x128xf32, #tpu.memory_space<vmem>>, vector<1x128xf32>
    %26 = vector.broadcast %25 : vector<1x128xf32> to vector<16x128xf32>
    %27 = arith.addf %24, %26 : vector<16x128xf32>
    %cst_18 = arith.constant 0.000000e+00 : f32
    %28 = vector.broadcast %cst_18 : f32 to vector<2x16xf32>
    %c0_19 = arith.constant 0 : index
    %c0_20 = arith.constant 0 : index
    %29 = vector.load %arg6[%c0_19, %c0_20] : memref<16x64xf32, #tpu.memory_space<vmem>>, vector<16x64xf32>
    %30 = vector.extract_strided_slice %21 {offsets = [0, 0], sizes = [2, 64], strides = [1, 1]} : vector<16x64xf32> to vector<2x64xf32>
    %cst_21 = arith.constant dense<0.000000e+00> : vector<2x64xf32>
    %31 = tpu.matmul %28, %29, %cst_21 {dimension_numbers = #tpu.dot_dimension_numbers<[1], [0], [0], [1], [0, 0, 1, 1], [], []>} : vector<2x16xf32>, vector<16x64xf32>, vector<2x64xf32> -> vector<2x64xf32>
    %32 = arith.addf %30, %31 : vector<2x64xf32>
    %33 = vector.extract_strided_slice %32 {offsets = [0, 0], sizes = [2, 16], strides = [1, 1]} : vector<2x64xf32> to vector<2x16xf32>
    %34 = arith.negf %33 : vector<2x16xf32>
    %35 = math.exp %34 : vector<2x16xf32>
    %cst_22 = arith.constant 1.000000e+00 : f32
    %36 = vector.broadcast %cst_22 : f32 to vector<2x16xf32>
    %37 = arith.addf %36, %35 : vector<2x16xf32>
    %38 = arith.divf %36, %37 : vector<2x16xf32>
    %39 = vector.extract_strided_slice %32 {offsets = [0, 16], sizes = [2, 16], strides = [1, 1]} : vector<2x64xf32> to vector<2x16xf32>
    %40 = arith.negf %39 : vector<2x16xf32>
    %41 = math.exp %40 : vector<2x16xf32>
    %cst_23 = arith.constant 1.000000e+00 : f32
    %42 = vector.broadcast %cst_23 : f32 to vector<2x16xf32>
    %43 = arith.addf %42, %41 : vector<2x16xf32>
    %44 = arith.divf %42, %43 : vector<2x16xf32>
    %45 = vector.extract_strided_slice %32 {offsets = [0, 32], sizes = [2, 16], strides = [1, 1]} : vector<2x64xf32> to vector<2x16xf32>
    %46 = math.tanh %45 : vector<2x16xf32>
    %47 = vector.extract_strided_slice %32 {offsets = [0, 48], sizes = [2, 16], strides = [1, 1]} : vector<2x64xf32> to vector<2x16xf32>
    %48 = arith.negf %47 : vector<2x16xf32>
    %49 = math.exp %48 : vector<2x16xf32>
    %cst_24 = arith.constant 1.000000e+00 : f32
    %50 = vector.broadcast %cst_24 : f32 to vector<2x16xf32>
    %51 = arith.addf %50, %49 : vector<2x16xf32>
    %52 = arith.divf %50, %51 : vector<2x16xf32>
    %53 = arith.mulf %44, %28 : vector<2x16xf32>
    %54 = arith.mulf %38, %46 : vector<2x16xf32>
    %55 = arith.addf %53, %54 : vector<2x16xf32>
    %56 = math.tanh %55 : vector<2x16xf32>
    %57 = arith.mulf %52, %56 : vector<2x16xf32>
    %58 = vector.extract_strided_slice %21 {offsets = [2, 0], sizes = [2, 64], strides = [1, 1]} : vector<16x64xf32> to vector<2x64xf32>
    %cst_25 = arith.constant dense<0.000000e+00> : vector<2x64xf32>
    %59 = tpu.matmul %57, %29, %cst_25 {dimension_numbers = #tpu.dot_dimension_numbers<[1], [0], [0], [1], [0, 0, 1, 1], [], []>} : vector<2x16xf32>, vector<16x64xf32>, vector<2x64xf32> -> vector<2x64xf32>
    %60 = arith.addf %58, %59 : vector<2x64xf32>
    %61 = vector.extract_strided_slice %60 {offsets = [0, 0], sizes = [2, 16], strides = [1, 1]} : vector<2x64xf32> to vector<2x16xf32>
    %62 = arith.negf %61 : vector<2x16xf32>
    %63 = math.exp %62 : vector<2x16xf32>
    %cst_26 = arith.constant 1.000000e+00 : f32
    %64 = vector.broadcast %cst_26 : f32 to vector<2x16xf32>
    %65 = arith.addf %64, %63 : vector<2x16xf32>
    %66 = arith.divf %64, %65 : vector<2x16xf32>
    %67 = vector.extract_strided_slice %60 {offsets = [0, 16], sizes = [2, 16], strides = [1, 1]} : vector<2x64xf32> to vector<2x16xf32>
    %68 = arith.negf %67 : vector<2x16xf32>
    %69 = math.exp %68 : vector<2x16xf32>
    %cst_27 = arith.constant 1.000000e+00 : f32
    %70 = vector.broadcast %cst_27 : f32 to vector<2x16xf32>
    %71 = arith.addf %70, %69 : vector<2x16xf32>
    %72 = arith.divf %70, %71 : vector<2x16xf32>
    %73 = vector.extract_strided_slice %60 {offsets = [0, 32], sizes = [2, 16], strides = [1, 1]} : vector<2x64xf32> to vector<2x16xf32>
    %74 = math.tanh %73 : vector<2x16xf32>
    %75 = vector.extract_strided_slice %60 {offsets = [0, 48], sizes = [2, 16], strides = [1, 1]} : vector<2x64xf32> to vector<2x16xf32>
    %76 = arith.negf %75 : vector<2x16xf32>
    %77 = math.exp %76 : vector<2x16xf32>
    %cst_28 = arith.constant 1.000000e+00 : f32
    %78 = vector.broadcast %cst_28 : f32 to vector<2x16xf32>
    %79 = arith.addf %78, %77 : vector<2x16xf32>
    %80 = arith.divf %78, %79 : vector<2x16xf32>
    %81 = arith.mulf %72, %55 : vector<2x16xf32>
    %82 = arith.mulf %66, %74 : vector<2x16xf32>
    %83 = arith.addf %81, %82 : vector<2x16xf32>
    %84 = math.tanh %83 : vector<2x16xf32>
    %85 = arith.mulf %80, %84 : vector<2x16xf32>
    %86 = vector.extract_strided_slice %21 {offsets = [4, 0], sizes = [2, 64], strides = [1, 1]} : vector<16x64xf32> to vector<2x64xf32>
    %cst_29 = arith.constant dense<0.000000e+00> : vector<2x64xf32>
    %87 = tpu.matmul %85, %29, %cst_29 {dimension_numbers = #tpu.dot_dimension_numbers<[1], [0], [0], [1], [0, 0, 1, 1], [], []>} : vector<2x16xf32>, vector<16x64xf32>, vector<2x64xf32> -> vector<2x64xf32>
    %88 = arith.addf %86, %87 : vector<2x64xf32>
    %89 = vector.extract_strided_slice %88 {offsets = [0, 0], sizes = [2, 16], strides = [1, 1]} : vector<2x64xf32> to vector<2x16xf32>
    %90 = arith.negf %89 : vector<2x16xf32>
    %91 = math.exp %90 : vector<2x16xf32>
    %cst_30 = arith.constant 1.000000e+00 : f32
    %92 = vector.broadcast %cst_30 : f32 to vector<2x16xf32>
    %93 = arith.addf %92, %91 : vector<2x16xf32>
    %94 = arith.divf %92, %93 : vector<2x16xf32>
    %95 = vector.extract_strided_slice %88 {offsets = [0, 16], sizes = [2, 16], strides = [1, 1]} : vector<2x64xf32> to vector<2x16xf32>
    %96 = arith.negf %95 : vector<2x16xf32>
    %97 = math.exp %96 : vector<2x16xf32>
    %cst_31 = arith.constant 1.000000e+00 : f32
    %98 = vector.broadcast %cst_31 : f32 to vector<2x16xf32>
    %99 = arith.addf %98, %97 : vector<2x16xf32>
    %100 = arith.divf %98, %99 : vector<2x16xf32>
    %101 = vector.extract_strided_slice %88 {offsets = [0, 32], sizes = [2, 16], strides = [1, 1]} : vector<2x64xf32> to vector<2x16xf32>
    %102 = math.tanh %101 : vector<2x16xf32>
    %103 = vector.extract_strided_slice %88 {offsets = [0, 48], sizes = [2, 16], strides = [1, 1]} : vector<2x64xf32> to vector<2x16xf32>
    %104 = arith.negf %103 : vector<2x16xf32>
    %105 = math.exp %104 : vector<2x16xf32>
    %cst_32 = arith.constant 1.000000e+00 : f32
    %106 = vector.broadcast %cst_32 : f32 to vector<2x16xf32>
    %107 = arith.addf %106, %105 : vector<2x16xf32>
    %108 = arith.divf %106, %107 : vector<2x16xf32>
    %109 = arith.mulf %100, %83 : vector<2x16xf32>
    %110 = arith.mulf %94, %102 : vector<2x16xf32>
    %111 = arith.addf %109, %110 : vector<2x16xf32>
    %112 = math.tanh %111 : vector<2x16xf32>
    %113 = arith.mulf %108, %112 : vector<2x16xf32>
    %114 = vector.extract_strided_slice %21 {offsets = [6, 0], sizes = [2, 64], strides = [1, 1]} : vector<16x64xf32> to vector<2x64xf32>
    %cst_33 = arith.constant dense<0.000000e+00> : vector<2x64xf32>
    %115 = tpu.matmul %113, %29, %cst_33 {dimension_numbers = #tpu.dot_dimension_numbers<[1], [0], [0], [1], [0, 0, 1, 1], [], []>} : vector<2x16xf32>, vector<16x64xf32>, vector<2x64xf32> -> vector<2x64xf32>
    %116 = arith.addf %114, %115 : vector<2x64xf32>
    %117 = vector.extract_strided_slice %116 {offsets = [0, 0], sizes = [2, 16], strides = [1, 1]} : vector<2x64xf32> to vector<2x16xf32>
    %118 = arith.negf %117 : vector<2x16xf32>
    %119 = math.exp %118 : vector<2x16xf32>
    %cst_34 = arith.constant 1.000000e+00 : f32
    %120 = vector.broadcast %cst_34 : f32 to vector<2x16xf32>
    %121 = arith.addf %120, %119 : vector<2x16xf32>
    %122 = arith.divf %120, %121 : vector<2x16xf32>
    %123 = vector.extract_strided_slice %116 {offsets = [0, 16], sizes = [2, 16], strides = [1, 1]} : vector<2x64xf32> to vector<2x16xf32>
    %124 = arith.negf %123 : vector<2x16xf32>
    %125 = math.exp %124 : vector<2x16xf32>
    %cst_35 = arith.constant 1.000000e+00 : f32
    %126 = vector.broadcast %cst_35 : f32 to vector<2x16xf32>
    %127 = arith.addf %126, %125 : vector<2x16xf32>
    %128 = arith.divf %126, %127 : vector<2x16xf32>
    %129 = vector.extract_strided_slice %116 {offsets = [0, 32], sizes = [2, 16], strides = [1, 1]} : vector<2x64xf32> to vector<2x16xf32>
    %130 = math.tanh %129 : vector<2x16xf32>
    %131 = vector.extract_strided_slice %116 {offsets = [0, 48], sizes = [2, 16], strides = [1, 1]} : vector<2x64xf32> to vector<2x16xf32>
    %132 = arith.negf %131 : vector<2x16xf32>
    %133 = math.exp %132 : vector<2x16xf32>
    %cst_36 = arith.constant 1.000000e+00 : f32
    %134 = vector.broadcast %cst_36 : f32 to vector<2x16xf32>
    %135 = arith.addf %134, %133 : vector<2x16xf32>
    %136 = arith.divf %134, %135 : vector<2x16xf32>
    %137 = arith.mulf %128, %111 : vector<2x16xf32>
    %138 = arith.mulf %122, %130 : vector<2x16xf32>
    %139 = arith.addf %137, %138 : vector<2x16xf32>
    %140 = math.tanh %139 : vector<2x16xf32>
    %141 = arith.mulf %136, %140 : vector<2x16xf32>
    %142 = vector.extract_strided_slice %21 {offsets = [8, 0], sizes = [2, 64], strides = [1, 1]} : vector<16x64xf32> to vector<2x64xf32>
    %cst_37 = arith.constant dense<0.000000e+00> : vector<2x64xf32>
    %143 = tpu.matmul %141, %29, %cst_37 {dimension_numbers = #tpu.dot_dimension_numbers<[1], [0], [0], [1], [0, 0, 1, 1], [], []>} : vector<2x16xf32>, vector<16x64xf32>, vector<2x64xf32> -> vector<2x64xf32>
    %144 = arith.addf %142, %143 : vector<2x64xf32>
    %145 = vector.extract_strided_slice %144 {offsets = [0, 0], sizes = [2, 16], strides = [1, 1]} : vector<2x64xf32> to vector<2x16xf32>
    %146 = arith.negf %145 : vector<2x16xf32>
    %147 = math.exp %146 : vector<2x16xf32>
    %cst_38 = arith.constant 1.000000e+00 : f32
    %148 = vector.broadcast %cst_38 : f32 to vector<2x16xf32>
    %149 = arith.addf %148, %147 : vector<2x16xf32>
    %150 = arith.divf %148, %149 : vector<2x16xf32>
    %151 = vector.extract_strided_slice %144 {offsets = [0, 16], sizes = [2, 16], strides = [1, 1]} : vector<2x64xf32> to vector<2x16xf32>
    %152 = arith.negf %151 : vector<2x16xf32>
    %153 = math.exp %152 : vector<2x16xf32>
    %cst_39 = arith.constant 1.000000e+00 : f32
    %154 = vector.broadcast %cst_39 : f32 to vector<2x16xf32>
    %155 = arith.addf %154, %153 : vector<2x16xf32>
    %156 = arith.divf %154, %155 : vector<2x16xf32>
    %157 = vector.extract_strided_slice %144 {offsets = [0, 32], sizes = [2, 16], strides = [1, 1]} : vector<2x64xf32> to vector<2x16xf32>
    %158 = math.tanh %157 : vector<2x16xf32>
    %159 = vector.extract_strided_slice %144 {offsets = [0, 48], sizes = [2, 16], strides = [1, 1]} : vector<2x64xf32> to vector<2x16xf32>
    %160 = arith.negf %159 : vector<2x16xf32>
    %161 = math.exp %160 : vector<2x16xf32>
    %cst_40 = arith.constant 1.000000e+00 : f32
    %162 = vector.broadcast %cst_40 : f32 to vector<2x16xf32>
    %163 = arith.addf %162, %161 : vector<2x16xf32>
    %164 = arith.divf %162, %163 : vector<2x16xf32>
    %165 = arith.mulf %156, %139 : vector<2x16xf32>
    %166 = arith.mulf %150, %158 : vector<2x16xf32>
    %167 = arith.addf %165, %166 : vector<2x16xf32>
    %168 = math.tanh %167 : vector<2x16xf32>
    %169 = arith.mulf %164, %168 : vector<2x16xf32>
    %170 = vector.extract_strided_slice %21 {offsets = [10, 0], sizes = [2, 64], strides = [1, 1]} : vector<16x64xf32> to vector<2x64xf32>
    %cst_41 = arith.constant dense<0.000000e+00> : vector<2x64xf32>
    %171 = tpu.matmul %169, %29, %cst_41 {dimension_numbers = #tpu.dot_dimension_numbers<[1], [0], [0], [1], [0, 0, 1, 1], [], []>} : vector<2x16xf32>, vector<16x64xf32>, vector<2x64xf32> -> vector<2x64xf32>
    %172 = arith.addf %170, %171 : vector<2x64xf32>
    %173 = vector.extract_strided_slice %172 {offsets = [0, 0], sizes = [2, 16], strides = [1, 1]} : vector<2x64xf32> to vector<2x16xf32>
    %174 = arith.negf %173 : vector<2x16xf32>
    %175 = math.exp %174 : vector<2x16xf32>
    %cst_42 = arith.constant 1.000000e+00 : f32
    %176 = vector.broadcast %cst_42 : f32 to vector<2x16xf32>
    %177 = arith.addf %176, %175 : vector<2x16xf32>
    %178 = arith.divf %176, %177 : vector<2x16xf32>
    %179 = vector.extract_strided_slice %172 {offsets = [0, 16], sizes = [2, 16], strides = [1, 1]} : vector<2x64xf32> to vector<2x16xf32>
    %180 = arith.negf %179 : vector<2x16xf32>
    %181 = math.exp %180 : vector<2x16xf32>
    %cst_43 = arith.constant 1.000000e+00 : f32
    %182 = vector.broadcast %cst_43 : f32 to vector<2x16xf32>
    %183 = arith.addf %182, %181 : vector<2x16xf32>
    %184 = arith.divf %182, %183 : vector<2x16xf32>
    %185 = vector.extract_strided_slice %172 {offsets = [0, 32], sizes = [2, 16], strides = [1, 1]} : vector<2x64xf32> to vector<2x16xf32>
    %186 = math.tanh %185 : vector<2x16xf32>
    %187 = vector.extract_strided_slice %172 {offsets = [0, 48], sizes = [2, 16], strides = [1, 1]} : vector<2x64xf32> to vector<2x16xf32>
    %188 = arith.negf %187 : vector<2x16xf32>
    %189 = math.exp %188 : vector<2x16xf32>
    %cst_44 = arith.constant 1.000000e+00 : f32
    %190 = vector.broadcast %cst_44 : f32 to vector<2x16xf32>
    %191 = arith.addf %190, %189 : vector<2x16xf32>
    %192 = arith.divf %190, %191 : vector<2x16xf32>
    %193 = arith.mulf %184, %167 : vector<2x16xf32>
    %194 = arith.mulf %178, %186 : vector<2x16xf32>
    %195 = arith.addf %193, %194 : vector<2x16xf32>
    %196 = math.tanh %195 : vector<2x16xf32>
    %197 = arith.mulf %192, %196 : vector<2x16xf32>
    %198 = vector.extract_strided_slice %21 {offsets = [12, 0], sizes = [2, 64], strides = [1, 1]} : vector<16x64xf32> to vector<2x64xf32>
    %cst_45 = arith.constant dense<0.000000e+00> : vector<2x64xf32>
    %199 = tpu.matmul %197, %29, %cst_45 {dimension_numbers = #tpu.dot_dimension_numbers<[1], [0], [0], [1], [0, 0, 1, 1], [], []>} : vector<2x16xf32>, vector<16x64xf32>, vector<2x64xf32> -> vector<2x64xf32>
    %200 = arith.addf %198, %199 : vector<2x64xf32>
    %201 = vector.extract_strided_slice %200 {offsets = [0, 0], sizes = [2, 16], strides = [1, 1]} : vector<2x64xf32> to vector<2x16xf32>
    %202 = arith.negf %201 : vector<2x16xf32>
    %203 = math.exp %202 : vector<2x16xf32>
    %cst_46 = arith.constant 1.000000e+00 : f32
    %204 = vector.broadcast %cst_46 : f32 to vector<2x16xf32>
    %205 = arith.addf %204, %203 : vector<2x16xf32>
    %206 = arith.divf %204, %205 : vector<2x16xf32>
    %207 = vector.extract_strided_slice %200 {offsets = [0, 16], sizes = [2, 16], strides = [1, 1]} : vector<2x64xf32> to vector<2x16xf32>
    %208 = arith.negf %207 : vector<2x16xf32>
    %209 = math.exp %208 : vector<2x16xf32>
    %cst_47 = arith.constant 1.000000e+00 : f32
    %210 = vector.broadcast %cst_47 : f32 to vector<2x16xf32>
    %211 = arith.addf %210, %209 : vector<2x16xf32>
    %212 = arith.divf %210, %211 : vector<2x16xf32>
    %213 = vector.extract_strided_slice %200 {offsets = [0, 32], sizes = [2, 16], strides = [1, 1]} : vector<2x64xf32> to vector<2x16xf32>
    %214 = math.tanh %213 : vector<2x16xf32>
    %215 = vector.extract_strided_slice %200 {offsets = [0, 48], sizes = [2, 16], strides = [1, 1]} : vector<2x64xf32> to vector<2x16xf32>
    %216 = arith.negf %215 : vector<2x16xf32>
    %217 = math.exp %216 : vector<2x16xf32>
    %cst_48 = arith.constant 1.000000e+00 : f32
    %218 = vector.broadcast %cst_48 : f32 to vector<2x16xf32>
    %219 = arith.addf %218, %217 : vector<2x16xf32>
    %220 = arith.divf %218, %219 : vector<2x16xf32>
    %221 = arith.mulf %212, %195 : vector<2x16xf32>
    %222 = arith.mulf %206, %214 : vector<2x16xf32>
    %223 = arith.addf %221, %222 : vector<2x16xf32>
    %224 = math.tanh %223 : vector<2x16xf32>
    %225 = arith.mulf %220, %224 : vector<2x16xf32>
    %226 = vector.extract_strided_slice %21 {offsets = [14, 0], sizes = [2, 64], strides = [1, 1]} : vector<16x64xf32> to vector<2x64xf32>
    %cst_49 = arith.constant dense<0.000000e+00> : vector<2x64xf32>
    %227 = tpu.matmul %225, %29, %cst_49 {dimension_numbers = #tpu.dot_dimension_numbers<[1], [0], [0], [1], [0, 0, 1, 1], [], []>} : vector<2x16xf32>, vector<16x64xf32>, vector<2x64xf32> -> vector<2x64xf32>
    %228 = arith.addf %226, %227 : vector<2x64xf32>
    %229 = vector.extract_strided_slice %228 {offsets = [0, 0], sizes = [2, 16], strides = [1, 1]} : vector<2x64xf32> to vector<2x16xf32>
    %230 = arith.negf %229 : vector<2x16xf32>
    %231 = math.exp %230 : vector<2x16xf32>
    %cst_50 = arith.constant 1.000000e+00 : f32
    %232 = vector.broadcast %cst_50 : f32 to vector<2x16xf32>
    %233 = arith.addf %232, %231 : vector<2x16xf32>
    %234 = arith.divf %232, %233 : vector<2x16xf32>
    %235 = vector.extract_strided_slice %228 {offsets = [0, 16], sizes = [2, 16], strides = [1, 1]} : vector<2x64xf32> to vector<2x16xf32>
    %236 = arith.negf %235 : vector<2x16xf32>
    %237 = math.exp %236 : vector<2x16xf32>
    %cst_51 = arith.constant 1.000000e+00 : f32
    %238 = vector.broadcast %cst_51 : f32 to vector<2x16xf32>
    %239 = arith.addf %238, %237 : vector<2x16xf32>
    %240 = arith.divf %238, %239 : vector<2x16xf32>
    %241 = vector.extract_strided_slice %228 {offsets = [0, 32], sizes = [2, 16], strides = [1, 1]} : vector<2x64xf32> to vector<2x16xf32>
    %242 = math.tanh %241 : vector<2x16xf32>
    %243 = vector.extract_strided_slice %228 {offsets = [0, 48], sizes = [2, 16], strides = [1, 1]} : vector<2x64xf32> to vector<2x16xf32>
    %244 = arith.negf %243 : vector<2x16xf32>
    %245 = math.exp %244 : vector<2x16xf32>
    %cst_52 = arith.constant 1.000000e+00 : f32
    %246 = vector.broadcast %cst_52 : f32 to vector<2x16xf32>
    %247 = arith.addf %246, %245 : vector<2x16xf32>
    %248 = arith.divf %246, %247 : vector<2x16xf32>
    %249 = arith.mulf %240, %223 : vector<2x16xf32>
    %250 = arith.mulf %234, %242 : vector<2x16xf32>
    %251 = arith.addf %249, %250 : vector<2x16xf32>
    %252 = math.tanh %251 : vector<2x16xf32>
    %253 = arith.mulf %248, %252 : vector<2x16xf32>
    %c0_53 = arith.constant 0 : index
    %c0_54 = arith.constant 0 : index
    %254 = vector.load %arg7[%c0_53, %c0_54] : memref<16x64xf32, #tpu.memory_space<vmem>>, vector<16x64xf32>
    %255 = vector.extract_strided_slice %22 {offsets = [14, 0], sizes = [2, 64], strides = [1, 1]} : vector<16x64xf32> to vector<2x64xf32>
    %cst_55 = arith.constant dense<0.000000e+00> : vector<2x64xf32>
    %256 = tpu.matmul %28, %254, %cst_55 {dimension_numbers = #tpu.dot_dimension_numbers<[1], [0], [0], [1], [0, 0, 1, 1], [], []>} : vector<2x16xf32>, vector<16x64xf32>, vector<2x64xf32> -> vector<2x64xf32>
    %257 = arith.addf %255, %256 : vector<2x64xf32>
    %258 = vector.extract_strided_slice %257 {offsets = [0, 0], sizes = [2, 16], strides = [1, 1]} : vector<2x64xf32> to vector<2x16xf32>
    %259 = arith.negf %258 : vector<2x16xf32>
    %260 = math.exp %259 : vector<2x16xf32>
    %cst_56 = arith.constant 1.000000e+00 : f32
    %261 = vector.broadcast %cst_56 : f32 to vector<2x16xf32>
    %262 = arith.addf %261, %260 : vector<2x16xf32>
    %263 = arith.divf %261, %262 : vector<2x16xf32>
    %264 = vector.extract_strided_slice %257 {offsets = [0, 16], sizes = [2, 16], strides = [1, 1]} : vector<2x64xf32> to vector<2x16xf32>
    %265 = arith.negf %264 : vector<2x16xf32>
    %266 = math.exp %265 : vector<2x16xf32>
    %cst_57 = arith.constant 1.000000e+00 : f32
    %267 = vector.broadcast %cst_57 : f32 to vector<2x16xf32>
    %268 = arith.addf %267, %266 : vector<2x16xf32>
    %269 = arith.divf %267, %268 : vector<2x16xf32>
    %270 = vector.extract_strided_slice %257 {offsets = [0, 32], sizes = [2, 16], strides = [1, 1]} : vector<2x64xf32> to vector<2x16xf32>
    %271 = math.tanh %270 : vector<2x16xf32>
    %272 = vector.extract_strided_slice %257 {offsets = [0, 48], sizes = [2, 16], strides = [1, 1]} : vector<2x64xf32> to vector<2x16xf32>
    %273 = arith.negf %272 : vector<2x16xf32>
    %274 = math.exp %273 : vector<2x16xf32>
    %cst_58 = arith.constant 1.000000e+00 : f32
    %275 = vector.broadcast %cst_58 : f32 to vector<2x16xf32>
    %276 = arith.addf %275, %274 : vector<2x16xf32>
    %277 = arith.divf %275, %276 : vector<2x16xf32>
    %278 = arith.mulf %269, %28 : vector<2x16xf32>
    %279 = arith.mulf %263, %271 : vector<2x16xf32>
    %280 = arith.addf %278, %279 : vector<2x16xf32>
    %281 = math.tanh %280 : vector<2x16xf32>
    %282 = arith.mulf %277, %281 : vector<2x16xf32>
    %283 = vector.extract_strided_slice %22 {offsets = [12, 0], sizes = [2, 64], strides = [1, 1]} : vector<16x64xf32> to vector<2x64xf32>
    %cst_59 = arith.constant dense<0.000000e+00> : vector<2x64xf32>
    %284 = tpu.matmul %282, %254, %cst_59 {dimension_numbers = #tpu.dot_dimension_numbers<[1], [0], [0], [1], [0, 0, 1, 1], [], []>} : vector<2x16xf32>, vector<16x64xf32>, vector<2x64xf32> -> vector<2x64xf32>
    %285 = arith.addf %283, %284 : vector<2x64xf32>
    %286 = vector.extract_strided_slice %285 {offsets = [0, 0], sizes = [2, 16], strides = [1, 1]} : vector<2x64xf32> to vector<2x16xf32>
    %287 = arith.negf %286 : vector<2x16xf32>
    %288 = math.exp %287 : vector<2x16xf32>
    %cst_60 = arith.constant 1.000000e+00 : f32
    %289 = vector.broadcast %cst_60 : f32 to vector<2x16xf32>
    %290 = arith.addf %289, %288 : vector<2x16xf32>
    %291 = arith.divf %289, %290 : vector<2x16xf32>
    %292 = vector.extract_strided_slice %285 {offsets = [0, 16], sizes = [2, 16], strides = [1, 1]} : vector<2x64xf32> to vector<2x16xf32>
    %293 = arith.negf %292 : vector<2x16xf32>
    %294 = math.exp %293 : vector<2x16xf32>
    %cst_61 = arith.constant 1.000000e+00 : f32
    %295 = vector.broadcast %cst_61 : f32 to vector<2x16xf32>
    %296 = arith.addf %295, %294 : vector<2x16xf32>
    %297 = arith.divf %295, %296 : vector<2x16xf32>
    %298 = vector.extract_strided_slice %285 {offsets = [0, 32], sizes = [2, 16], strides = [1, 1]} : vector<2x64xf32> to vector<2x16xf32>
    %299 = math.tanh %298 : vector<2x16xf32>
    %300 = vector.extract_strided_slice %285 {offsets = [0, 48], sizes = [2, 16], strides = [1, 1]} : vector<2x64xf32> to vector<2x16xf32>
    %301 = arith.negf %300 : vector<2x16xf32>
    %302 = math.exp %301 : vector<2x16xf32>
    %cst_62 = arith.constant 1.000000e+00 : f32
    %303 = vector.broadcast %cst_62 : f32 to vector<2x16xf32>
    %304 = arith.addf %303, %302 : vector<2x16xf32>
    %305 = arith.divf %303, %304 : vector<2x16xf32>
    %306 = arith.mulf %297, %280 : vector<2x16xf32>
    %307 = arith.mulf %291, %299 : vector<2x16xf32>
    %308 = arith.addf %306, %307 : vector<2x16xf32>
    %309 = math.tanh %308 : vector<2x16xf32>
    %310 = arith.mulf %305, %309 : vector<2x16xf32>
    %311 = vector.extract_strided_slice %22 {offsets = [10, 0], sizes = [2, 64], strides = [1, 1]} : vector<16x64xf32> to vector<2x64xf32>
    %cst_63 = arith.constant dense<0.000000e+00> : vector<2x64xf32>
    %312 = tpu.matmul %310, %254, %cst_63 {dimension_numbers = #tpu.dot_dimension_numbers<[1], [0], [0], [1], [0, 0, 1, 1], [], []>} : vector<2x16xf32>, vector<16x64xf32>, vector<2x64xf32> -> vector<2x64xf32>
    %313 = arith.addf %311, %312 : vector<2x64xf32>
    %314 = vector.extract_strided_slice %313 {offsets = [0, 0], sizes = [2, 16], strides = [1, 1]} : vector<2x64xf32> to vector<2x16xf32>
    %315 = arith.negf %314 : vector<2x16xf32>
    %316 = math.exp %315 : vector<2x16xf32>
    %cst_64 = arith.constant 1.000000e+00 : f32
    %317 = vector.broadcast %cst_64 : f32 to vector<2x16xf32>
    %318 = arith.addf %317, %316 : vector<2x16xf32>
    %319 = arith.divf %317, %318 : vector<2x16xf32>
    %320 = vector.extract_strided_slice %313 {offsets = [0, 16], sizes = [2, 16], strides = [1, 1]} : vector<2x64xf32> to vector<2x16xf32>
    %321 = arith.negf %320 : vector<2x16xf32>
    %322 = math.exp %321 : vector<2x16xf32>
    %cst_65 = arith.constant 1.000000e+00 : f32
    %323 = vector.broadcast %cst_65 : f32 to vector<2x16xf32>
    %324 = arith.addf %323, %322 : vector<2x16xf32>
    %325 = arith.divf %323, %324 : vector<2x16xf32>
    %326 = vector.extract_strided_slice %313 {offsets = [0, 32], sizes = [2, 16], strides = [1, 1]} : vector<2x64xf32> to vector<2x16xf32>
    %327 = math.tanh %326 : vector<2x16xf32>
    %328 = vector.extract_strided_slice %313 {offsets = [0, 48], sizes = [2, 16], strides = [1, 1]} : vector<2x64xf32> to vector<2x16xf32>
    %329 = arith.negf %328 : vector<2x16xf32>
    %330 = math.exp %329 : vector<2x16xf32>
    %cst_66 = arith.constant 1.000000e+00 : f32
    %331 = vector.broadcast %cst_66 : f32 to vector<2x16xf32>
    %332 = arith.addf %331, %330 : vector<2x16xf32>
    %333 = arith.divf %331, %332 : vector<2x16xf32>
    %334 = arith.mulf %325, %308 : vector<2x16xf32>
    %335 = arith.mulf %319, %327 : vector<2x16xf32>
    %336 = arith.addf %334, %335 : vector<2x16xf32>
    %337 = math.tanh %336 : vector<2x16xf32>
    %338 = arith.mulf %333, %337 : vector<2x16xf32>
    %339 = vector.extract_strided_slice %22 {offsets = [8, 0], sizes = [2, 64], strides = [1, 1]} : vector<16x64xf32> to vector<2x64xf32>
    %cst_67 = arith.constant dense<0.000000e+00> : vector<2x64xf32>
    %340 = tpu.matmul %338, %254, %cst_67 {dimension_numbers = #tpu.dot_dimension_numbers<[1], [0], [0], [1], [0, 0, 1, 1], [], []>} : vector<2x16xf32>, vector<16x64xf32>, vector<2x64xf32> -> vector<2x64xf32>
    %341 = arith.addf %339, %340 : vector<2x64xf32>
    %342 = vector.extract_strided_slice %341 {offsets = [0, 0], sizes = [2, 16], strides = [1, 1]} : vector<2x64xf32> to vector<2x16xf32>
    %343 = arith.negf %342 : vector<2x16xf32>
    %344 = math.exp %343 : vector<2x16xf32>
    %cst_68 = arith.constant 1.000000e+00 : f32
    %345 = vector.broadcast %cst_68 : f32 to vector<2x16xf32>
    %346 = arith.addf %345, %344 : vector<2x16xf32>
    %347 = arith.divf %345, %346 : vector<2x16xf32>
    %348 = vector.extract_strided_slice %341 {offsets = [0, 16], sizes = [2, 16], strides = [1, 1]} : vector<2x64xf32> to vector<2x16xf32>
    %349 = arith.negf %348 : vector<2x16xf32>
    %350 = math.exp %349 : vector<2x16xf32>
    %cst_69 = arith.constant 1.000000e+00 : f32
    %351 = vector.broadcast %cst_69 : f32 to vector<2x16xf32>
    %352 = arith.addf %351, %350 : vector<2x16xf32>
    %353 = arith.divf %351, %352 : vector<2x16xf32>
    %354 = vector.extract_strided_slice %341 {offsets = [0, 32], sizes = [2, 16], strides = [1, 1]} : vector<2x64xf32> to vector<2x16xf32>
    %355 = math.tanh %354 : vector<2x16xf32>
    %356 = vector.extract_strided_slice %341 {offsets = [0, 48], sizes = [2, 16], strides = [1, 1]} : vector<2x64xf32> to vector<2x16xf32>
    %357 = arith.negf %356 : vector<2x16xf32>
    %358 = math.exp %357 : vector<2x16xf32>
    %cst_70 = arith.constant 1.000000e+00 : f32
    %359 = vector.broadcast %cst_70 : f32 to vector<2x16xf32>
    %360 = arith.addf %359, %358 : vector<2x16xf32>
    %361 = arith.divf %359, %360 : vector<2x16xf32>
    %362 = arith.mulf %353, %336 : vector<2x16xf32>
    %363 = arith.mulf %347, %355 : vector<2x16xf32>
    %364 = arith.addf %362, %363 : vector<2x16xf32>
    %365 = math.tanh %364 : vector<2x16xf32>
    %366 = arith.mulf %361, %365 : vector<2x16xf32>
    %367 = vector.extract_strided_slice %22 {offsets = [6, 0], sizes = [2, 64], strides = [1, 1]} : vector<16x64xf32> to vector<2x64xf32>
    %cst_71 = arith.constant dense<0.000000e+00> : vector<2x64xf32>
    %368 = tpu.matmul %366, %254, %cst_71 {dimension_numbers = #tpu.dot_dimension_numbers<[1], [0], [0], [1], [0, 0, 1, 1], [], []>} : vector<2x16xf32>, vector<16x64xf32>, vector<2x64xf32> -> vector<2x64xf32>
    %369 = arith.addf %367, %368 : vector<2x64xf32>
    %370 = vector.extract_strided_slice %369 {offsets = [0, 0], sizes = [2, 16], strides = [1, 1]} : vector<2x64xf32> to vector<2x16xf32>
    %371 = arith.negf %370 : vector<2x16xf32>
    %372 = math.exp %371 : vector<2x16xf32>
    %cst_72 = arith.constant 1.000000e+00 : f32
    %373 = vector.broadcast %cst_72 : f32 to vector<2x16xf32>
    %374 = arith.addf %373, %372 : vector<2x16xf32>
    %375 = arith.divf %373, %374 : vector<2x16xf32>
    %376 = vector.extract_strided_slice %369 {offsets = [0, 16], sizes = [2, 16], strides = [1, 1]} : vector<2x64xf32> to vector<2x16xf32>
    %377 = arith.negf %376 : vector<2x16xf32>
    %378 = math.exp %377 : vector<2x16xf32>
    %cst_73 = arith.constant 1.000000e+00 : f32
    %379 = vector.broadcast %cst_73 : f32 to vector<2x16xf32>
    %380 = arith.addf %379, %378 : vector<2x16xf32>
    %381 = arith.divf %379, %380 : vector<2x16xf32>
    %382 = vector.extract_strided_slice %369 {offsets = [0, 32], sizes = [2, 16], strides = [1, 1]} : vector<2x64xf32> to vector<2x16xf32>
    %383 = math.tanh %382 : vector<2x16xf32>
    %384 = vector.extract_strided_slice %369 {offsets = [0, 48], sizes = [2, 16], strides = [1, 1]} : vector<2x64xf32> to vector<2x16xf32>
    %385 = arith.negf %384 : vector<2x16xf32>
    %386 = math.exp %385 : vector<2x16xf32>
    %cst_74 = arith.constant 1.000000e+00 : f32
    %387 = vector.broadcast %cst_74 : f32 to vector<2x16xf32>
    %388 = arith.addf %387, %386 : vector<2x16xf32>
    %389 = arith.divf %387, %388 : vector<2x16xf32>
    %390 = arith.mulf %381, %364 : vector<2x16xf32>
    %391 = arith.mulf %375, %383 : vector<2x16xf32>
    %392 = arith.addf %390, %391 : vector<2x16xf32>
    %393 = math.tanh %392 : vector<2x16xf32>
    %394 = arith.mulf %389, %393 : vector<2x16xf32>
    %395 = vector.extract_strided_slice %22 {offsets = [4, 0], sizes = [2, 64], strides = [1, 1]} : vector<16x64xf32> to vector<2x64xf32>
    %cst_75 = arith.constant dense<0.000000e+00> : vector<2x64xf32>
    %396 = tpu.matmul %394, %254, %cst_75 {dimension_numbers = #tpu.dot_dimension_numbers<[1], [0], [0], [1], [0, 0, 1, 1], [], []>} : vector<2x16xf32>, vector<16x64xf32>, vector<2x64xf32> -> vector<2x64xf32>
    %397 = arith.addf %395, %396 : vector<2x64xf32>
    %398 = vector.extract_strided_slice %397 {offsets = [0, 0], sizes = [2, 16], strides = [1, 1]} : vector<2x64xf32> to vector<2x16xf32>
    %399 = arith.negf %398 : vector<2x16xf32>
    %400 = math.exp %399 : vector<2x16xf32>
    %cst_76 = arith.constant 1.000000e+00 : f32
    %401 = vector.broadcast %cst_76 : f32 to vector<2x16xf32>
    %402 = arith.addf %401, %400 : vector<2x16xf32>
    %403 = arith.divf %401, %402 : vector<2x16xf32>
    %404 = vector.extract_strided_slice %397 {offsets = [0, 16], sizes = [2, 16], strides = [1, 1]} : vector<2x64xf32> to vector<2x16xf32>
    %405 = arith.negf %404 : vector<2x16xf32>
    %406 = math.exp %405 : vector<2x16xf32>
    %cst_77 = arith.constant 1.000000e+00 : f32
    %407 = vector.broadcast %cst_77 : f32 to vector<2x16xf32>
    %408 = arith.addf %407, %406 : vector<2x16xf32>
    %409 = arith.divf %407, %408 : vector<2x16xf32>
    %410 = vector.extract_strided_slice %397 {offsets = [0, 32], sizes = [2, 16], strides = [1, 1]} : vector<2x64xf32> to vector<2x16xf32>
    %411 = math.tanh %410 : vector<2x16xf32>
    %412 = vector.extract_strided_slice %397 {offsets = [0, 48], sizes = [2, 16], strides = [1, 1]} : vector<2x64xf32> to vector<2x16xf32>
    %413 = arith.negf %412 : vector<2x16xf32>
    %414 = math.exp %413 : vector<2x16xf32>
    %cst_78 = arith.constant 1.000000e+00 : f32
    %415 = vector.broadcast %cst_78 : f32 to vector<2x16xf32>
    %416 = arith.addf %415, %414 : vector<2x16xf32>
    %417 = arith.divf %415, %416 : vector<2x16xf32>
    %418 = arith.mulf %409, %392 : vector<2x16xf32>
    %419 = arith.mulf %403, %411 : vector<2x16xf32>
    %420 = arith.addf %418, %419 : vector<2x16xf32>
    %421 = math.tanh %420 : vector<2x16xf32>
    %422 = arith.mulf %417, %421 : vector<2x16xf32>
    %423 = vector.extract_strided_slice %22 {offsets = [2, 0], sizes = [2, 64], strides = [1, 1]} : vector<16x64xf32> to vector<2x64xf32>
    %cst_79 = arith.constant dense<0.000000e+00> : vector<2x64xf32>
    %424 = tpu.matmul %422, %254, %cst_79 {dimension_numbers = #tpu.dot_dimension_numbers<[1], [0], [0], [1], [0, 0, 1, 1], [], []>} : vector<2x16xf32>, vector<16x64xf32>, vector<2x64xf32> -> vector<2x64xf32>
    %425 = arith.addf %423, %424 : vector<2x64xf32>
    %426 = vector.extract_strided_slice %425 {offsets = [0, 0], sizes = [2, 16], strides = [1, 1]} : vector<2x64xf32> to vector<2x16xf32>
    %427 = arith.negf %426 : vector<2x16xf32>
    %428 = math.exp %427 : vector<2x16xf32>
    %cst_80 = arith.constant 1.000000e+00 : f32
    %429 = vector.broadcast %cst_80 : f32 to vector<2x16xf32>
    %430 = arith.addf %429, %428 : vector<2x16xf32>
    %431 = arith.divf %429, %430 : vector<2x16xf32>
    %432 = vector.extract_strided_slice %425 {offsets = [0, 16], sizes = [2, 16], strides = [1, 1]} : vector<2x64xf32> to vector<2x16xf32>
    %433 = arith.negf %432 : vector<2x16xf32>
    %434 = math.exp %433 : vector<2x16xf32>
    %cst_81 = arith.constant 1.000000e+00 : f32
    %435 = vector.broadcast %cst_81 : f32 to vector<2x16xf32>
    %436 = arith.addf %435, %434 : vector<2x16xf32>
    %437 = arith.divf %435, %436 : vector<2x16xf32>
    %438 = vector.extract_strided_slice %425 {offsets = [0, 32], sizes = [2, 16], strides = [1, 1]} : vector<2x64xf32> to vector<2x16xf32>
    %439 = math.tanh %438 : vector<2x16xf32>
    %440 = vector.extract_strided_slice %425 {offsets = [0, 48], sizes = [2, 16], strides = [1, 1]} : vector<2x64xf32> to vector<2x16xf32>
    %441 = arith.negf %440 : vector<2x16xf32>
    %442 = math.exp %441 : vector<2x16xf32>
    %cst_82 = arith.constant 1.000000e+00 : f32
    %443 = vector.broadcast %cst_82 : f32 to vector<2x16xf32>
    %444 = arith.addf %443, %442 : vector<2x16xf32>
    %445 = arith.divf %443, %444 : vector<2x16xf32>
    %446 = arith.mulf %437, %420 : vector<2x16xf32>
    %447 = arith.mulf %431, %439 : vector<2x16xf32>
    %448 = arith.addf %446, %447 : vector<2x16xf32>
    %449 = math.tanh %448 : vector<2x16xf32>
    %450 = arith.mulf %445, %449 : vector<2x16xf32>
    %451 = vector.extract_strided_slice %22 {offsets = [0, 0], sizes = [2, 64], strides = [1, 1]} : vector<16x64xf32> to vector<2x64xf32>
    %cst_83 = arith.constant dense<0.000000e+00> : vector<2x64xf32>
    %452 = tpu.matmul %450, %254, %cst_83 {dimension_numbers = #tpu.dot_dimension_numbers<[1], [0], [0], [1], [0, 0, 1, 1], [], []>} : vector<2x16xf32>, vector<16x64xf32>, vector<2x64xf32> -> vector<2x64xf32>
    %453 = arith.addf %451, %452 : vector<2x64xf32>
    %454 = vector.extract_strided_slice %453 {offsets = [0, 0], sizes = [2, 16], strides = [1, 1]} : vector<2x64xf32> to vector<2x16xf32>
    %455 = arith.negf %454 : vector<2x16xf32>
    %456 = math.exp %455 : vector<2x16xf32>
    %cst_84 = arith.constant 1.000000e+00 : f32
    %457 = vector.broadcast %cst_84 : f32 to vector<2x16xf32>
    %458 = arith.addf %457, %456 : vector<2x16xf32>
    %459 = arith.divf %457, %458 : vector<2x16xf32>
    %460 = vector.extract_strided_slice %453 {offsets = [0, 16], sizes = [2, 16], strides = [1, 1]} : vector<2x64xf32> to vector<2x16xf32>
    %461 = arith.negf %460 : vector<2x16xf32>
    %462 = math.exp %461 : vector<2x16xf32>
    %cst_85 = arith.constant 1.000000e+00 : f32
    %463 = vector.broadcast %cst_85 : f32 to vector<2x16xf32>
    %464 = arith.addf %463, %462 : vector<2x16xf32>
    %465 = arith.divf %463, %464 : vector<2x16xf32>
    %466 = vector.extract_strided_slice %453 {offsets = [0, 32], sizes = [2, 16], strides = [1, 1]} : vector<2x64xf32> to vector<2x16xf32>
    %467 = math.tanh %466 : vector<2x16xf32>
    %468 = vector.extract_strided_slice %453 {offsets = [0, 48], sizes = [2, 16], strides = [1, 1]} : vector<2x64xf32> to vector<2x16xf32>
    %469 = arith.negf %468 : vector<2x16xf32>
    %470 = math.exp %469 : vector<2x16xf32>
    %cst_86 = arith.constant 1.000000e+00 : f32
    %471 = vector.broadcast %cst_86 : f32 to vector<2x16xf32>
    %472 = arith.addf %471, %470 : vector<2x16xf32>
    %473 = arith.divf %471, %472 : vector<2x16xf32>
    %474 = arith.mulf %465, %448 : vector<2x16xf32>
    %475 = arith.mulf %459, %467 : vector<2x16xf32>
    %476 = arith.addf %474, %475 : vector<2x16xf32>
    %477 = math.tanh %476 : vector<2x16xf32>
    %478 = arith.mulf %473, %477 : vector<2x16xf32>
    %479 = tpu.concatenate %253, %478 in 1 : vector<2x16xf32>, vector<2x16xf32> -> vector<2x32xf32>
    %480 = tpu.concatenate %251, %476 in 1 : vector<2x16xf32>, vector<2x16xf32> -> vector<2x32xf32>
    %c0_87 = arith.constant 0 : index
    %c0_88 = arith.constant 0 : index
    %481 = vector.load %arg9[%c0_87, %c0_88] : memref<32x128xf32, #tpu.memory_space<vmem>>, vector<32x128xf32>
    %482 = vector.extract_strided_slice %27 {offsets = [0, 0], sizes = [2, 128], strides = [1, 1]} : vector<16x128xf32> to vector<2x128xf32>
    %cst_89 = arith.constant dense<0.000000e+00> : vector<2x128xf32>
    %483 = tpu.matmul %479, %481, %cst_89 {dimension_numbers = #tpu.dot_dimension_numbers<[1], [0], [0], [1], [0, 0, 1, 1], [], []>} : vector<2x32xf32>, vector<32x128xf32>, vector<2x128xf32> -> vector<2x128xf32>
    %484 = arith.addf %482, %483 : vector<2x128xf32>
    %485 = vector.extract_strided_slice %484 {offsets = [0, 0], sizes = [2, 32], strides = [1, 1]} : vector<2x128xf32> to vector<2x32xf32>
    %486 = arith.negf %485 : vector<2x32xf32>
    %487 = math.exp %486 : vector<2x32xf32>
    %cst_90 = arith.constant 1.000000e+00 : f32
    %488 = vector.broadcast %cst_90 : f32 to vector<2x32xf32>
    %489 = arith.addf %488, %487 : vector<2x32xf32>
    %490 = arith.divf %488, %489 : vector<2x32xf32>
    %491 = vector.extract_strided_slice %484 {offsets = [0, 32], sizes = [2, 32], strides = [1, 1]} : vector<2x128xf32> to vector<2x32xf32>
    %492 = arith.negf %491 : vector<2x32xf32>
    %493 = math.exp %492 : vector<2x32xf32>
    %cst_91 = arith.constant 1.000000e+00 : f32
    %494 = vector.broadcast %cst_91 : f32 to vector<2x32xf32>
    %495 = arith.addf %494, %493 : vector<2x32xf32>
    %496 = arith.divf %494, %495 : vector<2x32xf32>
    %497 = vector.extract_strided_slice %484 {offsets = [0, 64], sizes = [2, 32], strides = [1, 1]} : vector<2x128xf32> to vector<2x32xf32>
    %498 = math.tanh %497 : vector<2x32xf32>
    %499 = vector.extract_strided_slice %484 {offsets = [0, 96], sizes = [2, 32], strides = [1, 1]} : vector<2x128xf32> to vector<2x32xf32>
    %500 = arith.negf %499 : vector<2x32xf32>
    %501 = math.exp %500 : vector<2x32xf32>
    %cst_92 = arith.constant 1.000000e+00 : f32
    %502 = vector.broadcast %cst_92 : f32 to vector<2x32xf32>
    %503 = arith.addf %502, %501 : vector<2x32xf32>
    %504 = arith.divf %502, %503 : vector<2x32xf32>
    %505 = arith.mulf %496, %480 : vector<2x32xf32>
    %506 = arith.mulf %490, %498 : vector<2x32xf32>
    %507 = arith.addf %505, %506 : vector<2x32xf32>
    %508 = math.tanh %507 : vector<2x32xf32>
    %509 = arith.mulf %504, %508 : vector<2x32xf32>
    %510 = vector.extract_strided_slice %27 {offsets = [2, 0], sizes = [2, 128], strides = [1, 1]} : vector<16x128xf32> to vector<2x128xf32>
    %cst_93 = arith.constant dense<0.000000e+00> : vector<2x128xf32>
    %511 = tpu.matmul %509, %481, %cst_93 {dimension_numbers = #tpu.dot_dimension_numbers<[1], [0], [0], [1], [0, 0, 1, 1], [], []>} : vector<2x32xf32>, vector<32x128xf32>, vector<2x128xf32> -> vector<2x128xf32>
    %512 = arith.addf %510, %511 : vector<2x128xf32>
    %513 = vector.extract_strided_slice %512 {offsets = [0, 0], sizes = [2, 32], strides = [1, 1]} : vector<2x128xf32> to vector<2x32xf32>
    %514 = arith.negf %513 : vector<2x32xf32>
    %515 = math.exp %514 : vector<2x32xf32>
    %cst_94 = arith.constant 1.000000e+00 : f32
    %516 = vector.broadcast %cst_94 : f32 to vector<2x32xf32>
    %517 = arith.addf %516, %515 : vector<2x32xf32>
    %518 = arith.divf %516, %517 : vector<2x32xf32>
    %519 = vector.extract_strided_slice %512 {offsets = [0, 32], sizes = [2, 32], strides = [1, 1]} : vector<2x128xf32> to vector<2x32xf32>
    %520 = arith.negf %519 : vector<2x32xf32>
    %521 = math.exp %520 : vector<2x32xf32>
    %cst_95 = arith.constant 1.000000e+00 : f32
    %522 = vector.broadcast %cst_95 : f32 to vector<2x32xf32>
    %523 = arith.addf %522, %521 : vector<2x32xf32>
    %524 = arith.divf %522, %523 : vector<2x32xf32>
    %525 = vector.extract_strided_slice %512 {offsets = [0, 64], sizes = [2, 32], strides = [1, 1]} : vector<2x128xf32> to vector<2x32xf32>
    %526 = math.tanh %525 : vector<2x32xf32>
    %527 = vector.extract_strided_slice %512 {offsets = [0, 96], sizes = [2, 32], strides = [1, 1]} : vector<2x128xf32> to vector<2x32xf32>
    %528 = arith.negf %527 : vector<2x32xf32>
    %529 = math.exp %528 : vector<2x32xf32>
    %cst_96 = arith.constant 1.000000e+00 : f32
    %530 = vector.broadcast %cst_96 : f32 to vector<2x32xf32>
    %531 = arith.addf %530, %529 : vector<2x32xf32>
    %532 = arith.divf %530, %531 : vector<2x32xf32>
    %533 = arith.mulf %524, %507 : vector<2x32xf32>
    %534 = arith.mulf %518, %526 : vector<2x32xf32>
    %535 = arith.addf %533, %534 : vector<2x32xf32>
    %536 = math.tanh %535 : vector<2x32xf32>
    %537 = arith.mulf %532, %536 : vector<2x32xf32>
    %538 = vector.extract_strided_slice %27 {offsets = [4, 0], sizes = [2, 128], strides = [1, 1]} : vector<16x128xf32> to vector<2x128xf32>
    %cst_97 = arith.constant dense<0.000000e+00> : vector<2x128xf32>
    %539 = tpu.matmul %537, %481, %cst_97 {dimension_numbers = #tpu.dot_dimension_numbers<[1], [0], [0], [1], [0, 0, 1, 1], [], []>} : vector<2x32xf32>, vector<32x128xf32>, vector<2x128xf32> -> vector<2x128xf32>
    %540 = arith.addf %538, %539 : vector<2x128xf32>
    %541 = vector.extract_strided_slice %540 {offsets = [0, 0], sizes = [2, 32], strides = [1, 1]} : vector<2x128xf32> to vector<2x32xf32>
    %542 = arith.negf %541 : vector<2x32xf32>
    %543 = math.exp %542 : vector<2x32xf32>
    %cst_98 = arith.constant 1.000000e+00 : f32
    %544 = vector.broadcast %cst_98 : f32 to vector<2x32xf32>
    %545 = arith.addf %544, %543 : vector<2x32xf32>
    %546 = arith.divf %544, %545 : vector<2x32xf32>
    %547 = vector.extract_strided_slice %540 {offsets = [0, 32], sizes = [2, 32], strides = [1, 1]} : vector<2x128xf32> to vector<2x32xf32>
    %548 = arith.negf %547 : vector<2x32xf32>
    %549 = math.exp %548 : vector<2x32xf32>
    %cst_99 = arith.constant 1.000000e+00 : f32
    %550 = vector.broadcast %cst_99 : f32 to vector<2x32xf32>
    %551 = arith.addf %550, %549 : vector<2x32xf32>
    %552 = arith.divf %550, %551 : vector<2x32xf32>
    %553 = vector.extract_strided_slice %540 {offsets = [0, 64], sizes = [2, 32], strides = [1, 1]} : vector<2x128xf32> to vector<2x32xf32>
    %554 = math.tanh %553 : vector<2x32xf32>
    %555 = vector.extract_strided_slice %540 {offsets = [0, 96], sizes = [2, 32], strides = [1, 1]} : vector<2x128xf32> to vector<2x32xf32>
    %556 = arith.negf %555 : vector<2x32xf32>
    %557 = math.exp %556 : vector<2x32xf32>
    %cst_100 = arith.constant 1.000000e+00 : f32
    %558 = vector.broadcast %cst_100 : f32 to vector<2x32xf32>
    %559 = arith.addf %558, %557 : vector<2x32xf32>
    %560 = arith.divf %558, %559 : vector<2x32xf32>
    %561 = arith.mulf %552, %535 : vector<2x32xf32>
    %562 = arith.mulf %546, %554 : vector<2x32xf32>
    %563 = arith.addf %561, %562 : vector<2x32xf32>
    %564 = math.tanh %563 : vector<2x32xf32>
    %565 = arith.mulf %560, %564 : vector<2x32xf32>
    %566 = vector.extract_strided_slice %27 {offsets = [6, 0], sizes = [2, 128], strides = [1, 1]} : vector<16x128xf32> to vector<2x128xf32>
    %cst_101 = arith.constant dense<0.000000e+00> : vector<2x128xf32>
    %567 = tpu.matmul %565, %481, %cst_101 {dimension_numbers = #tpu.dot_dimension_numbers<[1], [0], [0], [1], [0, 0, 1, 1], [], []>} : vector<2x32xf32>, vector<32x128xf32>, vector<2x128xf32> -> vector<2x128xf32>
    %568 = arith.addf %566, %567 : vector<2x128xf32>
    %569 = vector.extract_strided_slice %568 {offsets = [0, 0], sizes = [2, 32], strides = [1, 1]} : vector<2x128xf32> to vector<2x32xf32>
    %570 = arith.negf %569 : vector<2x32xf32>
    %571 = math.exp %570 : vector<2x32xf32>
    %cst_102 = arith.constant 1.000000e+00 : f32
    %572 = vector.broadcast %cst_102 : f32 to vector<2x32xf32>
    %573 = arith.addf %572, %571 : vector<2x32xf32>
    %574 = arith.divf %572, %573 : vector<2x32xf32>
    %575 = vector.extract_strided_slice %568 {offsets = [0, 32], sizes = [2, 32], strides = [1, 1]} : vector<2x128xf32> to vector<2x32xf32>
    %576 = arith.negf %575 : vector<2x32xf32>
    %577 = math.exp %576 : vector<2x32xf32>
    %cst_103 = arith.constant 1.000000e+00 : f32
    %578 = vector.broadcast %cst_103 : f32 to vector<2x32xf32>
    %579 = arith.addf %578, %577 : vector<2x32xf32>
    %580 = arith.divf %578, %579 : vector<2x32xf32>
    %581 = vector.extract_strided_slice %568 {offsets = [0, 64], sizes = [2, 32], strides = [1, 1]} : vector<2x128xf32> to vector<2x32xf32>
    %582 = math.tanh %581 : vector<2x32xf32>
    %583 = vector.extract_strided_slice %568 {offsets = [0, 96], sizes = [2, 32], strides = [1, 1]} : vector<2x128xf32> to vector<2x32xf32>
    %584 = arith.negf %583 : vector<2x32xf32>
    %585 = math.exp %584 : vector<2x32xf32>
    %cst_104 = arith.constant 1.000000e+00 : f32
    %586 = vector.broadcast %cst_104 : f32 to vector<2x32xf32>
    %587 = arith.addf %586, %585 : vector<2x32xf32>
    %588 = arith.divf %586, %587 : vector<2x32xf32>
    %589 = arith.mulf %580, %563 : vector<2x32xf32>
    %590 = arith.mulf %574, %582 : vector<2x32xf32>
    %591 = arith.addf %589, %590 : vector<2x32xf32>
    %592 = math.tanh %591 : vector<2x32xf32>
    %593 = arith.mulf %588, %592 : vector<2x32xf32>
    %594 = vector.extract_strided_slice %27 {offsets = [8, 0], sizes = [2, 128], strides = [1, 1]} : vector<16x128xf32> to vector<2x128xf32>
    %cst_105 = arith.constant dense<0.000000e+00> : vector<2x128xf32>
    %595 = tpu.matmul %593, %481, %cst_105 {dimension_numbers = #tpu.dot_dimension_numbers<[1], [0], [0], [1], [0, 0, 1, 1], [], []>} : vector<2x32xf32>, vector<32x128xf32>, vector<2x128xf32> -> vector<2x128xf32>
    %596 = arith.addf %594, %595 : vector<2x128xf32>
    %597 = vector.extract_strided_slice %596 {offsets = [0, 0], sizes = [2, 32], strides = [1, 1]} : vector<2x128xf32> to vector<2x32xf32>
    %598 = arith.negf %597 : vector<2x32xf32>
    %599 = math.exp %598 : vector<2x32xf32>
    %cst_106 = arith.constant 1.000000e+00 : f32
    %600 = vector.broadcast %cst_106 : f32 to vector<2x32xf32>
    %601 = arith.addf %600, %599 : vector<2x32xf32>
    %602 = arith.divf %600, %601 : vector<2x32xf32>
    %603 = vector.extract_strided_slice %596 {offsets = [0, 32], sizes = [2, 32], strides = [1, 1]} : vector<2x128xf32> to vector<2x32xf32>
    %604 = arith.negf %603 : vector<2x32xf32>
    %605 = math.exp %604 : vector<2x32xf32>
    %cst_107 = arith.constant 1.000000e+00 : f32
    %606 = vector.broadcast %cst_107 : f32 to vector<2x32xf32>
    %607 = arith.addf %606, %605 : vector<2x32xf32>
    %608 = arith.divf %606, %607 : vector<2x32xf32>
    %609 = vector.extract_strided_slice %596 {offsets = [0, 64], sizes = [2, 32], strides = [1, 1]} : vector<2x128xf32> to vector<2x32xf32>
    %610 = math.tanh %609 : vector<2x32xf32>
    %611 = vector.extract_strided_slice %596 {offsets = [0, 96], sizes = [2, 32], strides = [1, 1]} : vector<2x128xf32> to vector<2x32xf32>
    %612 = arith.negf %611 : vector<2x32xf32>
    %613 = math.exp %612 : vector<2x32xf32>
    %cst_108 = arith.constant 1.000000e+00 : f32
    %614 = vector.broadcast %cst_108 : f32 to vector<2x32xf32>
    %615 = arith.addf %614, %613 : vector<2x32xf32>
    %616 = arith.divf %614, %615 : vector<2x32xf32>
    %617 = arith.mulf %608, %591 : vector<2x32xf32>
    %618 = arith.mulf %602, %610 : vector<2x32xf32>
    %619 = arith.addf %617, %618 : vector<2x32xf32>
    %620 = math.tanh %619 : vector<2x32xf32>
    %621 = arith.mulf %616, %620 : vector<2x32xf32>
    %622 = vector.extract_strided_slice %27 {offsets = [10, 0], sizes = [2, 128], strides = [1, 1]} : vector<16x128xf32> to vector<2x128xf32>
    %cst_109 = arith.constant dense<0.000000e+00> : vector<2x128xf32>
    %623 = tpu.matmul %621, %481, %cst_109 {dimension_numbers = #tpu.dot_dimension_numbers<[1], [0], [0], [1], [0, 0, 1, 1], [], []>} : vector<2x32xf32>, vector<32x128xf32>, vector<2x128xf32> -> vector<2x128xf32>
    %624 = arith.addf %622, %623 : vector<2x128xf32>
    %625 = vector.extract_strided_slice %624 {offsets = [0, 0], sizes = [2, 32], strides = [1, 1]} : vector<2x128xf32> to vector<2x32xf32>
    %626 = arith.negf %625 : vector<2x32xf32>
    %627 = math.exp %626 : vector<2x32xf32>
    %cst_110 = arith.constant 1.000000e+00 : f32
    %628 = vector.broadcast %cst_110 : f32 to vector<2x32xf32>
    %629 = arith.addf %628, %627 : vector<2x32xf32>
    %630 = arith.divf %628, %629 : vector<2x32xf32>
    %631 = vector.extract_strided_slice %624 {offsets = [0, 32], sizes = [2, 32], strides = [1, 1]} : vector<2x128xf32> to vector<2x32xf32>
    %632 = arith.negf %631 : vector<2x32xf32>
    %633 = math.exp %632 : vector<2x32xf32>
    %cst_111 = arith.constant 1.000000e+00 : f32
    %634 = vector.broadcast %cst_111 : f32 to vector<2x32xf32>
    %635 = arith.addf %634, %633 : vector<2x32xf32>
    %636 = arith.divf %634, %635 : vector<2x32xf32>
    %637 = vector.extract_strided_slice %624 {offsets = [0, 64], sizes = [2, 32], strides = [1, 1]} : vector<2x128xf32> to vector<2x32xf32>
    %638 = math.tanh %637 : vector<2x32xf32>
    %639 = vector.extract_strided_slice %624 {offsets = [0, 96], sizes = [2, 32], strides = [1, 1]} : vector<2x128xf32> to vector<2x32xf32>
    %640 = arith.negf %639 : vector<2x32xf32>
    %641 = math.exp %640 : vector<2x32xf32>
    %cst_112 = arith.constant 1.000000e+00 : f32
    %642 = vector.broadcast %cst_112 : f32 to vector<2x32xf32>
    %643 = arith.addf %642, %641 : vector<2x32xf32>
    %644 = arith.divf %642, %643 : vector<2x32xf32>
    %645 = arith.mulf %636, %619 : vector<2x32xf32>
    %646 = arith.mulf %630, %638 : vector<2x32xf32>
    %647 = arith.addf %645, %646 : vector<2x32xf32>
    %648 = math.tanh %647 : vector<2x32xf32>
    %649 = arith.mulf %644, %648 : vector<2x32xf32>
    %650 = vector.extract_strided_slice %27 {offsets = [12, 0], sizes = [2, 128], strides = [1, 1]} : vector<16x128xf32> to vector<2x128xf32>
    %cst_113 = arith.constant dense<0.000000e+00> : vector<2x128xf32>
    %651 = tpu.matmul %649, %481, %cst_113 {dimension_numbers = #tpu.dot_dimension_numbers<[1], [0], [0], [1], [0, 0, 1, 1], [], []>} : vector<2x32xf32>, vector<32x128xf32>, vector<2x128xf32> -> vector<2x128xf32>
    %652 = arith.addf %650, %651 : vector<2x128xf32>
    %653 = vector.extract_strided_slice %652 {offsets = [0, 0], sizes = [2, 32], strides = [1, 1]} : vector<2x128xf32> to vector<2x32xf32>
    %654 = arith.negf %653 : vector<2x32xf32>
    %655 = math.exp %654 : vector<2x32xf32>
    %cst_114 = arith.constant 1.000000e+00 : f32
    %656 = vector.broadcast %cst_114 : f32 to vector<2x32xf32>
    %657 = arith.addf %656, %655 : vector<2x32xf32>
    %658 = arith.divf %656, %657 : vector<2x32xf32>
    %659 = vector.extract_strided_slice %652 {offsets = [0, 32], sizes = [2, 32], strides = [1, 1]} : vector<2x128xf32> to vector<2x32xf32>
    %660 = arith.negf %659 : vector<2x32xf32>
    %661 = math.exp %660 : vector<2x32xf32>
    %cst_115 = arith.constant 1.000000e+00 : f32
    %662 = vector.broadcast %cst_115 : f32 to vector<2x32xf32>
    %663 = arith.addf %662, %661 : vector<2x32xf32>
    %664 = arith.divf %662, %663 : vector<2x32xf32>
    %665 = vector.extract_strided_slice %652 {offsets = [0, 64], sizes = [2, 32], strides = [1, 1]} : vector<2x128xf32> to vector<2x32xf32>
    %666 = math.tanh %665 : vector<2x32xf32>
    %667 = vector.extract_strided_slice %652 {offsets = [0, 96], sizes = [2, 32], strides = [1, 1]} : vector<2x128xf32> to vector<2x32xf32>
    %668 = arith.negf %667 : vector<2x32xf32>
    %669 = math.exp %668 : vector<2x32xf32>
    %cst_116 = arith.constant 1.000000e+00 : f32
    %670 = vector.broadcast %cst_116 : f32 to vector<2x32xf32>
    %671 = arith.addf %670, %669 : vector<2x32xf32>
    %672 = arith.divf %670, %671 : vector<2x32xf32>
    %673 = arith.mulf %664, %647 : vector<2x32xf32>
    %674 = arith.mulf %658, %666 : vector<2x32xf32>
    %675 = arith.addf %673, %674 : vector<2x32xf32>
    %676 = math.tanh %675 : vector<2x32xf32>
    %677 = arith.mulf %672, %676 : vector<2x32xf32>
    %678 = vector.extract_strided_slice %27 {offsets = [14, 0], sizes = [2, 128], strides = [1, 1]} : vector<16x128xf32> to vector<2x128xf32>
    %cst_117 = arith.constant dense<0.000000e+00> : vector<2x128xf32>
    %679 = tpu.matmul %677, %481, %cst_117 {dimension_numbers = #tpu.dot_dimension_numbers<[1], [0], [0], [1], [0, 0, 1, 1], [], []>} : vector<2x32xf32>, vector<32x128xf32>, vector<2x128xf32> -> vector<2x128xf32>
    %680 = arith.addf %678, %679 : vector<2x128xf32>
    %681 = vector.extract_strided_slice %680 {offsets = [0, 0], sizes = [2, 32], strides = [1, 1]} : vector<2x128xf32> to vector<2x32xf32>
    %682 = arith.negf %681 : vector<2x32xf32>
    %683 = math.exp %682 : vector<2x32xf32>
    %cst_118 = arith.constant 1.000000e+00 : f32
    %684 = vector.broadcast %cst_118 : f32 to vector<2x32xf32>
    %685 = arith.addf %684, %683 : vector<2x32xf32>
    %686 = arith.divf %684, %685 : vector<2x32xf32>
    %687 = vector.extract_strided_slice %680 {offsets = [0, 32], sizes = [2, 32], strides = [1, 1]} : vector<2x128xf32> to vector<2x32xf32>
    %688 = arith.negf %687 : vector<2x32xf32>
    %689 = math.exp %688 : vector<2x32xf32>
    %cst_119 = arith.constant 1.000000e+00 : f32
    %690 = vector.broadcast %cst_119 : f32 to vector<2x32xf32>
    %691 = arith.addf %690, %689 : vector<2x32xf32>
    %692 = arith.divf %690, %691 : vector<2x32xf32>
    %693 = vector.extract_strided_slice %680 {offsets = [0, 64], sizes = [2, 32], strides = [1, 1]} : vector<2x128xf32> to vector<2x32xf32>
    %694 = math.tanh %693 : vector<2x32xf32>
    %695 = vector.extract_strided_slice %680 {offsets = [0, 96], sizes = [2, 32], strides = [1, 1]} : vector<2x128xf32> to vector<2x32xf32>
    %696 = arith.negf %695 : vector<2x32xf32>
    %697 = math.exp %696 : vector<2x32xf32>
    %cst_120 = arith.constant 1.000000e+00 : f32
    %698 = vector.broadcast %cst_120 : f32 to vector<2x32xf32>
    %699 = arith.addf %698, %697 : vector<2x32xf32>
    %700 = arith.divf %698, %699 : vector<2x32xf32>
    %701 = arith.mulf %692, %675 : vector<2x32xf32>
    %702 = arith.mulf %686, %694 : vector<2x32xf32>
    %703 = arith.addf %701, %702 : vector<2x32xf32>
    %704 = math.tanh %703 : vector<2x32xf32>
    %705 = arith.mulf %700, %704 : vector<2x32xf32>
    %706 = tpu.concatenate %57, %85, %113, %141, %169, %197, %225, %253 in 0 : vector<2x16xf32>, vector<2x16xf32>, vector<2x16xf32>, vector<2x16xf32>, vector<2x16xf32>, vector<2x16xf32>, vector<2x16xf32>, vector<2x16xf32> -> vector<16x16xf32>
    %707 = tpu.concatenate %478, %450, %422, %394, %366, %338, %310, %282 in 0 : vector<2x16xf32>, vector<2x16xf32>, vector<2x16xf32>, vector<2x16xf32>, vector<2x16xf32>, vector<2x16xf32>, vector<2x16xf32>, vector<2x16xf32> -> vector<16x16xf32>
    %708 = tpu.concatenate %706, %707 in 1 : vector<16x16xf32>, vector<16x16xf32> -> vector<16x32xf32>
    %709 = tpu.concatenate %509, %537, %565, %593, %621, %649, %677, %705 in 0 : vector<2x32xf32>, vector<2x32xf32>, vector<2x32xf32>, vector<2x32xf32>, vector<2x32xf32>, vector<2x32xf32>, vector<2x32xf32>, vector<2x32xf32> -> vector<16x32xf32>
    %cst_121 = arith.constant dense<0.000000e+00> : vector<16x16xf32>
    %710 = tpu.matmul %709, %708, %cst_121 {dimension_numbers = #tpu.dot_dimension_numbers<[1], [1], [0], [0], [0, 0, 1, 0], [], []>} : vector<16x32xf32>, vector<16x32xf32>, vector<16x16xf32> -> vector<16x16xf32>
    %c0_122 = arith.constant 0 : index
    %c0_123 = arith.constant 0 : index
    %711 = vector.load %arg15[%c0_122, %c0_123] : memref<16x16xf32, #tpu.memory_space<vmem>>, vector<16x16xf32>
    %712 = arith.addf %710, %711 : vector<16x16xf32>
    %cst_124 = arith.constant dense<0xFF800000> : vector<16xf32>
    %713 = vector.multi_reduction <maximumf>, %712, %cst_124 [1] : vector<16x16xf32> to vector<16xf32>
    %714 = vector.shape_cast %713 : vector<16xf32> to vector<16x1xf32>
    %715 = vector.broadcast %714 : vector<16x1xf32> to vector<16x16xf32>
    %716 = arith.subf %712, %715 : vector<16x16xf32>
    %717 = math.exp %716 : vector<16x16xf32>
    %cst_125 = arith.constant dense<0.000000e+00> : vector<16xf32>
    %718 = vector.multi_reduction <add>, %717, %cst_125 [1] : vector<16x16xf32> to vector<16xf32>
    %719 = vector.shape_cast %718 : vector<16xf32> to vector<16x1xf32>
    %720 = tpu.reciprocal %719 {approx = true} : vector<16x1xf32> -> vector<16x1xf32>
    %721 = vector.broadcast %720 : vector<16x1xf32> to vector<16x16xf32>
    %722 = arith.mulf %717, %721 : vector<16x16xf32>
    %cst_126 = arith.constant dense<0.000000e+00> : vector<16x32xf32>
    %723 = tpu.matmul %722, %708, %cst_126 {dimension_numbers = #tpu.dot_dimension_numbers<[1], [0], [0], [1], [0, 0, 1, 1], [], []>} : vector<16x16xf32>, vector<16x32xf32>, vector<16x32xf32> -> vector<16x32xf32>
    %c0_127 = arith.constant 0 : index
    %c0_128 = arith.constant 0 : index
    %724 = vector.load %arg11[%c0_127, %c0_128] : memref<32x32xf32, #tpu.memory_space<vmem>>, vector<32x32xf32>
    %cst_129 = arith.constant dense<0.000000e+00> : vector<16x32xf32>
    %725 = tpu.matmul %709, %724, %cst_129 {dimension_numbers = #tpu.dot_dimension_numbers<[1], [0], [0], [1], [0, 0, 1, 1], [], []>} : vector<16x32xf32>, vector<32x32xf32>, vector<16x32xf32> -> vector<16x32xf32>
    %c0_130 = arith.constant 0 : index
    %c0_131 = arith.constant 0 : index
    %726 = vector.load %arg12[%c0_130, %c0_131] : memref<32x32xf32, #tpu.memory_space<vmem>>, vector<32x32xf32>
    %cst_132 = arith.constant dense<0.000000e+00> : vector<16x32xf32>
    %727 = tpu.matmul %723, %726, %cst_132 {dimension_numbers = #tpu.dot_dimension_numbers<[1], [0], [0], [1], [0, 0, 1, 1], [], []>} : vector<16x32xf32>, vector<32x32xf32>, vector<16x32xf32> -> vector<16x32xf32>
    %728 = arith.addf %725, %727 : vector<16x32xf32>
    %729 = math.tanh %728 : vector<16x32xf32>
    %c0_133 = arith.constant 0 : index
    %c0_134 = arith.constant 0 : index
    %730 = vector.load %arg13[%c0_133, %c0_134] : memref<32x128xf32, #tpu.memory_space<vmem>>, vector<32x128xf32>
    %cst_135 = arith.constant dense<0.000000e+00> : vector<16x128xf32>
    %731 = tpu.matmul %729, %730, %cst_135 {dimension_numbers = #tpu.dot_dimension_numbers<[1], [0], [0], [1], [0, 0, 1, 1], [], []>} : vector<16x32xf32>, vector<32x128xf32>, vector<16x128xf32> -> vector<16x128xf32>
    %c0_136 = arith.constant 0 : index
    %c0_137 = arith.constant 0 : index
    %732 = vector.load %arg14[%c0_136, %c0_137] : memref<1x128xf32, #tpu.memory_space<vmem>>, vector<1x128xf32>
    %733 = vector.broadcast %732 : vector<1x128xf32> to vector<16x128xf32>
    %734 = arith.addf %731, %733 : vector<16x128xf32>
    %c0_138 = arith.constant 0 : index
    %c0_139 = arith.constant 0 : index
    %735 = vector.load %arg16[%c0_138, %c0_139] : memref<16x128xf32, #tpu.memory_space<vmem>>, vector<16x128xf32>
    tpu.vector_store %arg16[%c0_138, %c0_139], %734 {strides = array<i32>} : memref<16x128xf32, #tpu.memory_space<vmem>>, vector<16x128xf32>,
    return
  }
}

</mosaic_0001>

<llo_original>
// kernel: seq2seq_forward_pallas.1
$region0: #{seq2seq_forward_pallas.1}
  #allocation0 [shape = 'u32[]', space=smem, size = 0x4, offset = 0x4, fixed_abs, tag = 'smem constant byte address 0x4 - core index']
  #allocation1 [shape = 'u32[144,128]{1,0:T(1,128)}', space=vmem, size = 0x12000, scoped, tag = 'internal scratch']
  %s0 = inlined_call_operand.vmem [shape: s32[16,1], index: 0, kind: input, shape index: {}]
  %s1 = inlined_call_operand.vmem [shape: s32[16,1], index: 1, kind: input, shape index: {}]
  %s2 = inlined_call_operand.vmem [shape: f32[20,16], index: 2, kind: input, shape index: {}]
  %s3 = inlined_call_operand.vmem [shape: f32[20,16], index: 3, kind: input, shape index: {}]
  %s4 = inlined_call_operand.vmem [shape: f32[16,128], index: 4, kind: input, shape index: {}]
  %s5 = inlined_call_operand.vmem [shape: f32[1,128], index: 5, kind: input, shape index: {}]
  %s6 = inlined_call_operand.vmem [shape: f32[16,64], index: 6, kind: input, shape index: {}]
  %s7 = inlined_call_operand.vmem [shape: f32[16,64], index: 7, kind: input, shape index: {}]
  %s8 = inlined_call_operand.vmem [shape: f32[16,128], index: 8, kind: input, shape index: {}]
  %s9 = inlined_call_operand.vmem [shape: f32[32,128], index: 9, kind: input, shape index: {}]
  %s10 = inlined_call_operand.vmem [shape: f32[1,128], index: 10, kind: input, shape index: {}]
  %s11 = inlined_call_operand.vmem [shape: f32[32,32], index: 11, kind: input, shape index: {}]
  %s12 = inlined_call_operand.vmem [shape: f32[32,32], index: 12, kind: input, shape index: {}]
  %s13 = inlined_call_operand.vmem [shape: f32[32,128], index: 13, kind: input, shape index: {}]
  %s14 = inlined_call_operand.vmem [shape: f32[1,128], index: 14, kind: input, shape index: {}]
  %s15 = inlined_call_operand.vmem [shape: f32[16,16], index: 15, kind: input, shape index: {}]
  %s16 = inlined_call_operand.vmem [shape: f32[16,128], index: 16, kind: output, shape index: {}]
  %s17 = sld [smem:[#allocation0]]
  $region74: #{seq2seq_forward_pallas.1} parent=0
    _
  %s19 = ssub.s32 1, %s17
  %s20 = scalar_select 0, %s19, %s17
  // Predicated region
  $region2: #{seq2seq_forward_pallas.1} parent=0 // pred_check
    _
  $region3: #{seq2seq_forward_pallas.1} parent=0 // pred_check_branch
    %22 = sbr.rel (0) target = $region5
  $region4: #{seq2seq_forward_pallas.1} parent=0 // pred_region
    _
  $region5: #{seq2seq_forward_pallas.1} parent=0 // pred_fallthru
    _
  // Predicated region
  $region6: #{seq2seq_forward_pallas.1} parent=0 // pred_check
    _
  $region7: #{seq2seq_forward_pallas.1} parent=0 // pred_check_branch
    %24 = sbr.rel (0) target = $region9
  $region8: #{seq2seq_forward_pallas.1} parent=0 // pred_region
    _
  $region9: #{seq2seq_forward_pallas.1} parent=0 // pred_fallthru
    _
  // Predicated region
  $region10: #{seq2seq_forward_pallas.1} parent=0 // pred_check
    _
  $region11: #{seq2seq_forward_pallas.1} parent=0 // pred_check_branch
    %26 = sbr.rel (0) target = $region13
  $region12: #{seq2seq_forward_pallas.1} parent=0 // pred_region
    _
  $region13: #{seq2seq_forward_pallas.1} parent=0 // pred_fallthru
    _
  // Predicated region
  $region14: #{seq2seq_forward_pallas.1} parent=0 // pred_check
    _
  $region15: #{seq2seq_forward_pallas.1} parent=0 // pred_check_branch
    %28 = sbr.rel (0) target = $region17
  $region16: #{seq2seq_forward_pallas.1} parent=0 // pred_region
    _
  $region17: #{seq2seq_forward_pallas.1} parent=0 // pred_fallthru
    _
  // Predicated region
  $region18: #{seq2seq_forward_pallas.1} parent=0 // pred_check
    _
  $region19: #{seq2seq_forward_pallas.1} parent=0 // pred_check_branch
    %30 = sbr.rel (0) target = $region21
  $region20: #{seq2seq_forward_pallas.1} parent=0 // pred_region
    _
  $region21: #{seq2seq_forward_pallas.1} parent=0 // pred_fallthru
    _
  // Predicated region
  $region22: #{seq2seq_forward_pallas.1} parent=0 // pred_check
    _
  $region23: #{seq2seq_forward_pallas.1} parent=0 // pred_check_branch
    %32 = sbr.rel (0) target = $region25
  $region24: #{seq2seq_forward_pallas.1} parent=0 // pred_region
    _
  $region25: #{seq2seq_forward_pallas.1} parent=0 // pred_fallthru
    _
  // Predicated region
  $region26: #{seq2seq_forward_pallas.1} parent=0 // pred_check
    _
  $region27: #{seq2seq_forward_pallas.1} parent=0 // pred_check_branch
    %34 = sbr.rel (0) target = $region29
  $region28: #{seq2seq_forward_pallas.1} parent=0 // pred_region
    _
  $region29: #{seq2seq_forward_pallas.1} parent=0 // pred_fallthru
    _
  // Predicated region
  $region30: #{seq2seq_forward_pallas.1} parent=0 // pred_check
    _
  $region31: #{seq2seq_forward_pallas.1} parent=0 // pred_check_branch
    %36 = sbr.rel (0) target = $region33
  $region32: #{seq2seq_forward_pallas.1} parent=0 // pred_region
    _
  $region33: #{seq2seq_forward_pallas.1} parent=0 // pred_fallthru
    _
  // Predicated region
  $region34: #{seq2seq_forward_pallas.1} parent=0 // pred_check
    _
  $region35: #{seq2seq_forward_pallas.1} parent=0 // pred_check_branch
    %38 = sbr.rel (0) target = $region37
  $region36: #{seq2seq_forward_pallas.1} parent=0 // pred_region
    _
  $region37: #{seq2seq_forward_pallas.1} parent=0 // pred_fallthru
    _
  // Predicated region
  $region38: #{seq2seq_forward_pallas.1} parent=0 // pred_check
    _
  $region39: #{seq2seq_forward_pallas.1} parent=0 // pred_check_branch
    %40 = sbr.rel (0) target = $region41
  $region40: #{seq2seq_forward_pallas.1} parent=0 // pred_region
    _
  $region41: #{seq2seq_forward_pallas.1} parent=0 // pred_fallthru
    _
  // Predicated region
  $region42: #{seq2seq_forward_pallas.1} parent=0 // pred_check
    _
  $region43: #{seq2seq_forward_pallas.1} parent=0 // pred_check_branch
    %42 = sbr.rel (0) target = $region45
  $region44: #{seq2seq_forward_pallas.1} parent=0 // pred_region
    _
  $region45: #{seq2seq_forward_pallas.1} parent=0 // pred_fallthru
    _
  // Predicated region
  $region46: #{seq2seq_forward_pallas.1} parent=0 // pred_check
    _
  $region47: #{seq2seq_forward_pallas.1} parent=0 // pred_check_branch
    %44 = sbr.rel (0) target = $region49
  $region48: #{seq2seq_forward_pallas.1} parent=0 // pred_region
    _
  $region49: #{seq2seq_forward_pallas.1} parent=0 // pred_fallthru
    _
  // Predicated region
  $region50: #{seq2seq_forward_pallas.1} parent=0 // pred_check
    _
  $region51: #{seq2seq_forward_pallas.1} parent=0 // pred_check_branch
    %46 = sbr.rel (0) target = $region53
  $region52: #{seq2seq_forward_pallas.1} parent=0 // pred_region
    _
  $region53: #{seq2seq_forward_pallas.1} parent=0 // pred_fallthru
    _
  // Predicated region
  $region54: #{seq2seq_forward_pallas.1} parent=0 // pred_check
    _
  $region55: #{seq2seq_forward_pallas.1} parent=0 // pred_check_branch
    %48 = sbr.rel (0) target = $region57
  $region56: #{seq2seq_forward_pallas.1} parent=0 // pred_region
    _
  $region57: #{seq2seq_forward_pallas.1} parent=0 // pred_fallthru
    _
  // Predicated region
  $region58: #{seq2seq_forward_pallas.1} parent=0 // pred_check
    _
  $region59: #{seq2seq_forward_pallas.1} parent=0 // pred_check_branch
    %50 = sbr.rel (0) target = $region61
  $region60: #{seq2seq_forward_pallas.1} parent=0 // pred_region
    _
  $region61: #{seq2seq_forward_pallas.1} parent=0 // pred_fallthru
    _
  // Predicated region
  $region62: #{seq2seq_forward_pallas.1} parent=0 // pred_check
    _
  $region63: #{seq2seq_forward_pallas.1} parent=0 // pred_check_branch
    %52 = sbr.rel (0) target = $region65
  $region64: #{seq2seq_forward_pallas.1} parent=0 // pred_region
    _
  $region65: #{seq2seq_forward_pallas.1} parent=0 // pred_fallthru
    _
  %v53 = vld [vmem:[%s0] sm:$0xff]
  %v54 = vld [vmem:[%s0 + $0x8] sm:$0xff]
  %v55 = vld [vmem:[%s2] sm:$0xff]
  %v56 = vld [vmem:[%s2 + $0x8] sm:$0xff]
  %v57 = vld [vmem:[%s2 + $0x10] sm:$0xf]
  %v58 = vlaneseq
  %v59 = vand.u32 %v58, 127
  %60 = vset.pattern.permute.xlu0 0
  %61 = vperm.xlu0 %60, %v53
  %v62 = vpop.permute.xlu0 %61
  %63 = vset.pattern.permute.xlu0 0
  %64 = vperm.xlu0 %63, %v54
  %v65 = vpop.permute.xlu0 %64
  %vm66 = vcmp.eq.s32.totalorder %v62, %v59
  %vm67 = vcmp.eq.s32.totalorder %v65, %v59
  %v68 = vsel %vm66, 1, 0
  %v69 = vsel %vm67, 1, 0
  %v70 = vcvt.s32.f32 %v68
  %v71 = vcvt.s32.f32 %v69
  %vm72 = vcmask 162816
  %v74 = vsel %vm72, %v70, 0
  %v77 = vsel %vm72, %v71, 0
  %vm79 = vcmask 1043456
  %v81 = vsel %vm79, %v57, 0
  %83 = vmatprep.subr.mxu0 0.0
  %84 = vmatpush1.msra.mxu0 0.0
  %85 = vmatprep.subr.mxu0 0.0
  %86 = vmatpush1.msra.mxu0 0.0
  %87 = vmatprep.subr.mxu0 0.0
  %88 = vmatpush1.msra.mxu0 0.0
  %89 = vmatprep.subr.mxu0 0.0
  %90 = vmatpush1.msra.mxu0 0.0
  %91 = vmatprep.subr.mxu0 0.0
  %92 = vmatpush1.msra.mxu0 0.0
  %93 = vmatprep.subr.mxu0 0.0
  %94 = vmatpush1.msra.mxu0 0.0
  %95 = vmatprep.subr.mxu0 0.0
  %96 = vmatpush1.msra.mxu0 0.0
  %97 = vmatprep.subr.mxu0 0.0
  %98 = vmatpush1.msra.mxu0 0.0
  %99 = vmatprep.subr.mxu0 0.0
  %100 = vmatpush1.msra.mxu0 0.0
  %101 = vmatprep.subr.mxu0 0.0
  %102 = vmatpush1.msra.mxu0 0.0
  %103 = vmatprep.subr.mxu0 0.0
  %104 = vmatpush1.msra.mxu0 0.0
  %105 = vmatprep.subr.mxu0 0.0
  %106 = vmatpush1.msra.mxu0 0.0
  %107 = vmatprep.subr.mxu0 0.0
  %108 = vmatpush1.msra.mxu0 0.0
  %109 = vmatprep.subr.mxu0 0.0
  %110 = vmatpush1.msra.mxu0 %v81
  %111 = vmatprep.subr.mxu0 0.0
  %112 = vmatpush1.msra.mxu0 %v56
  %113 = vmatprep.subr.mxu0 0.0
  %114 = vmatpush1.msra.mxu0 %v55
  %115 = vmatprep.subr.mxu0 0.0
  %116 = vmatpush2.msra.mxu0 0.0
  %117 = vmatprep.subr.mxu0 0.0
  %118 = vmatpush2.msra.mxu0 0.0
  %119 = vmatprep.subr.mxu0 0.0
  %120 = vmatpush2.msra.mxu0 0.0
  %121 = vmatprep.subr.mxu0 0.0
  %122 = vmatpush2.msra.mxu0 0.0
  %123 = vmatprep.subr.mxu0 0.0
  %124 = vmatpush2.msra.mxu0 0.0
  %125 = vmatprep.subr.mxu0 0.0
  %126 = vmatpush2.msra.mxu0 0.0
  %127 = vmatprep.subr.mxu0 0.0
  %128 = vmatpush2.msra.mxu0 0.0
  %129 = vmatprep.subr.mxu0 0.0
  %130 = vmatpush2.msra.mxu0 0.0
  %131 = vmatprep.subr.mxu0 0.0
  %132 = vmatpush2.msra.mxu0 0.0
  %133 = vmatprep.subr.mxu0 0.0
  %134 = vmatpush2.msra.mxu0 0.0
  %135 = vmatprep.subr.mxu0 0.0
  %136 = vmatpush2.msra.mxu0 0.0
  %137 = vmatprep.subr.mxu0 0.0
  %138 = vmatpush2.msra.mxu0 0.0
  %139 = vmatprep.subr.mxu0 0.0
  %140 = vmatpush2.msra.mxu0 0.0
  %141 = vmatprep.subr.mxu0 0.0
  %142 = vmatpush2.msra.mxu0 0.0
  %143 = vmatprep.subr.mxu0 0.0
  %144 = vmatpush2.msra.mxu0 0.0
  %145 = vmatprep.subr.mxu0 0.0
  %146 = vmatpush2.msra.mxu0 0.0
  %147 = vmatprep.mubr.f32.mxu0 0.0
  %148 = vmatmul.mubr.f32.gmra.mxu0 %v74
  %v149 = vpop.f32.mrf.mxu0
  %v150 = vadd.f32 0.0, %v149
  %v151 = vpop.f32.mrf.mxu0
  %152 = vmatprep.mubr.f32.mxu0 0.0
  %153 = vmatmul.mubr.f32.gmra.mxu0 %v77
  %v154 = vpop.f32.mrf.mxu0
  %v155 = vadd.f32 0.0, %v154
  %v156 = vpop.f32.mrf.mxu0
  %157 = vdwg.mxu0
  %v158 = vld [vmem:[%s1] sm:$0xff]
  %v159 = vld [vmem:[%s1 + $0x8] sm:$0xff]
  %v160 = vld [vmem:[%s3] sm:$0xff]
  %v161 = vld [vmem:[%s3 + $0x8] sm:$0xff]
  %v162 = vld [vmem:[%s3 + $0x10] sm:$0xf]
  %163 = vset.pattern.permute.xlu0 0
  %164 = vperm.xlu0 %163, %v158
  %v165 = vpop.permute.xlu0 %164
  %166 = vset.pattern.permute.xlu0 0
  %167 = vperm.xlu0 %166, %v159
  %v168 = vpop.permute.xlu0 %167
  %vm169 = vcmp.eq.s32.totalorder %v165, %v59
  %vm170 = vcmp.eq.s32.totalorder %v168, %v59
  %v171 = vsel %vm169, 1, 0
  %v172 = vsel %vm170, 1, 0
  %v173 = vcvt.s32.f32 %v171
  %v174 = vcvt.s32.f32 %v172
  %v176 = vsel %vm72, %v173, 0
  %v179 = vsel %vm72, %v174, 0
  %v182 = vsel %vm79, %v162, 0
  %184 = vmatprep.subr.mxu0 0.0
  %185 = vmatpush1.msra.mxu0 0.0
  %186 = vmatprep.subr.mxu0 0.0
  %187 = vmatpush1.msra.mxu0 0.0
  %188 = vmatprep.subr.mxu0 0.0
  %189 = vmatpush1.msra.mxu0 0.0
  %190 = vmatprep.subr.mxu0 0.0
  %191 = vmatpush1.msra.mxu0 0.0
  %192 = vmatprep.subr.mxu0 0.0
  %193 = vmatpush1.msra.mxu0 0.0
  %194 = vmatprep.subr.mxu0 0.0
  %195 = vmatpush1.msra.mxu0 0.0
  %196 = vmatprep.subr.mxu0 0.0
  %197 = vmatpush1.msra.mxu0 0.0
  %198 = vmatprep.subr.mxu0 0.0
  %199 = vmatpush1.msra.mxu0 0.0
  %200 = vmatprep.subr.mxu0 0.0
  %201 = vmatpush1.msra.mxu0 0.0
  %202 = vmatprep.subr.mxu0 0.0
  %203 = vmatpush1.msra.mxu0 0.0
  %204 = vmatprep.subr.mxu0 0.0
  %205 = vmatpush1.msra.mxu0 0.0
  %206 = vmatprep.subr.mxu0 0.0
  %207 = vmatpush1.msra.mxu0 0.0
  %208 = vmatprep.subr.mxu0 0.0
  %209 = vmatpush1.msra.mxu0 0.0
  %210 = vmatprep.subr.mxu0 0.0
  %211 = vmatpush1.msra.mxu0 %v182
  %212 = vmatprep.subr.mxu0 0.0
  %213 = vmatpush1.msra.mxu0 %v161
  %214 = vmatprep.subr.mxu0 0.0
  %215 = vmatpush1.msra.mxu0 %v160
  %216 = vmatprep.subr.mxu0 0.0
  %217 = vmatpush2.msra.mxu0 0.0
  %218 = vmatprep.subr.mxu0 0.0
  %219 = vmatpush2.msra.mxu0 0.0
  %220 = vmatprep.subr.mxu0 0.0
  %221 = vmatpush2.msra.mxu0 0.0
  %222 = vmatprep.subr.mxu0 0.0
  %223 = vmatpush2.msra.mxu0 0.0
  %224 = vmatprep.subr.mxu0 0.0
  %225 = vmatpush2.msra.mxu0 0.0
  %226 = vmatprep.subr.mxu0 0.0
  %227 = vmatpush2.msra.mxu0 0.0
  %228 = vmatprep.subr.mxu0 0.0
  %229 = vmatpush2.msra.mxu0 0.0
  %230 = vmatprep.subr.mxu0 0.0
  %231 = vmatpush2.msra.mxu0 0.0
  %232 = vmatprep.subr.mxu0 0.0
  %233 = vmatpush2.msra.mxu0 0.0
  %234 = vmatprep.subr.mxu0 0.0
  %235 = vmatpush2.msra.mxu0 0.0
  %236 = vmatprep.subr.mxu0 0.0
  %237 = vmatpush2.msra.mxu0 0.0
  %238 = vmatprep.subr.mxu0 0.0
  %239 = vmatpush2.msra.mxu0 0.0
  %240 = vmatprep.subr.mxu0 0.0
  %241 = vmatpush2.msra.mxu0 0.0
  %242 = vmatprep.subr.mxu0 0.0
  %243 = vmatpush2.msra.mxu0 0.0
  %244 = vmatprep.subr.mxu0 0.0
  %245 = vmatpush2.msra.mxu0 0.0
  %246 = vmatprep.subr.mxu0 0.0
  %247 = vmatpush2.msra.mxu0 0.0
  %248 = vmatprep.mubr.f32.mxu0 0.0
  %249 = vmatmul.mubr.f32.gmra.mxu0 %v176
  %v250 = vpop.f32.mrf.mxu0
  %v251 = vadd.f32 0.0, %v250
  %v252 = vpop.f32.mrf.mxu0
  %253 = vmatprep.mubr.f32.mxu0 0.0
  %254 = vmatmul.mubr.f32.gmra.mxu0 %v179
  %v255 = vpop.f32.mrf.mxu0
  %v256 = vadd.f32 0.0, %v255
  %v257 = vpop.f32.mrf.mxu0
  %258 = vdwg.mxu0
  %v259 = vld [vmem:[%s4] sm:$0xff]
  %v260 = vld [vmem:[%s4 + $0x8] sm:$0xff]
  %v261 = vld [vmem:[%s5] sm:$0x1]
  %v263 = vlaneseq
  %v264 = vshrl.u32 %v263, 7
  %v265 = vsub.s32 0, %v264
  %v266 = vrot.slane %v261, %v265
  %vm268 = vcmask 130048
  %v270 = vsel %vm268, %v150, 0
  %v273 = vsel %vm268, %v155, 0
  %275 = vmatprep.subr.mxu0 0.0
  %276 = vmatpush1.msra.mxu0 0.0
  %277 = vmatprep.subr.mxu0 0.0
  %278 = vmatpush1.msra.mxu0 0.0
  %279 = vmatprep.subr.mxu0 0.0
  %280 = vmatpush1.msra.mxu0 0.0
  %281 = vmatprep.subr.mxu0 0.0
  %282 = vmatpush1.msra.mxu0 0.0
  %283 = vmatprep.subr.mxu0 0.0
  %284 = vmatpush1.msra.mxu0 0.0
  %285 = vmatprep.subr.mxu0 0.0
  %286 = vmatpush1.msra.mxu0 0.0
  %287 = vmatprep.subr.mxu0 0.0
  %288 = vmatpush1.msra.mxu0 0.0
  %289 = vmatprep.subr.mxu0 0.0
  %290 = vmatpush1.msra.mxu0 0.0
  %291 = vmatprep.subr.mxu0 0.0
  %292 = vmatpush1.msra.mxu0 0.0
  %293 = vmatprep.subr.mxu0 0.0
  %294 = vmatpush1.msra.mxu0 0.0
  %295 = vmatprep.subr.mxu0 0.0
  %296 = vmatpush1.msra.mxu0 0.0
  %297 = vmatprep.subr.mxu0 0.0
  %298 = vmatpush1.msra.mxu0 0.0
  %299 = vmatprep.subr.mxu0 0.0
  %300 = vmatpush1.msra.mxu0 0.0
  %301 = vmatprep.subr.mxu0 0.0
  %302 = vmatpush1.msra.mxu0 0.0
  %303 = vmatprep.subr.mxu0 0.0
  %304 = vmatpush1.msra.mxu0 %v260
  %305 = vmatprep.subr.mxu0 0.0
  %306 = vmatpush1.msra.mxu0 %v259
  %307 = vmatprep.subr.mxu0 0.0
  %308 = vmatpush2.msra.mxu0 0.0
  %309 = vmatprep.subr.mxu0 0.0
  %310 = vmatpush2.msra.mxu0 0.0
  %311 = vmatprep.subr.mxu0 0.0
  %312 = vmatpush2.msra.mxu0 0.0
  %313 = vmatprep.subr.mxu0 0.0
  %314 = vmatpush2.msra.mxu0 0.0
  %315 = vmatprep.subr.mxu0 0.0
  %316 = vmatpush2.msra.mxu0 0.0
  %317 = vmatprep.subr.mxu0 0.0
  %318 = vmatpush2.msra.mxu0 0.0
  %319 = vmatprep.subr.mxu0 0.0
  %320 = vmatpush2.msra.mxu0 0.0
  %321 = vmatprep.subr.mxu0 0.0
  %322 = vmatpush2.msra.mxu0 0.0
  %323 = vmatprep.subr.mxu0 0.0
  %324 = vmatpush2.msra.mxu0 0.0
  %325 = vmatprep.subr.mxu0 0.0
  %326 = vmatpush2.msra.mxu0 0.0
  %327 = vmatprep.subr.mxu0 0.0
  %328 = vmatpush2.msra.mxu0 0.0
  %329 = vmatprep.subr.mxu0 0.0
  %330 = vmatpush2.msra.mxu0 0.0
  %331 = vmatprep.subr.mxu0 0.0
  %332 = vmatpush2.msra.mxu0 0.0
  %333 = vmatprep.subr.mxu0 0.0
  %334 = vmatpush2.msra.mxu0 0.0
  %335 = vmatprep.subr.mxu0 0.0
  %336 = vmatpush2.msra.mxu0 0.0
  %337 = vmatprep.subr.mxu0 0.0
  %338 = vmatpush2.msra.mxu0 0.0
  %339 = vmatprep.mubr.f32.mxu0 0.0
  %340 = vmatmul.mubr.f32.gmra.mxu0 %v270
  %v341 = vpop.f32.mrf.mxu0
  %v342 = vadd.f32 %v266, %v341
  %v343 = vpop.f32.mrf.mxu0
  %344 = vmatprep.mubr.f32.mxu0 0.0
  %345 = vmatmul.mubr.f32.gmra.mxu0 %v273
  %v346 = vpop.f32.mrf.mxu0
  %v347 = vadd.f32 %v266, %v346
  %v348 = vpop.f32.mrf.mxu0
  %349 = vdwg.mxu0
  %v350 = vld [vmem:[%s8] sm:$0xff]
  %v351 = vld [vmem:[%s8 + $0x8] sm:$0xff]
  %v352 = vld [vmem:[%s10] sm:$0x1]
  %v354 = vlaneseq
  %v355 = vshrl.u32 %v354, 7
  %v356 = vsub.s32 0, %v355
  %v357 = vrot.slane %v352, %v356
  %v360 = vsel %vm268, %v251, 0
  %v363 = vsel %vm268, %v256, 0
  %365 = vmatprep.subr.mxu0 0.0
  %366 = vmatpush1.msra.mxu0 0.0
  %367 = vmatprep.subr.mxu0 0.0
  %368 = vmatpush1.msra.mxu0 0.0
  %369 = vmatprep.subr.mxu0 0.0
  %370 = vmatpush1.msra.mxu0 0.0
  %371 = vmatprep.subr.mxu0 0.0
  %372 = vmatpush1.msra.mxu0 0.0
  %373 = vmatprep.subr.mxu0 0.0
  %374 = vmatpush1.msra.mxu0 0.0
  %375 = vmatprep.subr.mxu0 0.0
  %376 = vmatpush1.msra.mxu0 0.0
  %377 = vmatprep.subr.mxu0 0.0
  %378 = vmatpush1.msra.mxu0 0.0
  %379 = vmatprep.subr.mxu0 0.0
  %380 = vmatpush1.msra.mxu0 0.0
  %381 = vmatprep.subr.mxu0 0.0
  %382 = vmatpush1.msra.mxu0 0.0
  %383 = vmatprep.subr.mxu0 0.0
  %384 = vmatpush1.msra.mxu0 0.0
  %385 = vmatprep.subr.mxu0 0.0
  %386 = vmatpush1.msra.mxu0 0.0
  %387 = vmatprep.subr.mxu0 0.0
  %388 = vmatpush1.msra.mxu0 0.0
  %389 = vmatprep.subr.mxu0 0.0
  %390 = vmatpush1.msra.mxu0 0.0
  %391 = vmatprep.subr.mxu0 0.0
  %392 = vmatpush1.msra.mxu0 0.0
  %393 = vmatprep.subr.mxu0 0.0
  %394 = vmatpush1.msra.mxu0 %v351
  %395 = vmatprep.subr.mxu0 0.0
  %396 = vmatpush1.msra.mxu0 %v350
  %397 = vmatprep.subr.mxu0 0.0
  %398 = vmatpush2.msra.mxu0 0.0
  %399 = vmatprep.subr.mxu0 0.0
  %400 = vmatpush2.msra.mxu0 0.0
  %401 = vmatprep.subr.mxu0 0.0
  %402 = vmatpush2.msra.mxu0 0.0
  %403 = vmatprep.subr.mxu0 0.0
  %404 = vmatpush2.msra.mxu0 0.0
  %405 = vmatprep.subr.mxu0 0.0
  %406 = vmatpush2.msra.mxu0 0.0
  %407 = vmatprep.subr.mxu0 0.0
  %408 = vmatpush2.msra.mxu0 0.0
  %409 = vmatprep.subr.mxu0 0.0
  %410 = vmatpush2.msra.mxu0 0.0
  %411 = vmatprep.subr.mxu0 0.0
  %412 = vmatpush2.msra.mxu0 0.0
  %413 = vmatprep.subr.mxu0 0.0
  %414 = vmatpush2.msra.mxu0 0.0
  %415 = vmatprep.subr.mxu0 0.0
  %416 = vmatpush2.msra.mxu0 0.0
  %417 = vmatprep.subr.mxu0 0.0
  %418 = vmatpush2.msra.mxu0 0.0
  %419 = vmatprep.subr.mxu0 0.0
  %420 = vmatpush2.msra.mxu0 0.0
  %421 = vmatprep.subr.mxu0 0.0
  %422 = vmatpush2.msra.mxu0 0.0
  %423 = vmatprep.subr.mxu0 0.0
  %424 = vmatpush2.msra.mxu0 0.0
  %425 = vmatprep.subr.mxu0 0.0
  %426 = vmatpush2.msra.mxu0 0.0
  %427 = vmatprep.subr.mxu0 0.0
  %428 = vmatpush2.msra.mxu0 0.0
  %429 = vmatprep.mubr.f32.mxu0 0.0
  %430 = vmatmul.mubr.f32.gmra.mxu0 %v360
  %v431 = vpop.f32.mrf.mxu0
  %v432 = vadd.f32 %v357, %v431
  %v433 = vpop.f32.mrf.mxu0
  %434 = vmatprep.mubr.f32.mxu0 0.0
  %435 = vmatmul.mubr.f32.gmra.mxu0 %v363
  %v436 = vpop.f32.mrf.mxu0
  %v437 = vadd.f32 %v357, %v436
  %v438 = vpop.f32.mrf.mxu0
  %439 = vdwg.mxu0
  %v440 = vld [vmem:[%s6] sm:$0xff]
  %v441 = vld [vmem:[%s6 + $0x8] sm:$0xff]
  %v443 = vsel %vm268, 0.0, 0
  %445 = vmatprep.subr.mxu0 0.0
  %446 = vmatpush1.msra.mxu0 0.0
  %447 = vmatprep.subr.mxu0 0.0
  %448 = vmatpush1.msra.mxu0 0.0
  %449 = vmatprep.subr.mxu0 0.0
  %450 = vmatpush1.msra.mxu0 0.0
  %451 = vmatprep.subr.mxu0 0.0
  %452 = vmatpush1.msra.mxu0 0.0
  %453 = vmatprep.subr.mxu0 0.0
  %454 = vmatpush1.msra.mxu0 0.0
  %455 = vmatprep.subr.mxu0 0.0
  %456 = vmatpush1.msra.mxu0 0.0
  %457 = vmatprep.subr.mxu0 0.0
  %458 = vmatpush1.msra.mxu0 0.0
  %459 = vmatprep.subr.mxu0 0.0
  %460 = vmatpush1.msra.mxu0 0.0
  %461 = vmatprep.subr.mxu0 0.0
  %462 = vmatpush1.msra.mxu0 0.0
  %463 = vmatprep.subr.mxu0 0.0
  %464 = vmatpush1.msra.mxu0 0.0
  %465 = vmatprep.subr.mxu0 0.0
  %466 = vmatpush1.msra.mxu0 0.0
  %467 = vmatprep.subr.mxu0 0.0
  %468 = vmatpush1.msra.mxu0 0.0
  %469 = vmatprep.subr.mxu0 0.0
  %470 = vmatpush1.msra.mxu0 0.0
  %471 = vmatprep.subr.mxu0 0.0
  %472 = vmatpush1.msra.mxu0 0.0
  %473 = vmatprep.subr.mxu0 0.0
  %474 = vmatpush1.msra.mxu0 %v441
  %475 = vmatprep.subr.mxu0 0.0
  %476 = vmatpush1.msra.mxu0 %v440
  %477 = vmatprep.subr.mxu0 0.0
  %478 = vmatpush2.msra.mxu0 0.0
  %479 = vmatprep.subr.mxu0 0.0
  %480 = vmatpush2.msra.mxu0 0.0
  %481 = vmatprep.subr.mxu0 0.0
  %482 = vmatpush2.msra.mxu0 0.0
  %483 = vmatprep.subr.mxu0 0.0
  %484 = vmatpush2.msra.mxu0 0.0
  %485 = vmatprep.subr.mxu0 0.0
  %486 = vmatpush2.msra.mxu0 0.0
  %487 = vmatprep.subr.mxu0 0.0
  %488 = vmatpush2.msra.mxu0 0.0
  %489 = vmatprep.subr.mxu0 0.0
  %490 = vmatpush2.msra.mxu0 0.0
  %491 = vmatprep.subr.mxu0 0.0
  %492 = vmatpush2.msra.mxu0 0.0
  %493 = vmatprep.subr.mxu0 0.0
  %494 = vmatpush2.msra.mxu0 0.0
  %495 = vmatprep.subr.mxu0 0.0
  %496 = vmatpush2.msra.mxu0 0.0
  %497 = vmatprep.subr.mxu0 0.0
  %498 = vmatpush2.msra.mxu0 0.0
  %499 = vmatprep.subr.mxu0 0.0
  %500 = vmatpush2.msra.mxu0 0.0
  %501 = vmatprep.subr.mxu0 0.0
  %502 = vmatpush2.msra.mxu0 0.0
  %503 = vmatprep.subr.mxu0 0.0
  %504 = vmatpush2.msra.mxu0 0.0
  %505 = vmatprep.subr.mxu0 0.0
  %506 = vmatpush2.msra.mxu0 0.0
  %507 = vmatprep.subr.mxu0 0.0
  %508 = vmatpush2.msra.mxu0 0.0
  %509 = vmatprep.mubr.f32.mxu0 0.0
  %510 = vmatmul.mubr.f32.gmra.mxu0 %v443
  %v511 = vpop.f32.mrf.mxu0
  %v512 = vadd.f32 0.0, %v511
  %v513 = vpop.f32.mrf.mxu0
  %514 = vdwg.mxu0
  %v515 = vadd.f32 %v342, %v512
  %v516 = vxor.u32 %v515, 2147483648
  %v517 = vmul.f32 %v516, 1.442695
  %v518 = vpow.pop %v517
  %v519 = vadd.f32 %v518, 1.0
  %v520 = vrcp.pop %v519
  %v521 = vmul.f32 1.0, %v520
  %v522 = vtanh.pop %v515
  %v523 = vmul.f32 %v521, 0.0
  %525 = vrot.lane.b32.xlu0 %v522, 96
  %v526 = vpop.permute.xlu0 %525
  %v528 = vmul.f32 %v521, %v526
  %530 = vrot.lane.b32.xlu0 %v528, 16
  %v531 = vpop.permute.xlu0 %530
  %v533 = vadd.f32 %v523, %v531
  %v534 = vtanh.pop %v533
  %536 = vrot.lane.b32.xlu0 %v534, 32
  %v537 = vpop.permute.xlu0 %536
  %v539 = vmul.f32 %v521, %v537
  %541 = vrot.lane.b32.xlu0 %v539, 80
  %v542 = vpop.permute.xlu0 %541
  %v543 = vsel %vm268, %v542, 0
  %545 = vmatprep.subr.mxu0 0.0
  %546 = vmatpush1.msra.mxu0 0.0
  %547 = vmatprep.subr.mxu0 0.0
  %548 = vmatpush1.msra.mxu0 0.0
  %549 = vmatprep.subr.mxu0 0.0
  %550 = vmatpush1.msra.mxu0 0.0
  %551 = vmatprep.subr.mxu0 0.0
  %552 = vmatpush1.msra.mxu0 0.0
  %553 = vmatprep.subr.mxu0 0.0
  %554 = vmatpush1.msra.mxu0 0.0
  %555 = vmatprep.subr.mxu0 0.0
  %556 = vmatpush1.msra.mxu0 0.0
  %557 = vmatprep.subr.mxu0 0.0
  %558 = vmatpush1.msra.mxu0 0.0
  %559 = vmatprep.subr.mxu0 0.0
  %560 = vmatpush1.msra.mxu0 0.0
  %561 = vmatprep.subr.mxu0 0.0
  %562 = vmatpush1.msra.mxu0 0.0
  %563 = vmatprep.subr.mxu0 0.0
  %564 = vmatpush1.msra.mxu0 0.0
  %565 = vmatprep.subr.mxu0 0.0
  %566 = vmatpush1.msra.mxu0 0.0
  %567 = vmatprep.subr.mxu0 0.0
  %568 = vmatpush1.msra.mxu0 0.0
  %569 = vmatprep.subr.mxu0 0.0
  %570 = vmatpush1.msra.mxu0 0.0
  %571 = vmatprep.subr.mxu0 0.0
  %572 = vmatpush1.msra.mxu0 0.0
  %573 = vmatprep.subr.mxu0 0.0
  %574 = vmatpush1.msra.mxu0 %v441
  %575 = vmatprep.subr.mxu0 0.0
  %576 = vmatpush1.msra.mxu0 %v440
  %577 = vmatprep.subr.mxu0 0.0
  %578 = vmatpush2.msra.mxu0 0.0
  %579 = vmatprep.subr.mxu0 0.0
  %580 = vmatpush2.msra.mxu0 0.0
  %581 = vmatprep.subr.mxu0 0.0
  %582 = vmatpush2.msra.mxu0 0.0
  %583 = vmatprep.subr.mxu0 0.0
  %584 = vmatpush2.msra.mxu0 0.0
  %585 = vmatprep.subr.mxu0 0.0
  %586 = vmatpush2.msra.mxu0 0.0
  %587 = vmatprep.subr.mxu0 0.0
  %588 = vmatpush2.msra.mxu0 0.0
  %589 = vmatprep.subr.mxu0 0.0
  %590 = vmatpush2.msra.mxu0 0.0
  %591 = vmatprep.subr.mxu0 0.0
  %592 = vmatpush2.msra.mxu0 0.0
  %593 = vmatprep.subr.mxu0 0.0
  %594 = vmatpush2.msra.mxu0 0.0
  %595 = vmatprep.subr.mxu0 0.0
  %596 = vmatpush2.msra.mxu0 0.0
  %597 = vmatprep.subr.mxu0 0.0
  %598 = vmatpush2.msra.mxu0 0.0
  %599 = vmatprep.subr.mxu0 0.0
  %600 = vmatpush2.msra.mxu0 0.0
  %601 = vmatprep.subr.mxu0 0.0
  %602 = vmatpush2.msra.mxu0 0.0
  %603 = vmatprep.subr.mxu0 0.0
  %604 = vmatpush2.msra.mxu0 0.0
  %605 = vmatprep.subr.mxu0 0.0
  %606 = vmatpush2.msra.mxu0 0.0
  %607 = vmatprep.subr.mxu0 0.0
  %608 = vmatpush2.msra.mxu0 0.0
  %609 = vmatprep.mubr.f32.mxu0 0.0
  %610 = vmatmul.mubr.f32.gmra.mxu0 %v543
  %v611 = vpop.f32.mrf.mxu0
  %v612 = vadd.f32 0.0, %v611
  %v613 = vpop.f32.mrf.mxu0
  %614 = vdwg.mxu0
  %v616 = vrot.slane %v612, 6
  %v618 = vadd.f32 %v342, %v616
  %v619 = vxor.u32 %v618, 2147483648
  %v620 = vmul.f32 %v619, 1.442695
  %v621 = vpow.pop %v620
  %v622 = vadd.f32 %v621, 1.0
  %v623 = vrcp.pop %v622
  %v624 = vmul.f32 1.0, %v623
  %v625 = vtanh.pop %v618
  %v627 = vrot.slane %v533, 6
  %v629 = vmul.f32 %v624, %v627
  %631 = vrot.lane.b32.xlu0 %v625, 96
  %v632 = vpop.permute.xlu0 %631
  %v634 = vmul.f32 %v624, %v632
  %636 = vrot.lane.b32.xlu0 %v634, 16
  %v637 = vpop.permute.xlu0 %636
  %v639 = vadd.f32 %v629, %v637
  %v640 = vtanh.pop %v639
  %642 = vrot.lane.b32.xlu0 %v640, 32
  %v643 = vpop.permute.xlu0 %642
  %v645 = vmul.f32 %v624, %v643
  %v647 = vrot.slane %v645, 2
  %648 = vrot.lane.b32.xlu0 %v647, 80
  %v649 = vpop.permute.xlu0 %648
  %v650 = vsel %vm268, %v649, 0
  %652 = vmatprep.subr.mxu0 0.0
  %653 = vmatpush1.msra.mxu0 0.0
  %654 = vmatprep.subr.mxu0 0.0
  %655 = vmatpush1.msra.mxu0 0.0
  %656 = vmatprep.subr.mxu0 0.0
  %657 = vmatpush1.msra.mxu0 0.0
  %658 = vmatprep.subr.mxu0 0.0
  %659 = vmatpush1.msra.mxu0 0.0
  %660 = vmatprep.subr.mxu0 0.0
  %661 = vmatpush1.msra.mxu0 0.0
  %662 = vmatprep.subr.mxu0 0.0
  %663 = vmatpush1.msra.mxu0 0.0
  %664 = vmatprep.subr.mxu0 0.0
  %665 = vmatpush1.msra.mxu0 0.0
  %666 = vmatprep.subr.mxu0 0.0
  %667 = vmatpush1.msra.mxu0 0.0
  %668 = vmatprep.subr.mxu0 0.0
  %669 = vmatpush1.msra.mxu0 0.0
  %670 = vmatprep.subr.mxu0 0.0
  %671 = vmatpush1.msra.mxu0 0.0
  %672 = vmatprep.subr.mxu0 0.0
  %673 = vmatpush1.msra.mxu0 0.0
  %674 = vmatprep.subr.mxu0 0.0
  %675 = vmatpush1.msra.mxu0 0.0
  %676 = vmatprep.subr.mxu0 0.0
  %677 = vmatpush1.msra.mxu0 0.0
  %678 = vmatprep.subr.mxu0 0.0
  %679 = vmatpush1.msra.mxu0 0.0
  %680 = vmatprep.subr.mxu0 0.0
  %681 = vmatpush1.msra.mxu0 %v441
  %682 = vmatprep.subr.mxu0 0.0
  %683 = vmatpush1.msra.mxu0 %v440
  %684 = vmatprep.subr.mxu0 0.0
  %685 = vmatpush2.msra.mxu0 0.0
  %686 = vmatprep.subr.mxu0 0.0
  %687 = vmatpush2.msra.mxu0 0.0
  %688 = vmatprep.subr.mxu0 0.0
  %689 = vmatpush2.msra.mxu0 0.0
  %690 = vmatprep.subr.mxu0 0.0
  %691 = vmatpush2.msra.mxu0 0.0
  %692 = vmatprep.subr.mxu0 0.0
  %693 = vmatpush2.msra.mxu0 0.0
  %694 = vmatprep.subr.mxu0 0.0
  %695 = vmatpush2.msra.mxu0 0.0
  %696 = vmatprep.subr.mxu0 0.0
  %697 = vmatpush2.msra.mxu0 0.0
  %698 = vmatprep.subr.mxu0 0.0
  %699 = vmatpush2.msra.mxu0 0.0
  %700 = vmatprep.subr.mxu0 0.0
  %701 = vmatpush2.msra.mxu0 0.0
  %702 = vmatprep.subr.mxu0 0.0
  %703 = vmatpush2.msra.mxu0 0.0
  %704 = vmatprep.subr.mxu0 0.0
  %705 = vmatpush2.msra.mxu0 0.0
  %706 = vmatprep.subr.mxu0 0.0
  %707 = vmatpush2.msra.mxu0 0.0
  %708 = vmatprep.subr.mxu0 0.0
  %709 = vmatpush2.msra.mxu0 0.0
  %710 = vmatprep.subr.mxu0 0.0
  %711 = vmatpush2.msra.mxu0 0.0
  %712 = vmatprep.subr.mxu0 0.0
  %713 = vmatpush2.msra.mxu0 0.0
  %714 = vmatprep.subr.mxu0 0.0
  %715 = vmatpush2.msra.mxu0 0.0
  %716 = vmatprep.mubr.f32.mxu0 0.0
  %717 = vmatmul.mubr.f32.gmra.mxu0 %v650
  %v718 = vpop.f32.mrf.mxu0
  %v719 = vadd.f32 0.0, %v718
  %v720 = vpop.f32.mrf.mxu0
  %721 = vdwg.mxu0
  %v723 = vrot.slane %v719, 4
  %v725 = vadd.f32 %v342, %v723
  %v726 = vxor.u32 %v725, 2147483648
  %v727 = vmul.f32 %v726, 1.442695
  %v728 = vpow.pop %v727
  %v729 = vadd.f32 %v728, 1.0
  %v730 = vrcp.pop %v729
  %v731 = vmul.f32 1.0, %v730
  %v732 = vtanh.pop %v725
  %v734 = vrot.slane %v639, 6
  %v736 = vmul.f32 %v731, %v734
  %738 = vrot.lane.b32.xlu0 %v732, 96
  %v739 = vpop.permute.xlu0 %738
  %v741 = vmul.f32 %v731, %v739
  %743 = vrot.lane.b32.xlu0 %v741, 16
  %v744 = vpop.permute.xlu0 %743
  %v746 = vadd.f32 %v736, %v744
  %v747 = vtanh.pop %v746
  %749 = vrot.lane.b32.xlu0 %v747, 32
  %v750 = vpop.permute.xlu0 %749
  %v752 = vmul.f32 %v731, %v750
  %v754 = vrot.slane %v752, 4
  %755 = vrot.lane.b32.xlu0 %v754, 80
  %v756 = vpop.permute.xlu0 %755
  %v757 = vsel %vm268, %v756, 0
  %759 = vmatprep.subr.mxu0 0.0
  %760 = vmatpush1.msra.mxu0 0.0
  %761 = vmatprep.subr.mxu0 0.0
  %762 = vmatpush1.msra.mxu0 0.0
  %763 = vmatprep.subr.mxu0 0.0
  %764 = vmatpush1.msra.mxu0 0.0
  %765 = vmatprep.subr.mxu0 0.0
  %766 = vmatpush1.msra.mxu0 0.0
  %767 = vmatprep.subr.mxu0 0.0
  %768 = vmatpush1.msra.mxu0 0.0
  %769 = vmatprep.subr.mxu0 0.0
  %770 = vmatpush1.msra.mxu0 0.0
  %771 = vmatprep.subr.mxu0 0.0
  %772 = vmatpush1.msra.mxu0 0.0
  %773 = vmatprep.subr.mxu0 0.0
  %774 = vmatpush1.msra.mxu0 0.0
  %775 = vmatprep.subr.mxu0 0.0
  %776 = vmatpush1.msra.mxu0 0.0
  %777 = vmatprep.subr.mxu0 0.0
  %778 = vmatpush1.msra.mxu0 0.0
  %779 = vmatprep.subr.mxu0 0.0
  %780 = vmatpush1.msra.mxu0 0.0
  %781 = vmatprep.subr.mxu0 0.0
  %782 = vmatpush1.msra.mxu0 0.0
  %783 = vmatprep.subr.mxu0 0.0
  %784 = vmatpush1.msra.mxu0 0.0
  %785 = vmatprep.subr.mxu0 0.0
  %786 = vmatpush1.msra.mxu0 0.0
  %787 = vmatprep.subr.mxu0 0.0
  %788 = vmatpush1.msra.mxu0 %v441
  %789 = vmatprep.subr.mxu0 0.0
  %790 = vmatpush1.msra.mxu0 %v440
  %791 = vmatprep.subr.mxu0 0.0
  %792 = vmatpush2.msra.mxu0 0.0
  %793 = vmatprep.subr.mxu0 0.0
  %794 = vmatpush2.msra.mxu0 0.0
  %795 = vmatprep.subr.mxu0 0.0
  %796 = vmatpush2.msra.mxu0 0.0
  %797 = vmatprep.subr.mxu0 0.0
  %798 = vmatpush2.msra.mxu0 0.0
  %799 = vmatprep.subr.mxu0 0.0
  %800 = vmatpush2.msra.mxu0 0.0
  %801 = vmatprep.subr.mxu0 0.0
  %802 = vmatpush2.msra.mxu0 0.0
  %803 = vmatprep.subr.mxu0 0.0
  %804 = vmatpush2.msra.mxu0 0.0
  %805 = vmatprep.subr.mxu0 0.0
  %806 = vmatpush2.msra.mxu0 0.0
  %807 = vmatprep.subr.mxu0 0.0
  %808 = vmatpush2.msra.mxu0 0.0
  %809 = vmatprep.subr.mxu0 0.0
  %810 = vmatpush2.msra.mxu0 0.0
  %811 = vmatprep.subr.mxu0 0.0
  %812 = vmatpush2.msra.mxu0 0.0
  %813 = vmatprep.subr.mxu0 0.0
  %814 = vmatpush2.msra.mxu0 0.0
  %815 = vmatprep.subr.mxu0 0.0
  %816 = vmatpush2.msra.mxu0 0.0
  %817 = vmatprep.subr.mxu0 0.0
  %818 = vmatpush2.msra.mxu0 0.0
  %819 = vmatprep.subr.mxu0 0.0
  %820 = vmatpush2.msra.mxu0 0.0
  %821 = vmatprep.subr.mxu0 0.0
  %822 = vmatpush2.msra.mxu0 0.0
  %823 = vmatprep.mubr.f32.mxu0 0.0
  %824 = vmatmul.mubr.f32.gmra.mxu0 %v757
  %v825 = vpop.f32.mrf.mxu0
  %v826 = vadd.f32 0.0, %v825
  %v827 = vpop.f32.mrf.mxu0
  %828 = vdwg.mxu0
  %v830 = vrot.slane %v826, 2
  %v832 = vadd.f32 %v342, %v830
  %v833 = vxor.u32 %v832, 2147483648
  %v834 = vmul.f32 %v833, 1.442695
  %v835 = vpow.pop %v834
  %v836 = vadd.f32 %v835, 1.0
  %v837 = vrcp.pop %v836
  %v838 = vmul.f32 1.0, %v837
  %v839 = vtanh.pop %v832
  %v841 = vrot.slane %v746, 6
  %v843 = vmul.f32 %v838, %v841
  %845 = vrot.lane.b32.xlu0 %v839, 96
  %v846 = vpop.permute.xlu0 %845
  %v848 = vmul.f32 %v838, %v846
  %850 = vrot.lane.b32.xlu0 %v848, 16
  %v851 = vpop.permute.xlu0 %850
  %v853 = vadd.f32 %v843, %v851
  %v854 = vtanh.pop %v853
  %856 = vrot.lane.b32.xlu0 %v854, 32
  %v857 = vpop.permute.xlu0 %856
  %v859 = vmul.f32 %v838, %v857
  %v861 = vrot.slane %v859, 6
  %862 = vrot.lane.b32.xlu0 %v861, 80
  %v863 = vpop.permute.xlu0 %862
  %v864 = vsel %vm268, %v863, 0
  %866 = vmatprep.subr.mxu0 0.0
  %867 = vmatpush1.msra.mxu0 0.0
  %868 = vmatprep.subr.mxu0 0.0
  %869 = vmatpush1.msra.mxu0 0.0
  %870 = vmatprep.subr.mxu0 0.0
  %871 = vmatpush1.msra.mxu0 0.0
  %872 = vmatprep.subr.mxu0 0.0
  %873 = vmatpush1.msra.mxu0 0.0
  %874 = vmatprep.subr.mxu0 0.0
  %875 = vmatpush1.msra.mxu0 0.0
  %876 = vmatprep.subr.mxu0 0.0
  %877 = vmatpush1.msra.mxu0 0.0
  %878 = vmatprep.subr.mxu0 0.0
  %879 = vmatpush1.msra.mxu0 0.0
  %880 = vmatprep.subr.mxu0 0.0
  %881 = vmatpush1.msra.mxu0 0.0
  %882 = vmatprep.subr.mxu0 0.0
  %883 = vmatpush1.msra.mxu0 0.0
  %884 = vmatprep.subr.mxu0 0.0
  %885 = vmatpush1.msra.mxu0 0.0
  %886 = vmatprep.subr.mxu0 0.0
  %887 = vmatpush1.msra.mxu0 0.0
  %888 = vmatprep.subr.mxu0 0.0
  %889 = vmatpush1.msra.mxu0 0.0
  %890 = vmatprep.subr.mxu0 0.0
  %891 = vmatpush1.msra.mxu0 0.0
  %892 = vmatprep.subr.mxu0 0.0
  %893 = vmatpush1.msra.mxu0 0.0
  %894 = vmatprep.subr.mxu0 0.0
  %895 = vmatpush1.msra.mxu0 %v441
  %896 = vmatprep.subr.mxu0 0.0
  %897 = vmatpush1.msra.mxu0 %v440
  %898 = vmatprep.subr.mxu0 0.0
  %899 = vmatpush2.msra.mxu0 0.0
  %900 = vmatprep.subr.mxu0 0.0
  %901 = vmatpush2.msra.mxu0 0.0
  %902 = vmatprep.subr.mxu0 0.0
  %903 = vmatpush2.msra.mxu0 0.0
  %904 = vmatprep.subr.mxu0 0.0
  %905 = vmatpush2.msra.mxu0 0.0
  %906 = vmatprep.subr.mxu0 0.0
  %907 = vmatpush2.msra.mxu0 0.0
  %908 = vmatprep.subr.mxu0 0.0
  %909 = vmatpush2.msra.mxu0 0.0
  %910 = vmatprep.subr.mxu0 0.0
  %911 = vmatpush2.msra.mxu0 0.0
  %912 = vmatprep.subr.mxu0 0.0
  %913 = vmatpush2.msra.mxu0 0.0
  %914 = vmatprep.subr.mxu0 0.0
  %915 = vmatpush2.msra.mxu0 0.0
  %916 = vmatprep.subr.mxu0 0.0
  %917 = vmatpush2.msra.mxu0 0.0
  %918 = vmatprep.subr.mxu0 0.0
  %919 = vmatpush2.msra.mxu0 0.0
  %920 = vmatprep.subr.mxu0 0.0
  %921 = vmatpush2.msra.mxu0 0.0
  %922 = vmatprep.subr.mxu0 0.0
  %923 = vmatpush2.msra.mxu0 0.0
  %924 = vmatprep.subr.mxu0 0.0
  %925 = vmatpush2.msra.mxu0 0.0
  %926 = vmatprep.subr.mxu0 0.0
  %927 = vmatpush2.msra.mxu0 0.0
  %928 = vmatprep.subr.mxu0 0.0
  %929 = vmatpush2.msra.mxu0 0.0
  %930 = vmatprep.mubr.f32.mxu0 0.0
  %931 = vmatmul.mubr.f32.gmra.mxu0 %v864
  %v932 = vpop.f32.mrf.mxu0
  %v933 = vadd.f32 0.0, %v932
  %v934 = vpop.f32.mrf.mxu0
  %935 = vdwg.mxu0
  %v936 = vadd.f32 %v347, %v933
  %v937 = vxor.u32 %v936, 2147483648
  %v938 = vmul.f32 %v937, 1.442695
  %v939 = vpow.pop %v938
  %v940 = vadd.f32 %v939, 1.0
  %v941 = vrcp.pop %v940
  %v942 = vmul.f32 1.0, %v941
  %v943 = vtanh.pop %v936
  %v945 = vrot.slane %v853, 6
  %v947 = vmul.f32 %v942, %v945
  %949 = vrot.lane.b32.xlu0 %v943, 96
  %v950 = vpop.permute.xlu0 %949
  %v952 = vmul.f32 %v942, %v950
  %954 = vrot.lane.b32.xlu0 %v952, 16
  %v955 = vpop.permute.xlu0 %954
  %v957 = vadd.f32 %v947, %v955
  %v958 = vtanh.pop %v957
  %960 = vrot.lane.b32.xlu0 %v958, 32
  %v961 = vpop.permute.xlu0 %960
  %v963 = vmul.f32 %v942, %v961
  %965 = vrot.lane.b32.xlu0 %v963, 80
  %v966 = vpop.permute.xlu0 %965
  %v967 = vsel %vm268, %v966, 0
  %969 = vmatprep.subr.mxu0 0.0
  %970 = vmatpush1.msra.mxu0 0.0
  %971 = vmatprep.subr.mxu0 0.0
  %972 = vmatpush1.msra.mxu0 0.0
  %973 = vmatprep.subr.mxu0 0.0
  %974 = vmatpush1.msra.mxu0 0.0
  %975 = vmatprep.subr.mxu0 0.0
  %976 = vmatpush1.msra.mxu0 0.0
  %977 = vmatprep.subr.mxu0 0.0
  %978 = vmatpush1.msra.mxu0 0.0
  %979 = vmatprep.subr.mxu0 0.0
  %980 = vmatpush1.msra.mxu0 0.0
  %981 = vmatprep.subr.mxu0 0.0
  %982 = vmatpush1.msra.mxu0 0.0
  %983 = vmatprep.subr.mxu0 0.0
  %984 = vmatpush1.msra.mxu0 0.0
  %985 = vmatprep.subr.mxu0 0.0
  %986 = vmatpush1.msra.mxu0 0.0
  %987 = vmatprep.subr.mxu0 0.0
  %988 = vmatpush1.msra.mxu0 0.0
  %989 = vmatprep.subr.mxu0 0.0
  %990 = vmatpush1.msra.mxu0 0.0
  %991 = vmatprep.subr.mxu0 0.0
  %992 = vmatpush1.msra.mxu0 0.0
  %993 = vmatprep.subr.mxu0 0.0
  %994 = vmatpush1.msra.mxu0 0.0
  %995 = vmatprep.subr.mxu0 0.0
  %996 = vmatpush1.msra.mxu0 0.0
  %997 = vmatprep.subr.mxu0 0.0
  %998 = vmatpush1.msra.mxu0 %v441
  %999 = vmatprep.subr.mxu0 0.0
  %1000 = vmatpush1.msra.mxu0 %v440
  %1001 = vmatprep.subr.mxu0 0.0
  %1002 = vmatpush2.msra.mxu0 0.0
  %1003 = vmatprep.subr.mxu0 0.0
  %1004 = vmatpush2.msra.mxu0 0.0
  %1005 = vmatprep.subr.mxu0 0.0
  %1006 = vmatpush2.msra.mxu0 0.0
  %1007 = vmatprep.subr.mxu0 0.0
  %1008 = vmatpush2.msra.mxu0 0.0
  %1009 = vmatprep.subr.mxu0 0.0
  %1010 = vmatpush2.msra.mxu0 0.0
  %1011 = vmatprep.subr.mxu0 0.0
  %1012 = vmatpush2.msra.mxu0 0.0
  %1013 = vmatprep.subr.mxu0 0.0
  %1014 = vmatpush2.msra.mxu0 0.0
  %1015 = vmatprep.subr.mxu0 0.0
  %1016 = vmatpush2.msra.mxu0 0.0
  %1017 = vmatprep.subr.mxu0 0.0
  %1018 = vmatpush2.msra.mxu0 0.0
  %1019 = vmatprep.subr.mxu0 0.0
  %1020 = vmatpush2.msra.mxu0 0.0
  %1021 = vmatprep.subr.mxu0 0.0
  %1022 = vmatpush2.msra.mxu0 0.0
  %1023 = vmatprep.subr.mxu0 0.0
  %1024 = vmatpush2.msra.mxu0 0.0
  %1025 = vmatprep.subr.mxu0 0.0
  %1026 = vmatpush2.msra.mxu0 0.0
  %1027 = vmatprep.subr.mxu0 0.0
  %1028 = vmatpush2.msra.mxu0 0.0
  %1029 = vmatprep.subr.mxu0 0.0
  %1030 = vmatpush2.msra.mxu0 0.0
  %1031 = vmatprep.subr.mxu0 0.0
  %1032 = vmatpush2.msra.mxu0 0.0
  %1033 = vmatprep.mubr.f32.mxu0 0.0
  %1034 = vmatmul.mubr.f32.gmra.mxu0 %v967
  %v1035 = vpop.f32.mrf.mxu0
  %v1036 = vadd.f32 0.0, %v1035
  %v1037 = vpop.f32.mrf.mxu0
  %1038 = vdwg.mxu0
  %v1040 = vrot.slane %v1036, 6
  %v1042 = vadd.f32 %v347, %v1040
  %v1043 = vxor.u32 %v1042, 2147483648
  %v1044 = vmul.f32 %v1043, 1.442695
  %v1045 = vpow.pop %v1044
  %v1046 = vadd.f32 %v1045, 1.0
  %v1047 = vrcp.pop %v1046
  %v1048 = vmul.f32 1.0, %v1047
  %v1049 = vtanh.pop %v1042
  %v1051 = vrot.slane %v957, 6
  %v1053 = vmul.f32 %v1048, %v1051
  %1055 = vrot.lane.b32.xlu0 %v1049, 96
  %v1056 = vpop.permute.xlu0 %1055
  %v1058 = vmul.f32 %v1048, %v1056
  %1060 = vrot.lane.b32.xlu0 %v1058, 16
  %v1061 = vpop.permute.xlu0 %1060
  %v1063 = vadd.f32 %v1053, %v1061
  %v1064 = vtanh.pop %v1063
  %1066 = vrot.lane.b32.xlu0 %v1064, 32
  %v1067 = vpop.permute.xlu0 %1066
  %v1069 = vmul.f32 %v1048, %v1067
  %v1071 = vrot.slane %v1069, 2
  %1072 = vrot.lane.b32.xlu0 %v1071, 80
  %v1073 = vpop.permute.xlu0 %1072
  %v1074 = vsel %vm268, %v1073, 0
  %1076 = vmatprep.subr.mxu0 0.0
  %1077 = vmatpush1.msra.mxu0 0.0
  %1078 = vmatprep.subr.mxu0 0.0
  %1079 = vmatpush1.msra.mxu0 0.0
  %1080 = vmatprep.subr.mxu0 0.0
  %1081 = vmatpush1.msra.mxu0 0.0
  %1082 = vmatprep.subr.mxu0 0.0
  %1083 = vmatpush1.msra.mxu0 0.0
  %1084 = vmatprep.subr.mxu0 0.0
  %1085 = vmatpush1.msra.mxu0 0.0
  %1086 = vmatprep.subr.mxu0 0.0
  %1087 = vmatpush1.msra.mxu0 0.0
  %1088 = vmatprep.subr.mxu0 0.0
  %1089 = vmatpush1.msra.mxu0 0.0
  %1090 = vmatprep.subr.mxu0 0.0
  %1091 = vmatpush1.msra.mxu0 0.0
  %1092 = vmatprep.subr.mxu0 0.0
  %1093 = vmatpush1.msra.mxu0 0.0
  %1094 = vmatprep.subr.mxu0 0.0
  %1095 = vmatpush1.msra.mxu0 0.0
  %1096 = vmatprep.subr.mxu0 0.0
  %1097 = vmatpush1.msra.mxu0 0.0
  %1098 = vmatprep.subr.mxu0 0.0
  %1099 = vmatpush1.msra.mxu0 0.0
  %1100 = vmatprep.subr.mxu0 0.0
  %1101 = vmatpush1.msra.mxu0 0.0
  %1102 = vmatprep.subr.mxu0 0.0
  %1103 = vmatpush1.msra.mxu0 0.0
  %1104 = vmatprep.subr.mxu0 0.0
  %1105 = vmatpush1.msra.mxu0 %v441
  %1106 = vmatprep.subr.mxu0 0.0
  %1107 = vmatpush1.msra.mxu0 %v440
  %1108 = vmatprep.subr.mxu0 0.0
  %1109 = vmatpush2.msra.mxu0 0.0
  %1110 = vmatprep.subr.mxu0 0.0
  %1111 = vmatpush2.msra.mxu0 0.0
  %1112 = vmatprep.subr.mxu0 0.0
  %1113 = vmatpush2.msra.mxu0 0.0
  %1114 = vmatprep.subr.mxu0 0.0
  %1115 = vmatpush2.msra.mxu0 0.0
  %1116 = vmatprep.subr.mxu0 0.0
  %1117 = vmatpush2.msra.mxu0 0.0
  %1118 = vmatprep.subr.mxu0 0.0
  %1119 = vmatpush2.msra.mxu0 0.0
  %1120 = vmatprep.subr.mxu0 0.0
  %1121 = vmatpush2.msra.mxu0 0.0
  %1122 = vmatprep.subr.mxu0 0.0
  %1123 = vmatpush2.msra.mxu0 0.0
  %1124 = vmatprep.subr.mxu0 0.0
  %1125 = vmatpush2.msra.mxu0 0.0
  %1126 = vmatprep.subr.mxu0 0.0
  %1127 = vmatpush2.msra.mxu0 0.0
  %1128 = vmatprep.subr.mxu0 0.0
  %1129 = vmatpush2.msra.mxu0 0.0
  %1130 = vmatprep.subr.mxu0 0.0
  %1131 = vmatpush2.msra.mxu0 0.0
  %1132 = vmatprep.subr.mxu0 0.0
  %1133 = vmatpush2.msra.mxu0 0.0
  %1134 = vmatprep.subr.mxu0 0.0
  %1135 = vmatpush2.msra.mxu0 0.0
  %1136 = vmatprep.subr.mxu0 0.0
  %1137 = vmatpush2.msra.mxu0 0.0
  %1138 = vmatprep.subr.mxu0 0.0
  %1139 = vmatpush2.msra.mxu0 0.0
  %1140 = vmatprep.mubr.f32.mxu0 0.0
  %1141 = vmatmul.mubr.f32.gmra.mxu0 %v1074
  %v1142 = vpop.f32.mrf.mxu0
  %v1143 = vadd.f32 0.0, %v1142
  %v1144 = vpop.f32.mrf.mxu0
  %1145 = vdwg.mxu0
  %v1147 = vrot.slane %v1143, 4
  %v1149 = vadd.f32 %v347, %v1147
  %v1150 = vxor.u32 %v1149, 2147483648
  %v1151 = vmul.f32 %v1150, 1.442695
  %v1152 = vpow.pop %v1151
  %v1153 = vadd.f32 %v1152, 1.0
  %v1154 = vrcp.pop %v1153
  %v1155 = vmul.f32 1.0, %v1154
  %v1156 = vtanh.pop %v1149
  %v1158 = vrot.slane %v1063, 6
  %v1160 = vmul.f32 %v1155, %v1158
  %1162 = vrot.lane.b32.xlu0 %v1156, 96
  %v1163 = vpop.permute.xlu0 %1162
  %v1165 = vmul.f32 %v1155, %v1163
  %1167 = vrot.lane.b32.xlu0 %v1165, 16
  %v1168 = vpop.permute.xlu0 %1167
  %v1170 = vadd.f32 %v1160, %v1168
  %v1171 = vtanh.pop %v1170
  %1173 = vrot.lane.b32.xlu0 %v1171, 32
  %v1174 = vpop.permute.xlu0 %1173
  %v1176 = vmul.f32 %v1155, %v1174
  %v1178 = vrot.slane %v1176, 4
  %1179 = vrot.lane.b32.xlu0 %v1178, 80
  %v1180 = vpop.permute.xlu0 %1179
  %v1181 = vsel %vm268, %v1180, 0
  %1183 = vmatprep.subr.mxu0 0.0
  %1184 = vmatpush1.msra.mxu0 0.0
  %1185 = vmatprep.subr.mxu0 0.0
  %1186 = vmatpush1.msra.mxu0 0.0
  %1187 = vmatprep.subr.mxu0 0.0
  %1188 = vmatpush1.msra.mxu0 0.0
  %1189 = vmatprep.subr.mxu0 0.0
  %1190 = vmatpush1.msra.mxu0 0.0
  %1191 = vmatprep.subr.mxu0 0.0
  %1192 = vmatpush1.msra.mxu0 0.0
  %1193 = vmatprep.subr.mxu0 0.0
  %1194 = vmatpush1.msra.mxu0 0.0
  %1195 = vmatprep.subr.mxu0 0.0
  %1196 = vmatpush1.msra.mxu0 0.0
  %1197 = vmatprep.subr.mxu0 0.0
  %1198 = vmatpush1.msra.mxu0 0.0
  %1199 = vmatprep.subr.mxu0 0.0
  %1200 = vmatpush1.msra.mxu0 0.0
  %1201 = vmatprep.subr.mxu0 0.0
  %1202 = vmatpush1.msra.mxu0 0.0
  %1203 = vmatprep.subr.mxu0 0.0
  %1204 = vmatpush1.msra.mxu0 0.0
  %1205 = vmatprep.subr.mxu0 0.0
  %1206 = vmatpush1.msra.mxu0 0.0
  %1207 = vmatprep.subr.mxu0 0.0
  %1208 = vmatpush1.msra.mxu0 0.0
  %1209 = vmatprep.subr.mxu0 0.0
  %1210 = vmatpush1.msra.mxu0 0.0
  %1211 = vmatprep.subr.mxu0 0.0
  %1212 = vmatpush1.msra.mxu0 %v441
  %1213 = vmatprep.subr.mxu0 0.0
  %1214 = vmatpush1.msra.mxu0 %v440
  %1215 = vmatprep.subr.mxu0 0.0
  %1216 = vmatpush2.msra.mxu0 0.0
  %1217 = vmatprep.subr.mxu0 0.0
  %1218 = vmatpush2.msra.mxu0 0.0
  %1219 = vmatprep.subr.mxu0 0.0
  %1220 = vmatpush2.msra.mxu0 0.0
  %1221 = vmatprep.subr.mxu0 0.0
  %1222 = vmatpush2.msra.mxu0 0.0
  %1223 = vmatprep.subr.mxu0 0.0
  %1224 = vmatpush2.msra.mxu0 0.0
  %1225 = vmatprep.subr.mxu0 0.0
  %1226 = vmatpush2.msra.mxu0 0.0
  %1227 = vmatprep.subr.mxu0 0.0
  %1228 = vmatpush2.msra.mxu0 0.0
  %1229 = vmatprep.subr.mxu0 0.0
  %1230 = vmatpush2.msra.mxu0 0.0
  %1231 = vmatprep.subr.mxu0 0.0
  %1232 = vmatpush2.msra.mxu0 0.0
  %1233 = vmatprep.subr.mxu0 0.0
  %1234 = vmatpush2.msra.mxu0 0.0
  %1235 = vmatprep.subr.mxu0 0.0
  %1236 = vmatpush2.msra.mxu0 0.0
  %1237 = vmatprep.subr.mxu0 0.0
  %1238 = vmatpush2.msra.mxu0 0.0
  %1239 = vmatprep.subr.mxu0 0.0
  %1240 = vmatpush2.msra.mxu0 0.0
  %1241 = vmatprep.subr.mxu0 0.0
  %1242 = vmatpush2.msra.mxu0 0.0
  %1243 = vmatprep.subr.mxu0 0.0
  %1244 = vmatpush2.msra.mxu0 0.0
  %1245 = vmatprep.subr.mxu0 0.0
  %1246 = vmatpush2.msra.mxu0 0.0
  %1247 = vmatprep.mubr.f32.mxu0 0.0
  %1248 = vmatmul.mubr.f32.gmra.mxu0 %v1181
  %v1249 = vpop.f32.mrf.mxu0
  %v1250 = vadd.f32 0.0, %v1249
  %v1251 = vpop.f32.mrf.mxu0
  %1252 = vdwg.mxu0
  %v1254 = vrot.slane %v1250, 2
  %v1256 = vadd.f32 %v347, %v1254
  %v1257 = vxor.u32 %v1256, 2147483648
  %v1258 = vmul.f32 %v1257, 1.442695
  %v1259 = vpow.pop %v1258
  %v1260 = vadd.f32 %v1259, 1.0
  %v1261 = vrcp.pop %v1260
  %v1262 = vmul.f32 1.0, %v1261
  %v1263 = vtanh.pop %v1256
  %v1265 = vrot.slane %v1170, 6
  %v1267 = vmul.f32 %v1262, %v1265
  %1269 = vrot.lane.b32.xlu0 %v1263, 96
  %v1270 = vpop.permute.xlu0 %1269
  %v1272 = vmul.f32 %v1262, %v1270
  %1274 = vrot.lane.b32.xlu0 %v1272, 16
  %v1275 = vpop.permute.xlu0 %1274
  %v1277 = vadd.f32 %v1267, %v1275
  %v1278 = vtanh.pop %v1277
  %1280 = vrot.lane.b32.xlu0 %v1278, 32
  %v1281 = vpop.permute.xlu0 %1280
  %v1283 = vmul.f32 %v1262, %v1281
  %v1284 = vld [vmem:[%s7] sm:$0xff]
  %v1285 = vld [vmem:[%s7 + $0x8] sm:$0xff]
  %1286 = vmatprep.subr.mxu0 0.0
  %1287 = vmatpush1.msra.mxu0 0.0
  %1288 = vmatprep.subr.mxu0 0.0
  %1289 = vmatpush1.msra.mxu0 0.0
  %1290 = vmatprep.subr.mxu0 0.0
  %1291 = vmatpush1.msra.mxu0 0.0
  %1292 = vmatprep.subr.mxu0 0.0
  %1293 = vmatpush1.msra.mxu0 0.0
  %1294 = vmatprep.subr.mxu0 0.0
  %1295 = vmatpush1.msra.mxu0 0.0
  %1296 = vmatprep.subr.mxu0 0.0
  %1297 = vmatpush1.msra.mxu0 0.0
  %1298 = vmatprep.subr.mxu0 0.0
  %1299 = vmatpush1.msra.mxu0 0.0
  %1300 = vmatprep.subr.mxu0 0.0
  %1301 = vmatpush1.msra.mxu0 0.0
  %1302 = vmatprep.subr.mxu0 0.0
  %1303 = vmatpush1.msra.mxu0 0.0
  %1304 = vmatprep.subr.mxu0 0.0
  %1305 = vmatpush1.msra.mxu0 0.0
  %1306 = vmatprep.subr.mxu0 0.0
  %1307 = vmatpush1.msra.mxu0 0.0
  %1308 = vmatprep.subr.mxu0 0.0
  %1309 = vmatpush1.msra.mxu0 0.0
  %1310 = vmatprep.subr.mxu0 0.0
  %1311 = vmatpush1.msra.mxu0 0.0
  %1312 = vmatprep.subr.mxu0 0.0
  %1313 = vmatpush1.msra.mxu0 0.0
  %1314 = vmatprep.subr.mxu0 0.0
  %1315 = vmatpush1.msra.mxu0 %v1285
  %1316 = vmatprep.subr.mxu0 0.0
  %1317 = vmatpush1.msra.mxu0 %v1284
  %1318 = vmatprep.subr.mxu0 0.0
  %1319 = vmatpush2.msra.mxu0 0.0
  %1320 = vmatprep.subr.mxu0 0.0
  %1321 = vmatpush2.msra.mxu0 0.0
  %1322 = vmatprep.subr.mxu0 0.0
  %1323 = vmatpush2.msra.mxu0 0.0
  %1324 = vmatprep.subr.mxu0 0.0
  %1325 = vmatpush2.msra.mxu0 0.0
  %1326 = vmatprep.subr.mxu0 0.0
  %1327 = vmatpush2.msra.mxu0 0.0
  %1328 = vmatprep.subr.mxu0 0.0
  %1329 = vmatpush2.msra.mxu0 0.0
  %1330 = vmatprep.subr.mxu0 0.0
  %1331 = vmatpush2.msra.mxu0 0.0
  %1332 = vmatprep.subr.mxu0 0.0
  %1333 = vmatpush2.msra.mxu0 0.0
  %1334 = vmatprep.subr.mxu0 0.0
  %1335 = vmatpush2.msra.mxu0 0.0
  %1336 = vmatprep.subr.mxu0 0.0
  %1337 = vmatpush2.msra.mxu0 0.0
  %1338 = vmatprep.subr.mxu0 0.0
  %1339 = vmatpush2.msra.mxu0 0.0
  %1340 = vmatprep.subr.mxu0 0.0
  %1341 = vmatpush2.msra.mxu0 0.0
  %1342 = vmatprep.subr.mxu0 0.0
  %1343 = vmatpush2.msra.mxu0 0.0
  %1344 = vmatprep.subr.mxu0 0.0
  %1345 = vmatpush2.msra.mxu0 0.0
  %1346 = vmatprep.subr.mxu0 0.0
  %1347 = vmatpush2.msra.mxu0 0.0
  %1348 = vmatprep.subr.mxu0 0.0
  %1349 = vmatpush2.msra.mxu0 0.0
  %1350 = vmatprep.mubr.f32.mxu0 0.0
  %1351 = vmatmul.mubr.f32.gmra.mxu0 %v443
  %v1352 = vpop.f32.mrf.mxu0
  %v1353 = vadd.f32 0.0, %v1352
  %v1354 = vpop.f32.mrf.mxu0
  %1355 = vdwg.mxu0
  %v1357 = vrot.slane %v1353, 2
  %1358 = vrot.lane.b32.xlu0 %v1357, 64
  %v1359 = vpop.permute.xlu0 %1358
  %v1361 = vadd.f32 %v347, %v1359
  %v1362 = vxor.u32 %v1361, 2147483648
  %v1363 = vmul.f32 %v1362, 1.442695
  %v1364 = vpow.pop %v1363
  %v1365 = vadd.f32 %v1364, 1.0
  %v1366 = vrcp.pop %v1365
  %v1367 = vmul.f32 1.0, %v1366
  %v1368 = vtanh.pop %v1361
  %v1369 = vmul.f32 %v1367, 0.0
  %1371 = vrot.lane.b32.xlu0 %v1368, 96
  %v1372 = vpop.permute.xlu0 %1371
  %v1374 = vmul.f32 %v1367, %v1372
  %1376 = vrot.lane.b32.xlu0 %v1374, 16
  %v1377 = vpop.permute.xlu0 %1376
  %v1379 = vadd.f32 %v1369, %v1377
  %v1380 = vtanh.pop %v1379
  %1382 = vrot.lane.b32.xlu0 %v1380, 32
  %v1383 = vpop.permute.xlu0 %1382
  %v1385 = vmul.f32 %v1367, %v1383
  %v1387 = vrot.slane %v1385, 6
  %1388 = vrot.lane.b32.xlu0 %v1387, 16
  %v1389 = vpop.permute.xlu0 %1388
  %v1390 = vsel %vm268, %v1389, 0
  %1392 = vmatprep.subr.mxu0 0.0
  %1393 = vmatpush1.msra.mxu0 0.0
  %1394 = vmatprep.subr.mxu0 0.0
  %1395 = vmatpush1.msra.mxu0 0.0
  %1396 = vmatprep.subr.mxu0 0.0
  %1397 = vmatpush1.msra.mxu0 0.0
  %1398 = vmatprep.subr.mxu0 0.0
  %1399 = vmatpush1.msra.mxu0 0.0
  %1400 = vmatprep.subr.mxu0 0.0
  %1401 = vmatpush1.msra.mxu0 0.0
  %1402 = vmatprep.subr.mxu0 0.0
  %1403 = vmatpush1.msra.mxu0 0.0
  %1404 = vmatprep.subr.mxu0 0.0
  %1405 = vmatpush1.msra.mxu0 0.0
  %1406 = vmatprep.subr.mxu0 0.0
  %1407 = vmatpush1.msra.mxu0 0.0
  %1408 = vmatprep.subr.mxu0 0.0
  %1409 = vmatpush1.msra.mxu0 0.0
  %1410 = vmatprep.subr.mxu0 0.0
  %1411 = vmatpush1.msra.mxu0 0.0
  %1412 = vmatprep.subr.mxu0 0.0
  %1413 = vmatpush1.msra.mxu0 0.0
  %1414 = vmatprep.subr.mxu0 0.0
  %1415 = vmatpush1.msra.mxu0 0.0
  %1416 = vmatprep.subr.mxu0 0.0
  %1417 = vmatpush1.msra.mxu0 0.0
  %1418 = vmatprep.subr.mxu0 0.0
  %1419 = vmatpush1.msra.mxu0 0.0
  %1420 = vmatprep.subr.mxu0 0.0
  %1421 = vmatpush1.msra.mxu0 %v1285
  %1422 = vmatprep.subr.mxu0 0.0
  %1423 = vmatpush1.msra.mxu0 %v1284
  %1424 = vmatprep.subr.mxu0 0.0
  %1425 = vmatpush2.msra.mxu0 0.0
  %1426 = vmatprep.subr.mxu0 0.0
  %1427 = vmatpush2.msra.mxu0 0.0
  %1428 = vmatprep.subr.mxu0 0.0
  %1429 = vmatpush2.msra.mxu0 0.0
  %1430 = vmatprep.subr.mxu0 0.0
  %1431 = vmatpush2.msra.mxu0 0.0
  %1432 = vmatprep.subr.mxu0 0.0
  %1433 = vmatpush2.msra.mxu0 0.0
  %1434 = vmatprep.subr.mxu0 0.0
  %1435 = vmatpush2.msra.mxu0 0.0
  %1436 = vmatprep.subr.mxu0 0.0
  %1437 = vmatpush2.msra.mxu0 0.0
  %1438 = vmatprep.subr.mxu0 0.0
  %1439 = vmatpush2.msra.mxu0 0.0
  %1440 = vmatprep.subr.mxu0 0.0
  %1441 = vmatpush2.msra.mxu0 0.0
  %1442 = vmatprep.subr.mxu0 0.0
  %1443 = vmatpush2.msra.mxu0 0.0
  %1444 = vmatprep.subr.mxu0 0.0
  %1445 = vmatpush2.msra.mxu0 0.0
  %1446 = vmatprep.subr.mxu0 0.0
  %1447 = vmatpush2.msra.mxu0 0.0
  %1448 = vmatprep.subr.mxu0 0.0
  %1449 = vmatpush2.msra.mxu0 0.0
  %1450 = vmatprep.subr.mxu0 0.0
  %1451 = vmatpush2.msra.mxu0 0.0
  %1452 = vmatprep.subr.mxu0 0.0
  %1453 = vmatpush2.msra.mxu0 0.0
  %1454 = vmatprep.subr.mxu0 0.0
  %1455 = vmatpush2.msra.mxu0 0.0
  %1456 = vmatprep.mubr.f32.mxu0 0.0
  %1457 = vmatmul.mubr.f32.gmra.mxu0 %v1390
  %v1458 = vpop.f32.mrf.mxu0
  %v1459 = vadd.f32 0.0, %v1458
  %v1460 = vpop.f32.mrf.mxu0
  %1461 = vdwg.mxu0
  %v1463 = vrot.slane %v1459, 4
  %1464 = vrot.lane.b32.xlu0 %v1463, 64
  %v1465 = vpop.permute.xlu0 %1464
  %v1467 = vadd.f32 %v347, %v1465
  %v1468 = vxor.u32 %v1467, 2147483648
  %v1469 = vmul.f32 %v1468, 1.442695
  %v1470 = vpow.pop %v1469
  %v1471 = vadd.f32 %v1470, 1.0
  %v1472 = vrcp.pop %v1471
  %v1473 = vmul.f32 1.0, %v1472
  %v1474 = vtanh.pop %v1467
  %v1476 = vrot.slane %v1379, 2
  %v1478 = vmul.f32 %v1473, %v1476
  %1480 = vrot.lane.b32.xlu0 %v1474, 96
  %v1481 = vpop.permute.xlu0 %1480
  %v1483 = vmul.f32 %v1473, %v1481
  %1485 = vrot.lane.b32.xlu0 %v1483, 16
  %v1486 = vpop.permute.xlu0 %1485
  %v1488 = vadd.f32 %v1478, %v1486
  %v1489 = vtanh.pop %v1488
  %1491 = vrot.lane.b32.xlu0 %v1489, 32
  %v1492 = vpop.permute.xlu0 %1491
  %v1494 = vmul.f32 %v1473, %v1492
  %v1496 = vrot.slane %v1494, 4
  %1497 = vrot.lane.b32.xlu0 %v1496, 16
  %v1498 = vpop.permute.xlu0 %1497
  %v1499 = vsel %vm268, %v1498, 0
  %1501 = vmatprep.subr.mxu0 0.0
  %1502 = vmatpush1.msra.mxu0 0.0
  %1503 = vmatprep.subr.mxu0 0.0
  %1504 = vmatpush1.msra.mxu0 0.0
  %1505 = vmatprep.subr.mxu0 0.0
  %1506 = vmatpush1.msra.mxu0 0.0
  %1507 = vmatprep.subr.mxu0 0.0
  %1508 = vmatpush1.msra.mxu0 0.0
  %1509 = vmatprep.subr.mxu0 0.0
  %1510 = vmatpush1.msra.mxu0 0.0
  %1511 = vmatprep.subr.mxu0 0.0
  %1512 = vmatpush1.msra.mxu0 0.0
  %1513 = vmatprep.subr.mxu0 0.0
  %1514 = vmatpush1.msra.mxu0 0.0
  %1515 = vmatprep.subr.mxu0 0.0
  %1516 = vmatpush1.msra.mxu0 0.0
  %1517 = vmatprep.subr.mxu0 0.0
  %1518 = vmatpush1.msra.mxu0 0.0
  %1519 = vmatprep.subr.mxu0 0.0
  %1520 = vmatpush1.msra.mxu0 0.0
  %1521 = vmatprep.subr.mxu0 0.0
  %1522 = vmatpush1.msra.mxu0 0.0
  %1523 = vmatprep.subr.mxu0 0.0
  %1524 = vmatpush1.msra.mxu0 0.0
  %1525 = vmatprep.subr.mxu0 0.0
  %1526 = vmatpush1.msra.mxu0 0.0
  %1527 = vmatprep.subr.mxu0 0.0
  %1528 = vmatpush1.msra.mxu0 0.0
  %1529 = vmatprep.subr.mxu0 0.0
  %1530 = vmatpush1.msra.mxu0 %v1285
  %1531 = vmatprep.subr.mxu0 0.0
  %1532 = vmatpush1.msra.mxu0 %v1284
  %1533 = vmatprep.subr.mxu0 0.0
  %1534 = vmatpush2.msra.mxu0 0.0
  %1535 = vmatprep.subr.mxu0 0.0
  %1536 = vmatpush2.msra.mxu0 0.0
  %1537 = vmatprep.subr.mxu0 0.0
  %1538 = vmatpush2.msra.mxu0 0.0
  %1539 = vmatprep.subr.mxu0 0.0
  %1540 = vmatpush2.msra.mxu0 0.0
  %1541 = vmatprep.subr.mxu0 0.0
  %1542 = vmatpush2.msra.mxu0 0.0
  %1543 = vmatprep.subr.mxu0 0.0
  %1544 = vmatpush2.msra.mxu0 0.0
  %1545 = vmatprep.subr.mxu0 0.0
  %1546 = vmatpush2.msra.mxu0 0.0
  %1547 = vmatprep.subr.mxu0 0.0
  %1548 = vmatpush2.msra.mxu0 0.0
  %1549 = vmatprep.subr.mxu0 0.0
  %1550 = vmatpush2.msra.mxu0 0.0
  %1551 = vmatprep.subr.mxu0 0.0
  %1552 = vmatpush2.msra.mxu0 0.0
  %1553 = vmatprep.subr.mxu0 0.0
  %1554 = vmatpush2.msra.mxu0 0.0
  %1555 = vmatprep.subr.mxu0 0.0
  %1556 = vmatpush2.msra.mxu0 0.0
  %1557 = vmatprep.subr.mxu0 0.0
  %1558 = vmatpush2.msra.mxu0 0.0
  %1559 = vmatprep.subr.mxu0 0.0
  %1560 = vmatpush2.msra.mxu0 0.0
  %1561 = vmatprep.subr.mxu0 0.0
  %1562 = vmatpush2.msra.mxu0 0.0
  %1563 = vmatprep.subr.mxu0 0.0
  %1564 = vmatpush2.msra.mxu0 0.0
  %1565 = vmatprep.mubr.f32.mxu0 0.0
  %1566 = vmatmul.mubr.f32.gmra.mxu0 %v1499
  %v1567 = vpop.f32.mrf.mxu0
  %v1568 = vadd.f32 0.0, %v1567
  %v1569 = vpop.f32.mrf.mxu0
  %1570 = vdwg.mxu0
  %v1572 = vrot.slane %v1568, 6
  %1573 = vrot.lane.b32.xlu0 %v1572, 64
  %v1574 = vpop.permute.xlu0 %1573
  %v1576 = vadd.f32 %v347, %v1574
  %v1577 = vxor.u32 %v1576, 2147483648
  %v1578 = vmul.f32 %v1577, 1.442695
  %v1579 = vpow.pop %v1578
  %v1580 = vadd.f32 %v1579, 1.0
  %v1581 = vrcp.pop %v1580
  %v1582 = vmul.f32 1.0, %v1581
  %v1583 = vtanh.pop %v1576
  %v1585 = vrot.slane %v1488, 2
  %v1587 = vmul.f32 %v1582, %v1585
  %1589 = vrot.lane.b32.xlu0 %v1583, 96
  %v1590 = vpop.permute.xlu0 %1589
  %v1592 = vmul.f32 %v1582, %v1590
  %1594 = vrot.lane.b32.xlu0 %v1592, 16
  %v1595 = vpop.permute.xlu0 %1594
  %v1597 = vadd.f32 %v1587, %v1595
  %v1598 = vtanh.pop %v1597
  %1600 = vrot.lane.b32.xlu0 %v1598, 32
  %v1601 = vpop.permute.xlu0 %1600
  %v1603 = vmul.f32 %v1582, %v1601
  %v1605 = vrot.slane %v1603, 2
  %1606 = vrot.lane.b32.xlu0 %v1605, 16
  %v1607 = vpop.permute.xlu0 %1606
  %v1608 = vsel %vm268, %v1607, 0
  %1610 = vmatprep.subr.mxu0 0.0
  %1611 = vmatpush1.msra.mxu0 0.0
  %1612 = vmatprep.subr.mxu0 0.0
  %1613 = vmatpush1.msra.mxu0 0.0
  %1614 = vmatprep.subr.mxu0 0.0
  %1615 = vmatpush1.msra.mxu0 0.0
  %1616 = vmatprep.subr.mxu0 0.0
  %1617 = vmatpush1.msra.mxu0 0.0
  %1618 = vmatprep.subr.mxu0 0.0
  %1619 = vmatpush1.msra.mxu0 0.0
  %1620 = vmatprep.subr.mxu0 0.0
  %1621 = vmatpush1.msra.mxu0 0.0
  %1622 = vmatprep.subr.mxu0 0.0
  %1623 = vmatpush1.msra.mxu0 0.0
  %1624 = vmatprep.subr.mxu0 0.0
  %1625 = vmatpush1.msra.mxu0 0.0
  %1626 = vmatprep.subr.mxu0 0.0
  %1627 = vmatpush1.msra.mxu0 0.0
  %1628 = vmatprep.subr.mxu0 0.0
  %1629 = vmatpush1.msra.mxu0 0.0
  %1630 = vmatprep.subr.mxu0 0.0
  %1631 = vmatpush1.msra.mxu0 0.0
  %1632 = vmatprep.subr.mxu0 0.0
  %1633 = vmatpush1.msra.mxu0 0.0
  %1634 = vmatprep.subr.mxu0 0.0
  %1635 = vmatpush1.msra.mxu0 0.0
  %1636 = vmatprep.subr.mxu0 0.0
  %1637 = vmatpush1.msra.mxu0 0.0
  %1638 = vmatprep.subr.mxu0 0.0
  %1639 = vmatpush1.msra.mxu0 %v1285
  %1640 = vmatprep.subr.mxu0 0.0
  %1641 = vmatpush1.msra.mxu0 %v1284
  %1642 = vmatprep.subr.mxu0 0.0
  %1643 = vmatpush2.msra.mxu0 0.0
  %1644 = vmatprep.subr.mxu0 0.0
  %1645 = vmatpush2.msra.mxu0 0.0
  %1646 = vmatprep.subr.mxu0 0.0
  %1647 = vmatpush2.msra.mxu0 0.0
  %1648 = vmatprep.subr.mxu0 0.0
  %1649 = vmatpush2.msra.mxu0 0.0
  %1650 = vmatprep.subr.mxu0 0.0
  %1651 = vmatpush2.msra.mxu0 0.0
  %1652 = vmatprep.subr.mxu0 0.0
  %1653 = vmatpush2.msra.mxu0 0.0
  %1654 = vmatprep.subr.mxu0 0.0
  %1655 = vmatpush2.msra.mxu0 0.0
  %1656 = vmatprep.subr.mxu0 0.0
  %1657 = vmatpush2.msra.mxu0 0.0
  %1658 = vmatprep.subr.mxu0 0.0
  %1659 = vmatpush2.msra.mxu0 0.0
  %1660 = vmatprep.subr.mxu0 0.0
  %1661 = vmatpush2.msra.mxu0 0.0
  %1662 = vmatprep.subr.mxu0 0.0
  %1663 = vmatpush2.msra.mxu0 0.0
  %1664 = vmatprep.subr.mxu0 0.0
  %1665 = vmatpush2.msra.mxu0 0.0
  %1666 = vmatprep.subr.mxu0 0.0
  %1667 = vmatpush2.msra.mxu0 0.0
  %1668 = vmatprep.subr.mxu0 0.0
  %1669 = vmatpush2.msra.mxu0 0.0
  %1670 = vmatprep.subr.mxu0 0.0
  %1671 = vmatpush2.msra.mxu0 0.0
  %1672 = vmatprep.subr.mxu0 0.0
  %1673 = vmatpush2.msra.mxu0 0.0
  %1674 = vmatprep.mubr.f32.mxu0 0.0
  %1675 = vmatmul.mubr.f32.gmra.mxu0 %v1608
  %v1676 = vpop.f32.mrf.mxu0
  %v1677 = vadd.f32 0.0, %v1676
  %v1678 = vpop.f32.mrf.mxu0
  %1679 = vdwg.mxu0
  %1681 = vrot.lane.b32.xlu0 %v1677, 64
  %v1682 = vpop.permute.xlu0 %1681
  %v1684 = vadd.f32 %v347, %v1682
  %v1685 = vxor.u32 %v1684, 2147483648
  %v1686 = vmul.f32 %v1685, 1.442695
  %v1687 = vpow.pop %v1686
  %v1688 = vadd.f32 %v1687, 1.0
  %v1689 = vrcp.pop %v1688
  %v1690 = vmul.f32 1.0, %v1689
  %v1691 = vtanh.pop %v1684
  %v1693 = vrot.slane %v1597, 2
  %v1695 = vmul.f32 %v1690, %v1693
  %1697 = vrot.lane.b32.xlu0 %v1691, 96
  %v1698 = vpop.permute.xlu0 %1697
  %v1700 = vmul.f32 %v1690, %v1698
  %1702 = vrot.lane.b32.xlu0 %v1700, 16
  %v1703 = vpop.permute.xlu0 %1702
  %v1705 = vadd.f32 %v1695, %v1703
  %v1706 = vtanh.pop %v1705
  %1708 = vrot.lane.b32.xlu0 %v1706, 32
  %v1709 = vpop.permute.xlu0 %1708
  %v1711 = vmul.f32 %v1690, %v1709
  %1713 = vrot.lane.b32.xlu0 %v1711, 16
  %v1714 = vpop.permute.xlu0 %1713
  %v1715 = vsel %vm268, %v1714, 0
  %1717 = vmatprep.subr.mxu0 0.0
  %1718 = vmatpush1.msra.mxu0 0.0
  %1719 = vmatprep.subr.mxu0 0.0
  %1720 = vmatpush1.msra.mxu0 0.0
  %1721 = vmatprep.subr.mxu0 0.0
  %1722 = vmatpush1.msra.mxu0 0.0
  %1723 = vmatprep.subr.mxu0 0.0
  %1724 = vmatpush1.msra.mxu0 0.0
  %1725 = vmatprep.subr.mxu0 0.0
  %1726 = vmatpush1.msra.mxu0 0.0
  %1727 = vmatprep.subr.mxu0 0.0
  %1728 = vmatpush1.msra.mxu0 0.0
  %1729 = vmatprep.subr.mxu0 0.0
  %1730 = vmatpush1.msra.mxu0 0.0
  %1731 = vmatprep.subr.mxu0 0.0
  %1732 = vmatpush1.msra.mxu0 0.0
  %1733 = vmatprep.subr.mxu0 0.0
  %1734 = vmatpush1.msra.mxu0 0.0
  %1735 = vmatprep.subr.mxu0 0.0
  %1736 = vmatpush1.msra.mxu0 0.0
  %1737 = vmatprep.subr.mxu0 0.0
  %1738 = vmatpush1.msra.mxu0 0.0
  %1739 = vmatprep.subr.mxu0 0.0
  %1740 = vmatpush1.msra.mxu0 0.0
  %1741 = vmatprep.subr.mxu0 0.0
  %1742 = vmatpush1.msra.mxu0 0.0
  %1743 = vmatprep.subr.mxu0 0.0
  %1744 = vmatpush1.msra.mxu0 0.0
  %1745 = vmatprep.subr.mxu0 0.0
  %1746 = vmatpush1.msra.mxu0 %v1285
  %1747 = vmatprep.subr.mxu0 0.0
  %1748 = vmatpush1.msra.mxu0 %v1284
  %1749 = vmatprep.subr.mxu0 0.0
  %1750 = vmatpush2.msra.mxu0 0.0
  %1751 = vmatprep.subr.mxu0 0.0
  %1752 = vmatpush2.msra.mxu0 0.0
  %1753 = vmatprep.subr.mxu0 0.0
  %1754 = vmatpush2.msra.mxu0 0.0
  %1755 = vmatprep.subr.mxu0 0.0
  %1756 = vmatpush2.msra.mxu0 0.0
  %1757 = vmatprep.subr.mxu0 0.0
  %1758 = vmatpush2.msra.mxu0 0.0
  %1759 = vmatprep.subr.mxu0 0.0
  %1760 = vmatpush2.msra.mxu0 0.0
  %1761 = vmatprep.subr.mxu0 0.0
  %1762 = vmatpush2.msra.mxu0 0.0
  %1763 = vmatprep.subr.mxu0 0.0
  %1764 = vmatpush2.msra.mxu0 0.0
  %1765 = vmatprep.subr.mxu0 0.0
  %1766 = vmatpush2.msra.mxu0 0.0
  %1767 = vmatprep.subr.mxu0 0.0
  %1768 = vmatpush2.msra.mxu0 0.0
  %1769 = vmatprep.subr.mxu0 0.0
  %1770 = vmatpush2.msra.mxu0 0.0
  %1771 = vmatprep.subr.mxu0 0.0
  %1772 = vmatpush2.msra.mxu0 0.0
  %1773 = vmatprep.subr.mxu0 0.0
  %1774 = vmatpush2.msra.mxu0 0.0
  %1775 = vmatprep.subr.mxu0 0.0
  %1776 = vmatpush2.msra.mxu0 0.0
  %1777 = vmatprep.subr.mxu0 0.0
  %1778 = vmatpush2.msra.mxu0 0.0
  %1779 = vmatprep.subr.mxu0 0.0
  %1780 = vmatpush2.msra.mxu0 0.0
  %1781 = vmatprep.mubr.f32.mxu0 0.0
  %1782 = vmatmul.mubr.f32.gmra.mxu0 %v1715
  %v1783 = vpop.f32.mrf.mxu0
  %v1784 = vadd.f32 0.0, %v1783
  %v1785 = vpop.f32.mrf.mxu0
  %1786 = vdwg.mxu0
  %v1788 = vrot.slane %v1784, 2
  %1789 = vrot.lane.b32.xlu0 %v1788, 64
  %v1790 = vpop.permute.xlu0 %1789
  %v1792 = vadd.f32 %v342, %v1790
  %v1793 = vxor.u32 %v1792, 2147483648
  %v1794 = vmul.f32 %v1793, 1.442695
  %v1795 = vpow.pop %v1794
  %v1796 = vadd.f32 %v1795, 1.0
  %v1797 = vrcp.pop %v1796
  %v1798 = vmul.f32 1.0, %v1797
  %v1799 = vtanh.pop %v1792
  %v1801 = vrot.slane %v1705, 2
  %v1803 = vmul.f32 %v1798, %v1801
  %1805 = vrot.lane.b32.xlu0 %v1799, 96
  %v1806 = vpop.permute.xlu0 %1805
  %v1808 = vmul.f32 %v1798, %v1806
  %1810 = vrot.lane.b32.xlu0 %v1808, 16
  %v1811 = vpop.permute.xlu0 %1810
  %v1813 = vadd.f32 %v1803, %v1811
  %v1814 = vtanh.pop %v1813
  %1816 = vrot.lane.b32.xlu0 %v1814, 32
  %v1817 = vpop.permute.xlu0 %1816
  %v1819 = vmul.f32 %v1798, %v1817
  %v1821 = vrot.slane %v1819, 6
  %1822 = vrot.lane.b32.xlu0 %v1821, 16
  %v1823 = vpop.permute.xlu0 %1822
  %v1824 = vsel %vm268, %v1823, 0
  %1826 = vmatprep.subr.mxu0 0.0
  %1827 = vmatpush1.msra.mxu0 0.0
  %1828 = vmatprep.subr.mxu0 0.0
  %1829 = vmatpush1.msra.mxu0 0.0
  %1830 = vmatprep.subr.mxu0 0.0
  %1831 = vmatpush1.msra.mxu0 0.0
  %1832 = vmatprep.subr.mxu0 0.0
  %1833 = vmatpush1.msra.mxu0 0.0
  %1834 = vmatprep.subr.mxu0 0.0
  %1835 = vmatpush1.msra.mxu0 0.0
  %1836 = vmatprep.subr.mxu0 0.0
  %1837 = vmatpush1.msra.mxu0 0.0
  %1838 = vmatprep.subr.mxu0 0.0
  %1839 = vmatpush1.msra.mxu0 0.0
  %1840 = vmatprep.subr.mxu0 0.0
  %1841 = vmatpush1.msra.mxu0 0.0
  %1842 = vmatprep.subr.mxu0 0.0
  %1843 = vmatpush1.msra.mxu0 0.0
  %1844 = vmatprep.subr.mxu0 0.0
  %1845 = vmatpush1.msra.mxu0 0.0
  %1846 = vmatprep.subr.mxu0 0.0
  %1847 = vmatpush1.msra.mxu0 0.0
  %1848 = vmatprep.subr.mxu0 0.0
  %1849 = vmatpush1.msra.mxu0 0.0
  %1850 = vmatprep.subr.mxu0 0.0
  %1851 = vmatpush1.msra.mxu0 0.0
  %1852 = vmatprep.subr.mxu0 0.0
  %1853 = vmatpush1.msra.mxu0 0.0
  %1854 = vmatprep.subr.mxu0 0.0
  %1855 = vmatpush1.msra.mxu0 %v1285
  %1856 = vmatprep.subr.mxu0 0.0
  %1857 = vmatpush1.msra.mxu0 %v1284
  %1858 = vmatprep.subr.mxu0 0.0
  %1859 = vmatpush2.msra.mxu0 0.0
  %1860 = vmatprep.subr.mxu0 0.0
  %1861 = vmatpush2.msra.mxu0 0.0
  %1862 = vmatprep.subr.mxu0 0.0
  %1863 = vmatpush2.msra.mxu0 0.0
  %1864 = vmatprep.subr.mxu0 0.0
  %1865 = vmatpush2.msra.mxu0 0.0
  %1866 = vmatprep.subr.mxu0 0.0
  %1867 = vmatpush2.msra.mxu0 0.0
  %1868 = vmatprep.subr.mxu0 0.0
  %1869 = vmatpush2.msra.mxu0 0.0
  %1870 = vmatprep.subr.mxu0 0.0
  %1871 = vmatpush2.msra.mxu0 0.0
  %1872 = vmatprep.subr.mxu0 0.0
  %1873 = vmatpush2.msra.mxu0 0.0
  %1874 = vmatprep.subr.mxu0 0.0
  %1875 = vmatpush2.msra.mxu0 0.0
  %1876 = vmatprep.subr.mxu0 0.0
  %1877 = vmatpush2.msra.mxu0 0.0
  %1878 = vmatprep.subr.mxu0 0.0
  %1879 = vmatpush2.msra.mxu0 0.0
  %1880 = vmatprep.subr.mxu0 0.0
  %1881 = vmatpush2.msra.mxu0 0.0
  %1882 = vmatprep.subr.mxu0 0.0
  %1883 = vmatpush2.msra.mxu0 0.0
  %1884 = vmatprep.subr.mxu0 0.0
  %1885 = vmatpush2.msra.mxu0 0.0
  %1886 = vmatprep.subr.mxu0 0.0
  %1887 = vmatpush2.msra.mxu0 0.0
  %1888 = vmatprep.subr.mxu0 0.0
  %1889 = vmatpush2.msra.mxu0 0.0
  %1890 = vmatprep.mubr.f32.mxu0 0.0
  %1891 = vmatmul.mubr.f32.gmra.mxu0 %v1824
  %v1892 = vpop.f32.mrf.mxu0
  %v1893 = vadd.f32 0.0, %v1892
  %v1894 = vpop.f32.mrf.mxu0
  %1895 = vdwg.mxu0
  %v1897 = vrot.slane %v1893, 4
  %1898 = vrot.lane.b32.xlu0 %v1897, 64
  %v1899 = vpop.permute.xlu0 %1898
  %v1901 = vadd.f32 %v342, %v1899
  %v1902 = vxor.u32 %v1901, 2147483648
  %v1903 = vmul.f32 %v1902, 1.442695
  %v1904 = vpow.pop %v1903
  %v1905 = vadd.f32 %v1904, 1.0
  %v1906 = vrcp.pop %v1905
  %v1907 = vmul.f32 1.0, %v1906
  %v1908 = vtanh.pop %v1901
  %v1910 = vrot.slane %v1813, 2
  %v1912 = vmul.f32 %v1907, %v1910
  %1914 = vrot.lane.b32.xlu0 %v1908, 96
  %v1915 = vpop.permute.xlu0 %1914
  %v1917 = vmul.f32 %v1907, %v1915
  %1919 = vrot.lane.b32.xlu0 %v1917, 16
  %v1920 = vpop.permute.xlu0 %1919
  %v1922 = vadd.f32 %v1912, %v1920
  %v1923 = vtanh.pop %v1922
  %1925 = vrot.lane.b32.xlu0 %v1923, 32
  %v1926 = vpop.permute.xlu0 %1925
  %v1928 = vmul.f32 %v1907, %v1926
  %v1930 = vrot.slane %v1928, 4
  %1931 = vrot.lane.b32.xlu0 %v1930, 16
  %v1932 = vpop.permute.xlu0 %1931
  %v1933 = vsel %vm268, %v1932, 0
  %1935 = vmatprep.subr.mxu0 0.0
  %1936 = vmatpush1.msra.mxu0 0.0
  %1937 = vmatprep.subr.mxu0 0.0
  %1938 = vmatpush1.msra.mxu0 0.0
  %1939 = vmatprep.subr.mxu0 0.0
  %1940 = vmatpush1.msra.mxu0 0.0
  %1941 = vmatprep.subr.mxu0 0.0
  %1942 = vmatpush1.msra.mxu0 0.0
  %1943 = vmatprep.subr.mxu0 0.0
  %1944 = vmatpush1.msra.mxu0 0.0
  %1945 = vmatprep.subr.mxu0 0.0
  %1946 = vmatpush1.msra.mxu0 0.0
  %1947 = vmatprep.subr.mxu0 0.0
  %1948 = vmatpush1.msra.mxu0 0.0
  %1949 = vmatprep.subr.mxu0 0.0
  %1950 = vmatpush1.msra.mxu0 0.0
  %1951 = vmatprep.subr.mxu0 0.0
  %1952 = vmatpush1.msra.mxu0 0.0
  %1953 = vmatprep.subr.mxu0 0.0
  %1954 = vmatpush1.msra.mxu0 0.0
  %1955 = vmatprep.subr.mxu0 0.0
  %1956 = vmatpush1.msra.mxu0 0.0
  %1957 = vmatprep.subr.mxu0 0.0
  %1958 = vmatpush1.msra.mxu0 0.0
  %1959 = vmatprep.subr.mxu0 0.0
  %1960 = vmatpush1.msra.mxu0 0.0
  %1961 = vmatprep.subr.mxu0 0.0
  %1962 = vmatpush1.msra.mxu0 0.0
  %1963 = vmatprep.subr.mxu0 0.0
  %1964 = vmatpush1.msra.mxu0 %v1285
  %1965 = vmatprep.subr.mxu0 0.0
  %1966 = vmatpush1.msra.mxu0 %v1284
  %1967 = vmatprep.subr.mxu0 0.0
  %1968 = vmatpush2.msra.mxu0 0.0
  %1969 = vmatprep.subr.mxu0 0.0
  %1970 = vmatpush2.msra.mxu0 0.0
  %1971 = vmatprep.subr.mxu0 0.0
  %1972 = vmatpush2.msra.mxu0 0.0
  %1973 = vmatprep.subr.mxu0 0.0
  %1974 = vmatpush2.msra.mxu0 0.0
  %1975 = vmatprep.subr.mxu0 0.0
  %1976 = vmatpush2.msra.mxu0 0.0
  %1977 = vmatprep.subr.mxu0 0.0
  %1978 = vmatpush2.msra.mxu0 0.0
  %1979 = vmatprep.subr.mxu0 0.0
  %1980 = vmatpush2.msra.mxu0 0.0
  %1981 = vmatprep.subr.mxu0 0.0
  %1982 = vmatpush2.msra.mxu0 0.0
  %1983 = vmatprep.subr.mxu0 0.0
  %1984 = vmatpush2.msra.mxu0 0.0
  %1985 = vmatprep.subr.mxu0 0.0
  %1986 = vmatpush2.msra.mxu0 0.0
  %1987 = vmatprep.subr.mxu0 0.0
  %1988 = vmatpush2.msra.mxu0 0.0
  %1989 = vmatprep.subr.mxu0 0.0
  %1990 = vmatpush2.msra.mxu0 0.0
  %1991 = vmatprep.subr.mxu0 0.0
  %1992 = vmatpush2.msra.mxu0 0.0
  %1993 = vmatprep.subr.mxu0 0.0
  %1994 = vmatpush2.msra.mxu0 0.0
  %1995 = vmatprep.subr.mxu0 0.0
  %1996 = vmatpush2.msra.mxu0 0.0
  %1997 = vmatprep.subr.mxu0 0.0
  %1998 = vmatpush2.msra.mxu0 0.0
  %1999 = vmatprep.mubr.f32.mxu0 0.0
  %2000 = vmatmul.mubr.f32.gmra.mxu0 %v1933
  %v2001 = vpop.f32.mrf.mxu0
  %v2002 = vadd.f32 0.0, %v2001
  %v2003 = vpop.f32.mrf.mxu0
  %2004 = vdwg.mxu0
  %v2006 = vrot.slane %v2002, 6
  %2007 = vrot.lane.b32.xlu0 %v2006, 64
  %v2008 = vpop.permute.xlu0 %2007
  %v2010 = vadd.f32 %v342, %v2008
  %v2011 = vxor.u32 %v2010, 2147483648
  %v2012 = vmul.f32 %v2011, 1.442695
  %v2013 = vpow.pop %v2012
  %v2014 = vadd.f32 %v2013, 1.0
  %v2015 = vrcp.pop %v2014
  %v2016 = vmul.f32 1.0, %v2015
  %v2017 = vtanh.pop %v2010
  %v2019 = vrot.slane %v1922, 2
  %v2021 = vmul.f32 %v2016, %v2019
  %2023 = vrot.lane.b32.xlu0 %v2017, 96
  %v2024 = vpop.permute.xlu0 %2023
  %v2026 = vmul.f32 %v2016, %v2024
  %2028 = vrot.lane.b32.xlu0 %v2026, 16
  %v2029 = vpop.permute.xlu0 %2028
  %v2031 = vadd.f32 %v2021, %v2029
  %v2032 = vtanh.pop %v2031
  %2034 = vrot.lane.b32.xlu0 %v2032, 32
  %v2035 = vpop.permute.xlu0 %2034
  %v2037 = vmul.f32 %v2016, %v2035
  %v2039 = vrot.slane %v2037, 2
  %2040 = vrot.lane.b32.xlu0 %v2039, 16
  %v2041 = vpop.permute.xlu0 %2040
  %v2042 = vsel %vm268, %v2041, 0
  %2044 = vmatprep.subr.mxu0 0.0
  %2045 = vmatpush1.msra.mxu0 0.0
  %2046 = vmatprep.subr.mxu0 0.0
  %2047 = vmatpush1.msra.mxu0 0.0
  %2048 = vmatprep.subr.mxu0 0.0
  %2049 = vmatpush1.msra.mxu0 0.0
  %2050 = vmatprep.subr.mxu0 0.0
  %2051 = vmatpush1.msra.mxu0 0.0
  %2052 = vmatprep.subr.mxu0 0.0
  %2053 = vmatpush1.msra.mxu0 0.0
  %2054 = vmatprep.subr.mxu0 0.0
  %2055 = vmatpush1.msra.mxu0 0.0
  %2056 = vmatprep.subr.mxu0 0.0
  %2057 = vmatpush1.msra.mxu0 0.0
  %2058 = vmatprep.subr.mxu0 0.0
  %2059 = vmatpush1.msra.mxu0 0.0
  %2060 = vmatprep.subr.mxu0 0.0
  %2061 = vmatpush1.msra.mxu0 0.0
  %2062 = vmatprep.subr.mxu0 0.0
  %2063 = vmatpush1.msra.mxu0 0.0
  %2064 = vmatprep.subr.mxu0 0.0
  %2065 = vmatpush1.msra.mxu0 0.0
  %2066 = vmatprep.subr.mxu0 0.0
  %2067 = vmatpush1.msra.mxu0 0.0
  %2068 = vmatprep.subr.mxu0 0.0
  %2069 = vmatpush1.msra.mxu0 0.0
  %2070 = vmatprep.subr.mxu0 0.0
  %2071 = vmatpush1.msra.mxu0 0.0
  %2072 = vmatprep.subr.mxu0 0.0
  %2073 = vmatpush1.msra.mxu0 %v1285
  %2074 = vmatprep.subr.mxu0 0.0
  %2075 = vmatpush1.msra.mxu0 %v1284
  %2076 = vmatprep.subr.mxu0 0.0
  %2077 = vmatpush2.msra.mxu0 0.0
  %2078 = vmatprep.subr.mxu0 0.0
  %2079 = vmatpush2.msra.mxu0 0.0
  %2080 = vmatprep.subr.mxu0 0.0
  %2081 = vmatpush2.msra.mxu0 0.0
  %2082 = vmatprep.subr.mxu0 0.0
  %2083 = vmatpush2.msra.mxu0 0.0
  %2084 = vmatprep.subr.mxu0 0.0
  %2085 = vmatpush2.msra.mxu0 0.0
  %2086 = vmatprep.subr.mxu0 0.0
  %2087 = vmatpush2.msra.mxu0 0.0
  %2088 = vmatprep.subr.mxu0 0.0
  %2089 = vmatpush2.msra.mxu0 0.0
  %2090 = vmatprep.subr.mxu0 0.0
  %2091 = vmatpush2.msra.mxu0 0.0
  %2092 = vmatprep.subr.mxu0 0.0
  %2093 = vmatpush2.msra.mxu0 0.0
  %2094 = vmatprep.subr.mxu0 0.0
  %2095 = vmatpush2.msra.mxu0 0.0
  %2096 = vmatprep.subr.mxu0 0.0
  %2097 = vmatpush2.msra.mxu0 0.0
  %2098 = vmatprep.subr.mxu0 0.0
  %2099 = vmatpush2.msra.mxu0 0.0
  %2100 = vmatprep.subr.mxu0 0.0
  %2101 = vmatpush2.msra.mxu0 0.0
  %2102 = vmatprep.subr.mxu0 0.0
  %2103 = vmatpush2.msra.mxu0 0.0
  %2104 = vmatprep.subr.mxu0 0.0
  %2105 = vmatpush2.msra.mxu0 0.0
  %2106 = vmatprep.subr.mxu0 0.0
  %2107 = vmatpush2.msra.mxu0 0.0
  %2108 = vmatprep.mubr.f32.mxu0 0.0
  %2109 = vmatmul.mubr.f32.gmra.mxu0 %v2042
  %v2110 = vpop.f32.mrf.mxu0
  %v2111 = vadd.f32 0.0, %v2110
  %v2112 = vpop.f32.mrf.mxu0
  %2113 = vdwg.mxu0
  %2115 = vrot.lane.b32.xlu0 %v2111, 64
  %v2116 = vpop.permute.xlu0 %2115
  %v2118 = vadd.f32 %v342, %v2116
  %v2119 = vxor.u32 %v2118, 2147483648
  %v2120 = vmul.f32 %v2119, 1.442695
  %v2121 = vpow.pop %v2120
  %v2122 = vadd.f32 %v2121, 1.0
  %v2123 = vrcp.pop %v2122
  %v2124 = vmul.f32 1.0, %v2123
  %v2125 = vtanh.pop %v2118
  %v2127 = vrot.slane %v2031, 2
  %v2129 = vmul.f32 %v2124, %v2127
  %2131 = vrot.lane.b32.xlu0 %v2125, 96
  %v2132 = vpop.permute.xlu0 %2131
  %v2134 = vmul.f32 %v2124, %v2132
  %2136 = vrot.lane.b32.xlu0 %v2134, 16
  %v2137 = vpop.permute.xlu0 %2136
  %v2139 = vadd.f32 %v2129, %v2137
  %v2140 = vtanh.pop %v2139
  %2142 = vrot.lane.b32.xlu0 %v2140, 32
  %v2143 = vpop.permute.xlu0 %2142
  %v2145 = vmul.f32 %v2124, %v2143
  %2147 = vrot.lane.b32.xlu0 %v1283, 80
  %v2148 = vpop.permute.xlu0 %2147
  %v2151 = vrot.slane %v2145, 2
  %2152 = vrot.lane.b32.xlu0 %v2151, 32
  %v2153 = vpop.permute.xlu0 %2152
  %v2155 = vsel %vm268, %v2148, %v2153
  %2157 = vrot.lane.b32.xlu0 %v1277, 112
  %v2158 = vpop.permute.xlu0 %2157
  %v2161 = vrot.slane %v2139, 2
  %2162 = vrot.lane.b32.xlu0 %v2161, 64
  %v2163 = vpop.permute.xlu0 %2162
  %v2165 = vsel %vm268, %v2158, %v2163
  %v2166 = vld [vmem:[%s9] sm:$0xff]
  %v2167 = vld [vmem:[%s9 + $0x8] sm:$0xff]
  %v2168 = vld [vmem:[%s9 + $0x10] sm:$0xff]
  %v2169 = vld [vmem:[%s9 + $0x18] sm:$0xff]
  %v2171 = vrot.slane %v2155, 6
  %vm2172 = vcmask 261120
  %v2173 = vsel %vm2172, %v2171, 0
  %2175 = vmatprep.subr.mxu0 0.0
  %2176 = vmatpush1.msra.mxu0 0.0
  %2177 = vmatprep.subr.mxu0 0.0
  %2178 = vmatpush1.msra.mxu0 0.0
  %2179 = vmatprep.subr.mxu0 0.0
  %2180 = vmatpush1.msra.mxu0 0.0
  %2181 = vmatprep.subr.mxu0 0.0
  %2182 = vmatpush1.msra.mxu0 0.0
  %2183 = vmatprep.subr.mxu0 0.0
  %2184 = vmatpush1.msra.mxu0 0.0
  %2185 = vmatprep.subr.mxu0 0.0
  %2186 = vmatpush1.msra.mxu0 0.0
  %2187 = vmatprep.subr.mxu0 0.0
  %2188 = vmatpush1.msra.mxu0 0.0
  %2189 = vmatprep.subr.mxu0 0.0
  %2190 = vmatpush1.msra.mxu0 0.0
  %2191 = vmatprep.subr.mxu0 0.0
  %2192 = vmatpush1.msra.mxu0 0.0
  %2193 = vmatprep.subr.mxu0 0.0
  %2194 = vmatpush1.msra.mxu0 0.0
  %2195 = vmatprep.subr.mxu0 0.0
  %2196 = vmatpush1.msra.mxu0 0.0
  %2197 = vmatprep.subr.mxu0 0.0
  %2198 = vmatpush1.msra.mxu0 0.0
  %2199 = vmatprep.subr.mxu0 0.0
  %2200 = vmatpush1.msra.mxu0 %v2169
  %2201 = vmatprep.subr.mxu0 0.0
  %2202 = vmatpush1.msra.mxu0 %v2168
  %2203 = vmatprep.subr.mxu0 0.0
  %2204 = vmatpush1.msra.mxu0 %v2167
  %2205 = vmatprep.subr.mxu0 0.0
  %2206 = vmatpush1.msra.mxu0 %v2166
  %2207 = vmatprep.subr.mxu0 0.0
  %2208 = vmatpush2.msra.mxu0 0.0
  %2209 = vmatprep.subr.mxu0 0.0
  %2210 = vmatpush2.msra.mxu0 0.0
  %2211 = vmatprep.subr.mxu0 0.0
  %2212 = vmatpush2.msra.mxu0 0.0
  %2213 = vmatprep.subr.mxu0 0.0
  %2214 = vmatpush2.msra.mxu0 0.0
  %2215 = vmatprep.subr.mxu0 0.0
  %2216 = vmatpush2.msra.mxu0 0.0
  %2217 = vmatprep.subr.mxu0 0.0
  %2218 = vmatpush2.msra.mxu0 0.0
  %2219 = vmatprep.subr.mxu0 0.0
  %2220 = vmatpush2.msra.mxu0 0.0
  %2221 = vmatprep.subr.mxu0 0.0
  %2222 = vmatpush2.msra.mxu0 0.0
  %2223 = vmatprep.subr.mxu0 0.0
  %2224 = vmatpush2.msra.mxu0 0.0
  %2225 = vmatprep.subr.mxu0 0.0
  %2226 = vmatpush2.msra.mxu0 0.0
  %2227 = vmatprep.subr.mxu0 0.0
  %2228 = vmatpush2.msra.mxu0 0.0
  %2229 = vmatprep.subr.mxu0 0.0
  %2230 = vmatpush2.msra.mxu0 0.0
  %2231 = vmatprep.subr.mxu0 0.0
  %2232 = vmatpush2.msra.mxu0 0.0
  %2233 = vmatprep.subr.mxu0 0.0
  %2234 = vmatpush2.msra.mxu0 0.0
  %2235 = vmatprep.subr.mxu0 0.0
  %2236 = vmatpush2.msra.mxu0 0.0
  %2237 = vmatprep.subr.mxu0 0.0
  %2238 = vmatpush2.msra.mxu0 0.0
  %2239 = vmatprep.mubr.f32.mxu0 0.0
  %2240 = vmatmul.mubr.f32.gmra.mxu0 %v2173
  %v2241 = vpop.f32.mrf.mxu0
  %v2242 = vadd.f32 0.0, %v2241
  %v2243 = vpop.f32.mrf.mxu0
  %2244 = vdwg.mxu0
  %v2245 = vadd.f32 %v432, %v2242
  %v2246 = vxor.u32 %v2245, 2147483648
  %v2247 = vmul.f32 %v2246, 1.442695
  %v2248 = vpow.pop %v2247
  %v2249 = vadd.f32 %v2248, 1.0
  %v2250 = vrcp.pop %v2249
  %v2251 = vmul.f32 1.0, %v2250
  %v2252 = vtanh.pop %v2245
  %v2254 = vrot.slane %v2165, 6
  %2255 = vrot.lane.b32.xlu0 %v2254, 32
  %v2256 = vpop.permute.xlu0 %2255
  %v2258 = vmul.f32 %v2251, %v2256
  %2260 = vrot.lane.b32.xlu0 %v2252, 64
  %v2261 = vpop.permute.xlu0 %2260
  %v2263 = vmul.f32 %v2251, %v2261
  %2265 = vrot.lane.b32.xlu0 %v2263, 32
  %v2266 = vpop.permute.xlu0 %2265
  %v2268 = vadd.f32 %v2258, %v2266
  %v2269 = vtanh.pop %v2268
  %2271 = vrot.lane.b32.xlu0 %v2269, 64
  %v2272 = vpop.permute.xlu0 %2271
  %v2274 = vmul.f32 %v2251, %v2272
  %2276 = vrot.lane.b32.xlu0 %v2274, 32
  %v2277 = vpop.permute.xlu0 %2276
  %v2278 = vsel %vm2172, %v2277, 0
  %2280 = vmatprep.subr.mxu0 0.0
  %2281 = vmatpush1.msra.mxu0 0.0
  %2282 = vmatprep.subr.mxu0 0.0
  %2283 = vmatpush1.msra.mxu0 0.0
  %2284 = vmatprep.subr.mxu0 0.0
  %2285 = vmatpush1.msra.mxu0 0.0
  %2286 = vmatprep.subr.mxu0 0.0
  %2287 = vmatpush1.msra.mxu0 0.0
  %2288 = vmatprep.subr.mxu0 0.0
  %2289 = vmatpush1.msra.mxu0 0.0
  %2290 = vmatprep.subr.mxu0 0.0
  %2291 = vmatpush1.msra.mxu0 0.0
  %2292 = vmatprep.subr.mxu0 0.0
  %2293 = vmatpush1.msra.mxu0 0.0
  %2294 = vmatprep.subr.mxu0 0.0
  %2295 = vmatpush1.msra.mxu0 0.0
  %2296 = vmatprep.subr.mxu0 0.0
  %2297 = vmatpush1.msra.mxu0 0.0
  %2298 = vmatprep.subr.mxu0 0.0
  %2299 = vmatpush1.msra.mxu0 0.0
  %2300 = vmatprep.subr.mxu0 0.0
  %2301 = vmatpush1.msra.mxu0 0.0
  %2302 = vmatprep.subr.mxu0 0.0
  %2303 = vmatpush1.msra.mxu0 0.0
  %2304 = vmatprep.subr.mxu0 0.0
  %2305 = vmatpush1.msra.mxu0 %v2169
  %2306 = vmatprep.subr.mxu0 0.0
  %2307 = vmatpush1.msra.mxu0 %v2168
  %2308 = vmatprep.subr.mxu0 0.0
  %2309 = vmatpush1.msra.mxu0 %v2167
  %2310 = vmatprep.subr.mxu0 0.0
  %2311 = vmatpush1.msra.mxu0 %v2166
  %2312 = vmatprep.subr.mxu0 0.0
  %2313 = vmatpush2.msra.mxu0 0.0
  %2314 = vmatprep.subr.mxu0 0.0
  %2315 = vmatpush2.msra.mxu0 0.0
  %2316 = vmatprep.subr.mxu0 0.0
  %2317 = vmatpush2.msra.mxu0 0.0
  %2318 = vmatprep.subr.mxu0 0.0
  %2319 = vmatpush2.msra.mxu0 0.0
  %2320 = vmatprep.subr.mxu0 0.0
  %2321 = vmatpush2.msra.mxu0 0.0
  %2322 = vmatprep.subr.mxu0 0.0
  %2323 = vmatpush2.msra.mxu0 0.0
  %2324 = vmatprep.subr.mxu0 0.0
  %2325 = vmatpush2.msra.mxu0 0.0
  %2326 = vmatprep.subr.mxu0 0.0
  %2327 = vmatpush2.msra.mxu0 0.0
  %2328 = vmatprep.subr.mxu0 0.0
  %2329 = vmatpush2.msra.mxu0 0.0
  %2330 = vmatprep.subr.mxu0 0.0
  %2331 = vmatpush2.msra.mxu0 0.0
  %2332 = vmatprep.subr.mxu0 0.0
  %2333 = vmatpush2.msra.mxu0 0.0
  %2334 = vmatprep.subr.mxu0 0.0
  %2335 = vmatpush2.msra.mxu0 0.0
  %2336 = vmatprep.subr.mxu0 0.0
  %2337 = vmatpush2.msra.mxu0 0.0
  %2338 = vmatprep.subr.mxu0 0.0
  %2339 = vmatpush2.msra.mxu0 0.0
  %2340 = vmatprep.subr.mxu0 0.0
  %2341 = vmatpush2.msra.mxu0 0.0
  %2342 = vmatprep.subr.mxu0 0.0
  %2343 = vmatpush2.msra.mxu0 0.0
  %2344 = vmatprep.mubr.f32.mxu0 0.0
  %2345 = vmatmul.mubr.f32.gmra.mxu0 %v2278
  %v2346 = vpop.f32.mrf.mxu0
  %v2347 = vadd.f32 0.0, %v2346
  %v2348 = vpop.f32.mrf.mxu0
  %2349 = vdwg.mxu0
  %v2351 = vrot.slane %v2347, 6
  %v2353 = vadd.f32 %v432, %v2351
  %v2354 = vxor.u32 %v2353, 2147483648
  %v2355 = vmul.f32 %v2354, 1.442695
  %v2356 = vpow.pop %v2355
  %v2357 = vadd.f32 %v2356, 1.0
  %v2358 = vrcp.pop %v2357
  %v2359 = vmul.f32 1.0, %v2358
  %v2360 = vtanh.pop %v2353
  %v2362 = vrot.slane %v2268, 6
  %v2364 = vmul.f32 %v2359, %v2362
  %2366 = vrot.lane.b32.xlu0 %v2360, 64
  %v2367 = vpop.permute.xlu0 %2366
  %v2369 = vmul.f32 %v2359, %v2367
  %2371 = vrot.lane.b32.xlu0 %v2369, 32
  %v2372 = vpop.permute.xlu0 %2371
  %v2374 = vadd.f32 %v2364, %v2372
  %v2375 = vtanh.pop %v2374
  %2377 = vrot.lane.b32.xlu0 %v2375, 64
  %v2378 = vpop.permute.xlu0 %2377
  %v2380 = vmul.f32 %v2359, %v2378
  %v2382 = vrot.slane %v2380, 2
  %2383 = vrot.lane.b32.xlu0 %v2382, 32
  %v2384 = vpop.permute.xlu0 %2383
  %v2385 = vsel %vm2172, %v2384, 0
  %2387 = vmatprep.subr.mxu0 0.0
  %2388 = vmatpush1.msra.mxu0 0.0
  %2389 = vmatprep.subr.mxu0 0.0
  %2390 = vmatpush1.msra.mxu0 0.0
  %2391 = vmatprep.subr.mxu0 0.0
  %2392 = vmatpush1.msra.mxu0 0.0
  %2393 = vmatprep.subr.mxu0 0.0
  %2394 = vmatpush1.msra.mxu0 0.0
  %2395 = vmatprep.subr.mxu0 0.0
  %2396 = vmatpush1.msra.mxu0 0.0
  %2397 = vmatprep.subr.mxu0 0.0
  %2398 = vmatpush1.msra.mxu0 0.0
  %2399 = vmatprep.subr.mxu0 0.0
  %2400 = vmatpush1.msra.mxu0 0.0
  %2401 = vmatprep.subr.mxu0 0.0
  %2402 = vmatpush1.msra.mxu0 0.0
  %2403 = vmatprep.subr.mxu0 0.0
  %2404 = vmatpush1.msra.mxu0 0.0
  %2405 = vmatprep.subr.mxu0 0.0
  %2406 = vmatpush1.msra.mxu0 0.0
  %2407 = vmatprep.subr.mxu0 0.0
  %2408 = vmatpush1.msra.mxu0 0.0
  %2409 = vmatprep.subr.mxu0 0.0
  %2410 = vmatpush1.msra.mxu0 0.0
  %2411 = vmatprep.subr.mxu0 0.0
  %2412 = vmatpush1.msra.mxu0 %v2169
  %2413 = vmatprep.subr.mxu0 0.0
  %2414 = vmatpush1.msra.mxu0 %v2168
  %2415 = vmatprep.subr.mxu0 0.0
  %2416 = vmatpush1.msra.mxu0 %v2167
  %2417 = vmatprep.subr.mxu0 0.0
  %2418 = vmatpush1.msra.mxu0 %v2166
  %2419 = vmatprep.subr.mxu0 0.0
  %2420 = vmatpush2.msra.mxu0 0.0
  %2421 = vmatprep.subr.mxu0 0.0
  %2422 = vmatpush2.msra.mxu0 0.0
  %2423 = vmatprep.subr.mxu0 0.0
  %2424 = vmatpush2.msra.mxu0 0.0
  %2425 = vmatprep.subr.mxu0 0.0
  %2426 = vmatpush2.msra.mxu0 0.0
  %2427 = vmatprep.subr.mxu0 0.0
  %2428 = vmatpush2.msra.mxu0 0.0
  %2429 = vmatprep.subr.mxu0 0.0
  %2430 = vmatpush2.msra.mxu0 0.0
  %2431 = vmatprep.subr.mxu0 0.0
  %2432 = vmatpush2.msra.mxu0 0.0
  %2433 = vmatprep.subr.mxu0 0.0
  %2434 = vmatpush2.msra.mxu0 0.0
  %2435 = vmatprep.subr.mxu0 0.0
  %2436 = vmatpush2.msra.mxu0 0.0
  %2437 = vmatprep.subr.mxu0 0.0
  %2438 = vmatpush2.msra.mxu0 0.0
  %2439 = vmatprep.subr.mxu0 0.0
  %2440 = vmatpush2.msra.mxu0 0.0
  %2441 = vmatprep.subr.mxu0 0.0
  %2442 = vmatpush2.msra.mxu0 0.0
  %2443 = vmatprep.subr.mxu0 0.0
  %2444 = vmatpush2.msra.mxu0 0.0
  %2445 = vmatprep.subr.mxu0 0.0
  %2446 = vmatpush2.msra.mxu0 0.0
  %2447 = vmatprep.subr.mxu0 0.0
  %2448 = vmatpush2.msra.mxu0 0.0
  %2449 = vmatprep.subr.mxu0 0.0
  %2450 = vmatpush2.msra.mxu0 0.0
  %2451 = vmatprep.mubr.f32.mxu0 0.0
  %2452 = vmatmul.mubr.f32.gmra.mxu0 %v2385
  %v2453 = vpop.f32.mrf.mxu0
  %v2454 = vadd.f32 0.0, %v2453
  %v2455 = vpop.f32.mrf.mxu0
  %2456 = vdwg.mxu0
  %v2458 = vrot.slane %v2454, 4
  %v2460 = vadd.f32 %v432, %v2458
  %v2461 = vxor.u32 %v2460, 2147483648
  %v2462 = vmul.f32 %v2461, 1.442695
  %v2463 = vpow.pop %v2462
  %v2464 = vadd.f32 %v2463, 1.0
  %v2465 = vrcp.pop %v2464
  %v2466 = vmul.f32 1.0, %v2465
  %v2467 = vtanh.pop %v2460
  %v2469 = vrot.slane %v2374, 6
  %v2471 = vmul.f32 %v2466, %v2469
  %2473 = vrot.lane.b32.xlu0 %v2467, 64
  %v2474 = vpop.permute.xlu0 %2473
  %v2476 = vmul.f32 %v2466, %v2474
  %2478 = vrot.lane.b32.xlu0 %v2476, 32
  %v2479 = vpop.permute.xlu0 %2478
  %v2481 = vadd.f32 %v2471, %v2479
  %v2482 = vtanh.pop %v2481
  %2484 = vrot.lane.b32.xlu0 %v2482, 64
  %v2485 = vpop.permute.xlu0 %2484
  %v2487 = vmul.f32 %v2466, %v2485
  %v2489 = vrot.slane %v2487, 4
  %2490 = vrot.lane.b32.xlu0 %v2489, 32
  %v2491 = vpop.permute.xlu0 %2490
  %v2492 = vsel %vm2172, %v2491, 0
  %2494 = vmatprep.subr.mxu0 0.0
  %2495 = vmatpush1.msra.mxu0 0.0
  %2496 = vmatprep.subr.mxu0 0.0
  %2497 = vmatpush1.msra.mxu0 0.0
  %2498 = vmatprep.subr.mxu0 0.0
  %2499 = vmatpush1.msra.mxu0 0.0
  %2500 = vmatprep.subr.mxu0 0.0
  %2501 = vmatpush1.msra.mxu0 0.0
  %2502 = vmatprep.subr.mxu0 0.0
  %2503 = vmatpush1.msra.mxu0 0.0
  %2504 = vmatprep.subr.mxu0 0.0
  %2505 = vmatpush1.msra.mxu0 0.0
  %2506 = vmatprep.subr.mxu0 0.0
  %2507 = vmatpush1.msra.mxu0 0.0
  %2508 = vmatprep.subr.mxu0 0.0
  %2509 = vmatpush1.msra.mxu0 0.0
  %2510 = vmatprep.subr.mxu0 0.0
  %2511 = vmatpush1.msra.mxu0 0.0
  %2512 = vmatprep.subr.mxu0 0.0
  %2513 = vmatpush1.msra.mxu0 0.0
  %2514 = vmatprep.subr.mxu0 0.0
  %2515 = vmatpush1.msra.mxu0 0.0
  %2516 = vmatprep.subr.mxu0 0.0
  %2517 = vmatpush1.msra.mxu0 0.0
  %2518 = vmatprep.subr.mxu0 0.0
  %2519 = vmatpush1.msra.mxu0 %v2169
  %2520 = vmatprep.subr.mxu0 0.0
  %2521 = vmatpush1.msra.mxu0 %v2168
  %2522 = vmatprep.subr.mxu0 0.0
  %2523 = vmatpush1.msra.mxu0 %v2167
  %2524 = vmatprep.subr.mxu0 0.0
  %2525 = vmatpush1.msra.mxu0 %v2166
  %2526 = vmatprep.subr.mxu0 0.0
  %2527 = vmatpush2.msra.mxu0 0.0
  %2528 = vmatprep.subr.mxu0 0.0
  %2529 = vmatpush2.msra.mxu0 0.0
  %2530 = vmatprep.subr.mxu0 0.0
  %2531 = vmatpush2.msra.mxu0 0.0
  %2532 = vmatprep.subr.mxu0 0.0
  %2533 = vmatpush2.msra.mxu0 0.0
  %2534 = vmatprep.subr.mxu0 0.0
  %2535 = vmatpush2.msra.mxu0 0.0
  %2536 = vmatprep.subr.mxu0 0.0
  %2537 = vmatpush2.msra.mxu0 0.0
  %2538 = vmatprep.subr.mxu0 0.0
  %2539 = vmatpush2.msra.mxu0 0.0
  %2540 = vmatprep.subr.mxu0 0.0
  %2541 = vmatpush2.msra.mxu0 0.0
  %2542 = vmatprep.subr.mxu0 0.0
  %2543 = vmatpush2.msra.mxu0 0.0
  %2544 = vmatprep.subr.mxu0 0.0
  %2545 = vmatpush2.msra.mxu0 0.0
  %2546 = vmatprep.subr.mxu0 0.0
  %2547 = vmatpush2.msra.mxu0 0.0
  %2548 = vmatprep.subr.mxu0 0.0
  %2549 = vmatpush2.msra.mxu0 0.0
  %2550 = vmatprep.subr.mxu0 0.0
  %2551 = vmatpush2.msra.mxu0 0.0
  %2552 = vmatprep.subr.mxu0 0.0
  %2553 = vmatpush2.msra.mxu0 0.0
  %2554 = vmatprep.subr.mxu0 0.0
  %2555 = vmatpush2.msra.mxu0 0.0
  %2556 = vmatprep.subr.mxu0 0.0
  %2557 = vmatpush2.msra.mxu0 0.0
  %2558 = vmatprep.mubr.f32.mxu0 0.0
  %2559 = vmatmul.mubr.f32.gmra.mxu0 %v2492
  %v2560 = vpop.f32.mrf.mxu0
  %v2561 = vadd.f32 0.0, %v2560
  %v2562 = vpop.f32.mrf.mxu0
  %2563 = vdwg.mxu0
  %v2565 = vrot.slane %v2561, 2
  %v2567 = vadd.f32 %v432, %v2565
  %v2568 = vxor.u32 %v2567, 2147483648
  %v2569 = vmul.f32 %v2568, 1.442695
  %v2570 = vpow.pop %v2569
  %v2571 = vadd.f32 %v2570, 1.0
  %v2572 = vrcp.pop %v2571
  %v2573 = vmul.f32 1.0, %v2572
  %v2574 = vtanh.pop %v2567
  %v2576 = vrot.slane %v2481, 6
  %v2578 = vmul.f32 %v2573, %v2576
  %2580 = vrot.lane.b32.xlu0 %v2574, 64
  %v2581 = vpop.permute.xlu0 %2580
  %v2583 = vmul.f32 %v2573, %v2581
  %2585 = vrot.lane.b32.xlu0 %v2583, 32
  %v2586 = vpop.permute.xlu0 %2585
  %v2588 = vadd.f32 %v2578, %v2586
  %v2589 = vtanh.pop %v2588
  %2591 = vrot.lane.b32.xlu0 %v2589, 64
  %v2592 = vpop.permute.xlu0 %2591
  %v2594 = vmul.f32 %v2573, %v2592
  %v2596 = vrot.slane %v2594, 6
  %2597 = vrot.lane.b32.xlu0 %v2596, 32
  %v2598 = vpop.permute.xlu0 %2597
  %v2599 = vsel %vm2172, %v2598, 0
  %2601 = vmatprep.subr.mxu0 0.0
  %2602 = vmatpush1.msra.mxu0 0.0
  %2603 = vmatprep.subr.mxu0 0.0
  %2604 = vmatpush1.msra.mxu0 0.0
  %2605 = vmatprep.subr.mxu0 0.0
  %2606 = vmatpush1.msra.mxu0 0.0
  %2607 = vmatprep.subr.mxu0 0.0
  %2608 = vmatpush1.msra.mxu0 0.0
  %2609 = vmatprep.subr.mxu0 0.0
  %2610 = vmatpush1.msra.mxu0 0.0
  %2611 = vmatprep.subr.mxu0 0.0
  %2612 = vmatpush1.msra.mxu0 0.0
  %2613 = vmatprep.subr.mxu0 0.0
  %2614 = vmatpush1.msra.mxu0 0.0
  %2615 = vmatprep.subr.mxu0 0.0
  %2616 = vmatpush1.msra.mxu0 0.0
  %2617 = vmatprep.subr.mxu0 0.0
  %2618 = vmatpush1.msra.mxu0 0.0
  %2619 = vmatprep.subr.mxu0 0.0
  %2620 = vmatpush1.msra.mxu0 0.0
  %2621 = vmatprep.subr.mxu0 0.0
  %2622 = vmatpush1.msra.mxu0 0.0
  %2623 = vmatprep.subr.mxu0 0.0
  %2624 = vmatpush1.msra.mxu0 0.0
  %2625 = vmatprep.subr.mxu0 0.0
  %2626 = vmatpush1.msra.mxu0 %v2169
  %2627 = vmatprep.subr.mxu0 0.0
  %2628 = vmatpush1.msra.mxu0 %v2168
  %2629 = vmatprep.subr.mxu0 0.0
  %2630 = vmatpush1.msra.mxu0 %v2167
  %2631 = vmatprep.subr.mxu0 0.0
  %2632 = vmatpush1.msra.mxu0 %v2166
  %2633 = vmatprep.subr.mxu0 0.0
  %2634 = vmatpush2.msra.mxu0 0.0
  %2635 = vmatprep.subr.mxu0 0.0
  %2636 = vmatpush2.msra.mxu0 0.0
  %2637 = vmatprep.subr.mxu0 0.0
  %2638 = vmatpush2.msra.mxu0 0.0
  %2639 = vmatprep.subr.mxu0 0.0
  %2640 = vmatpush2.msra.mxu0 0.0
  %2641 = vmatprep.subr.mxu0 0.0
  %2642 = vmatpush2.msra.mxu0 0.0
  %2643 = vmatprep.subr.mxu0 0.0
  %2644 = vmatpush2.msra.mxu0 0.0
  %2645 = vmatprep.subr.mxu0 0.0
  %2646 = vmatpush2.msra.mxu0 0.0
  %2647 = vmatprep.subr.mxu0 0.0
  %2648 = vmatpush2.msra.mxu0 0.0
  %2649 = vmatprep.subr.mxu0 0.0
  %2650 = vmatpush2.msra.mxu0 0.0
  %2651 = vmatprep.subr.mxu0 0.0
  %2652 = vmatpush2.msra.mxu0 0.0
  %2653 = vmatprep.subr.mxu0 0.0
  %2654 = vmatpush2.msra.mxu0 0.0
  %2655 = vmatprep.subr.mxu0 0.0
  %2656 = vmatpush2.msra.mxu0 0.0
  %2657 = vmatprep.subr.mxu0 0.0
  %2658 = vmatpush2.msra.mxu0 0.0
  %2659 = vmatprep.subr.mxu0 0.0
  %2660 = vmatpush2.msra.mxu0 0.0
  %2661 = vmatprep.subr.mxu0 0.0
  %2662 = vmatpush2.msra.mxu0 0.0
  %2663 = vmatprep.subr.mxu0 0.0
  %2664 = vmatpush2.msra.mxu0 0.0
  %2665 = vmatprep.mubr.f32.mxu0 0.0
  %2666 = vmatmul.mubr.f32.gmra.mxu0 %v2599
  %v2667 = vpop.f32.mrf.mxu0
  %v2668 = vadd.f32 0.0, %v2667
  %v2669 = vpop.f32.mrf.mxu0
  %2670 = vdwg.mxu0
  %v2671 = vadd.f32 %v437, %v2668
  %v2672 = vxor.u32 %v2671, 2147483648
  %v2673 = vmul.f32 %v2672, 1.442695
  %v2674 = vpow.pop %v2673
  %v2675 = vadd.f32 %v2674, 1.0
  %v2676 = vrcp.pop %v2675
  %v2677 = vmul.f32 1.0, %v2676
  %v2678 = vtanh.pop %v2671
  %v2680 = vrot.slane %v2588, 6
  %v2682 = vmul.f32 %v2677, %v2680
  %2684 = vrot.lane.b32.xlu0 %v2678, 64
  %v2685 = vpop.permute.xlu0 %2684
  %v2687 = vmul.f32 %v2677, %v2685
  %2689 = vrot.lane.b32.xlu0 %v2687, 32
  %v2690 = vpop.permute.xlu0 %2689
  %v2692 = vadd.f32 %v2682, %v2690
  %v2693 = vtanh.pop %v2692
  %2695 = vrot.lane.b32.xlu0 %v2693, 64
  %v2696 = vpop.permute.xlu0 %2695
  %v2698 = vmul.f32 %v2677, %v2696
  %2700 = vrot.lane.b32.xlu0 %v2698, 32
  %v2701 = vpop.permute.xlu0 %2700
  %v2702 = vsel %vm2172, %v2701, 0
  %2704 = vmatprep.subr.mxu0 0.0
  %2705 = vmatpush1.msra.mxu0 0.0
  %2706 = vmatprep.subr.mxu0 0.0
  %2707 = vmatpush1.msra.mxu0 0.0
  %2708 = vmatprep.subr.mxu0 0.0
  %2709 = vmatpush1.msra.mxu0 0.0
  %2710 = vmatprep.subr.mxu0 0.0
  %2711 = vmatpush1.msra.mxu0 0.0
  %2712 = vmatprep.subr.mxu0 0.0
  %2713 = vmatpush1.msra.mxu0 0.0
  %2714 = vmatprep.subr.mxu0 0.0
  %2715 = vmatpush1.msra.mxu0 0.0
  %2716 = vmatprep.subr.mxu0 0.0
  %2717 = vmatpush1.msra.mxu0 0.0
  %2718 = vmatprep.subr.mxu0 0.0
  %2719 = vmatpush1.msra.mxu0 0.0
  %2720 = vmatprep.subr.mxu0 0.0
  %2721 = vmatpush1.msra.mxu0 0.0
  %2722 = vmatprep.subr.mxu0 0.0
  %2723 = vmatpush1.msra.mxu0 0.0
  %2724 = vmatprep.subr.mxu0 0.0
  %2725 = vmatpush1.msra.mxu0 0.0
  %2726 = vmatprep.subr.mxu0 0.0
  %2727 = vmatpush1.msra.mxu0 0.0
  %2728 = vmatprep.subr.mxu0 0.0
  %2729 = vmatpush1.msra.mxu0 %v2169
  %2730 = vmatprep.subr.mxu0 0.0
  %2731 = vmatpush1.msra.mxu0 %v2168
  %2732 = vmatprep.subr.mxu0 0.0
  %2733 = vmatpush1.msra.mxu0 %v2167
  %2734 = vmatprep.subr.mxu0 0.0
  %2735 = vmatpush1.msra.mxu0 %v2166
  %2736 = vmatprep.subr.mxu0 0.0
  %2737 = vmatpush2.msra.mxu0 0.0
  %2738 = vmatprep.subr.mxu0 0.0
  %2739 = vmatpush2.msra.mxu0 0.0
  %2740 = vmatprep.subr.mxu0 0.0
  %2741 = vmatpush2.msra.mxu0 0.0
  %2742 = vmatprep.subr.mxu0 0.0
  %2743 = vmatpush2.msra.mxu0 0.0
  %2744 = vmatprep.subr.mxu0 0.0
  %2745 = vmatpush2.msra.mxu0 0.0
  %2746 = vmatprep.subr.mxu0 0.0
  %2747 = vmatpush2.msra.mxu0 0.0
  %2748 = vmatprep.subr.mxu0 0.0
  %2749 = vmatpush2.msra.mxu0 0.0
  %2750 = vmatprep.subr.mxu0 0.0
  %2751 = vmatpush2.msra.mxu0 0.0
  %2752 = vmatprep.subr.mxu0 0.0
  %2753 = vmatpush2.msra.mxu0 0.0
  %2754 = vmatprep.subr.mxu0 0.0
  %2755 = vmatpush2.msra.mxu0 0.0
  %2756 = vmatprep.subr.mxu0 0.0
  %2757 = vmatpush2.msra.mxu0 0.0
  %2758 = vmatprep.subr.mxu0 0.0
  %2759 = vmatpush2.msra.mxu0 0.0
  %2760 = vmatprep.subr.mxu0 0.0
  %2761 = vmatpush2.msra.mxu0 0.0
  %2762 = vmatprep.subr.mxu0 0.0
  %2763 = vmatpush2.msra.mxu0 0.0
  %2764 = vmatprep.subr.mxu0 0.0
  %2765 = vmatpush2.msra.mxu0 0.0
  %2766 = vmatprep.subr.mxu0 0.0
  %2767 = vmatpush2.msra.mxu0 0.0
  %2768 = vmatprep.mubr.f32.mxu0 0.0
  %2769 = vmatmul.mubr.f32.gmra.mxu0 %v2702
  %v2770 = vpop.f32.mrf.mxu0
  %v2771 = vadd.f32 0.0, %v2770
  %v2772 = vpop.f32.mrf.mxu0
  %2773 = vdwg.mxu0
  %v2775 = vrot.slane %v2771, 6
  %v2777 = vadd.f32 %v437, %v2775
  %v2778 = vxor.u32 %v2777, 2147483648
  %v2779 = vmul.f32 %v2778, 1.442695
  %v2780 = vpow.pop %v2779
  %v2781 = vadd.f32 %v2780, 1.0
  %v2782 = vrcp.pop %v2781
  %v2783 = vmul.f32 1.0, %v2782
  %v2784 = vtanh.pop %v2777
  %v2786 = vrot.slane %v2692, 6
  %v2788 = vmul.f32 %v2783, %v2786
  %2790 = vrot.lane.b32.xlu0 %v2784, 64
  %v2791 = vpop.permute.xlu0 %2790
  %v2793 = vmul.f32 %v2783, %v2791
  %2795 = vrot.lane.b32.xlu0 %v2793, 32
  %v2796 = vpop.permute.xlu0 %2795
  %v2798 = vadd.f32 %v2788, %v2796
  %v2799 = vtanh.pop %v2798
  %2801 = vrot.lane.b32.xlu0 %v2799, 64
  %v2802 = vpop.permute.xlu0 %2801
  %v2804 = vmul.f32 %v2783, %v2802
  %v2806 = vrot.slane %v2804, 2
  %2807 = vrot.lane.b32.xlu0 %v2806, 32
  %v2808 = vpop.permute.xlu0 %2807
  %v2809 = vsel %vm2172, %v2808, 0
  %2811 = vmatprep.subr.mxu0 0.0
  %2812 = vmatpush1.msra.mxu0 0.0
  %2813 = vmatprep.subr.mxu0 0.0
  %2814 = vmatpush1.msra.mxu0 0.0
  %2815 = vmatprep.subr.mxu0 0.0
  %2816 = vmatpush1.msra.mxu0 0.0
  %2817 = vmatprep.subr.mxu0 0.0
  %2818 = vmatpush1.msra.mxu0 0.0
  %2819 = vmatprep.subr.mxu0 0.0
  %2820 = vmatpush1.msra.mxu0 0.0
  %2821 = vmatprep.subr.mxu0 0.0
  %2822 = vmatpush1.msra.mxu0 0.0
  %2823 = vmatprep.subr.mxu0 0.0
  %2824 = vmatpush1.msra.mxu0 0.0
  %2825 = vmatprep.subr.mxu0 0.0
  %2826 = vmatpush1.msra.mxu0 0.0
  %2827 = vmatprep.subr.mxu0 0.0
  %2828 = vmatpush1.msra.mxu0 0.0
  %2829 = vmatprep.subr.mxu0 0.0
  %2830 = vmatpush1.msra.mxu0 0.0
  %2831 = vmatprep.subr.mxu0 0.0
  %2832 = vmatpush1.msra.mxu0 0.0
  %2833 = vmatprep.subr.mxu0 0.0
  %2834 = vmatpush1.msra.mxu0 0.0
  %2835 = vmatprep.subr.mxu0 0.0
  %2836 = vmatpush1.msra.mxu0 %v2169
  %2837 = vmatprep.subr.mxu0 0.0
  %2838 = vmatpush1.msra.mxu0 %v2168
  %2839 = vmatprep.subr.mxu0 0.0
  %2840 = vmatpush1.msra.mxu0 %v2167
  %2841 = vmatprep.subr.mxu0 0.0
  %2842 = vmatpush1.msra.mxu0 %v2166
  %2843 = vmatprep.subr.mxu0 0.0
  %2844 = vmatpush2.msra.mxu0 0.0
  %2845 = vmatprep.subr.mxu0 0.0
  %2846 = vmatpush2.msra.mxu0 0.0
  %2847 = vmatprep.subr.mxu0 0.0
  %2848 = vmatpush2.msra.mxu0 0.0
  %2849 = vmatprep.subr.mxu0 0.0
  %2850 = vmatpush2.msra.mxu0 0.0
  %2851 = vmatprep.subr.mxu0 0.0
  %2852 = vmatpush2.msra.mxu0 0.0
  %2853 = vmatprep.subr.mxu0 0.0
  %2854 = vmatpush2.msra.mxu0 0.0
  %2855 = vmatprep.subr.mxu0 0.0
  %2856 = vmatpush2.msra.mxu0 0.0
  %2857 = vmatprep.subr.mxu0 0.0
  %2858 = vmatpush2.msra.mxu0 0.0
  %2859 = vmatprep.subr.mxu0 0.0
  %2860 = vmatpush2.msra.mxu0 0.0
  %2861 = vmatprep.subr.mxu0 0.0
  %2862 = vmatpush2.msra.mxu0 0.0
  %2863 = vmatprep.subr.mxu0 0.0
  %2864 = vmatpush2.msra.mxu0 0.0
  %2865 = vmatprep.subr.mxu0 0.0
  %2866 = vmatpush2.msra.mxu0 0.0
  %2867 = vmatprep.subr.mxu0 0.0
  %2868 = vmatpush2.msra.mxu0 0.0
  %2869 = vmatprep.subr.mxu0 0.0
  %2870 = vmatpush2.msra.mxu0 0.0
  %2871 = vmatprep.subr.mxu0 0.0
  %2872 = vmatpush2.msra.mxu0 0.0
  %2873 = vmatprep.subr.mxu0 0.0
  %2874 = vmatpush2.msra.mxu0 0.0
  %2875 = vmatprep.mubr.f32.mxu0 0.0
  %2876 = vmatmul.mubr.f32.gmra.mxu0 %v2809
  %v2877 = vpop.f32.mrf.mxu0
  %v2878 = vadd.f32 0.0, %v2877
  %v2879 = vpop.f32.mrf.mxu0
  %2880 = vdwg.mxu0
  %v2882 = vrot.slane %v2878, 4
  %v2884 = vadd.f32 %v437, %v2882
  %v2885 = vxor.u32 %v2884, 2147483648
  %v2886 = vmul.f32 %v2885, 1.442695
  %v2887 = vpow.pop %v2886
  %v2888 = vadd.f32 %v2887, 1.0
  %v2889 = vrcp.pop %v2888
  %v2890 = vmul.f32 1.0, %v2889
  %v2891 = vtanh.pop %v2884
  %v2893 = vrot.slane %v2798, 6
  %v2895 = vmul.f32 %v2890, %v2893
  %2897 = vrot.lane.b32.xlu0 %v2891, 64
  %v2898 = vpop.permute.xlu0 %2897
  %v2900 = vmul.f32 %v2890, %v2898
  %2902 = vrot.lane.b32.xlu0 %v2900, 32
  %v2903 = vpop.permute.xlu0 %2902
  %v2905 = vadd.f32 %v2895, %v2903
  %v2906 = vtanh.pop %v2905
  %2908 = vrot.lane.b32.xlu0 %v2906, 64
  %v2909 = vpop.permute.xlu0 %2908
  %v2911 = vmul.f32 %v2890, %v2909
  %v2913 = vrot.slane %v2911, 4
  %2914 = vrot.lane.b32.xlu0 %v2913, 32
  %v2915 = vpop.permute.xlu0 %2914
  %v2916 = vsel %vm2172, %v2915, 0
  %2918 = vmatprep.subr.mxu0 0.0
  %2919 = vmatpush1.msra.mxu0 0.0
  %2920 = vmatprep.subr.mxu0 0.0
  %2921 = vmatpush1.msra.mxu0 0.0
  %2922 = vmatprep.subr.mxu0 0.0
  %2923 = vmatpush1.msra.mxu0 0.0
  %2924 = vmatprep.subr.mxu0 0.0
  %2925 = vmatpush1.msra.mxu0 0.0
  %2926 = vmatprep.subr.mxu0 0.0
  %2927 = vmatpush1.msra.mxu0 0.0
  %2928 = vmatprep.subr.mxu0 0.0
  %2929 = vmatpush1.msra.mxu0 0.0
  %2930 = vmatprep.subr.mxu0 0.0
  %2931 = vmatpush1.msra.mxu0 0.0
  %2932 = vmatprep.subr.mxu0 0.0
  %2933 = vmatpush1.msra.mxu0 0.0
  %2934 = vmatprep.subr.mxu0 0.0
  %2935 = vmatpush1.msra.mxu0 0.0
  %2936 = vmatprep.subr.mxu0 0.0
  %2937 = vmatpush1.msra.mxu0 0.0
  %2938 = vmatprep.subr.mxu0 0.0
  %2939 = vmatpush1.msra.mxu0 0.0
  %2940 = vmatprep.subr.mxu0 0.0
  %2941 = vmatpush1.msra.mxu0 0.0
  %2942 = vmatprep.subr.mxu0 0.0
  %2943 = vmatpush1.msra.mxu0 %v2169
  %2944 = vmatprep.subr.mxu0 0.0
  %2945 = vmatpush1.msra.mxu0 %v2168
  %2946 = vmatprep.subr.mxu0 0.0
  %2947 = vmatpush1.msra.mxu0 %v2167
  %2948 = vmatprep.subr.mxu0 0.0
  %2949 = vmatpush1.msra.mxu0 %v2166
  %2950 = vmatprep.subr.mxu0 0.0
  %2951 = vmatpush2.msra.mxu0 0.0
  %2952 = vmatprep.subr.mxu0 0.0
  %2953 = vmatpush2.msra.mxu0 0.0
  %2954 = vmatprep.subr.mxu0 0.0
  %2955 = vmatpush2.msra.mxu0 0.0
  %2956 = vmatprep.subr.mxu0 0.0
  %2957 = vmatpush2.msra.mxu0 0.0
  %2958 = vmatprep.subr.mxu0 0.0
  %2959 = vmatpush2.msra.mxu0 0.0
  %2960 = vmatprep.subr.mxu0 0.0
  %2961 = vmatpush2.msra.mxu0 0.0
  %2962 = vmatprep.subr.mxu0 0.0
  %2963 = vmatpush2.msra.mxu0 0.0
  %2964 = vmatprep.subr.mxu0 0.0
  %2965 = vmatpush2.msra.mxu0 0.0
  %2966 = vmatprep.subr.mxu0 0.0
  %2967 = vmatpush2.msra.mxu0 0.0
  %2968 = vmatprep.subr.mxu0 0.0
  %2969 = vmatpush2.msra.mxu0 0.0
  %2970 = vmatprep.subr.mxu0 0.0
  %2971 = vmatpush2.msra.mxu0 0.0
  %2972 = vmatprep.subr.mxu0 0.0
  %2973 = vmatpush2.msra.mxu0 0.0
  %2974 = vmatprep.subr.mxu0 0.0
  %2975 = vmatpush2.msra.mxu0 0.0
  %2976 = vmatprep.subr.mxu0 0.0
  %2977 = vmatpush2.msra.mxu0 0.0
  %2978 = vmatprep.subr.mxu0 0.0
  %2979 = vmatpush2.msra.mxu0 0.0
  %2980 = vmatprep.subr.mxu0 0.0
  %2981 = vmatpush2.msra.mxu0 0.0
  %2982 = vmatprep.mubr.f32.mxu0 0.0
  %2983 = vmatmul.mubr.f32.gmra.mxu0 %v2916
  %v2984 = vpop.f32.mrf.mxu0
  %v2985 = vadd.f32 0.0, %v2984
  %v2986 = vpop.f32.mrf.mxu0
  %2987 = vdwg.mxu0
  %v2989 = vrot.slane %v2985, 2
  %v2991 = vadd.f32 %v437, %v2989
  %v2992 = vxor.u32 %v2991, 2147483648
  %v2993 = vmul.f32 %v2992, 1.442695
  %v2994 = vpow.pop %v2993
  %v2995 = vadd.f32 %v2994, 1.0
  %v2996 = vrcp.pop %v2995
  %v2997 = vmul.f32 1.0, %v2996
  %v2998 = vtanh.pop %v2991
  %v3000 = vrot.slane %v2905, 6
  %v3002 = vmul.f32 %v2997, %v3000
  %3004 = vrot.lane.b32.xlu0 %v2998, 64
  %v3005 = vpop.permute.xlu0 %3004
  %v3007 = vmul.f32 %v2997, %v3005
  %3009 = vrot.lane.b32.xlu0 %v3007, 32
  %v3010 = vpop.permute.xlu0 %3009
  %v3012 = vadd.f32 %v3002, %v3010
  %v3013 = vtanh.pop %v3012
  %3015 = vrot.lane.b32.xlu0 %v3013, 64
  %v3016 = vpop.permute.xlu0 %3015
  %v3018 = vmul.f32 %v2997, %v3016
  %vm3019 = vcmask 1041408
  %v3020 = vsel %vm3019, %v539, %v645
  %v3021 = vsel %vm79, %v3020, %v752
  %vm3022 = vcmask 1045504
  %v3023 = vsel %vm3022, %v3021, %v859
  %v3024 = vsel %vm3019, %v963, %v1069
  %v3025 = vsel %vm79, %v3024, %v1176
  %v3026 = vsel %vm3022, %v3025, %v1283
  %v3027 = vsel %vm3019, %v2145, %v2037
  %v3028 = vsel %vm79, %v3027, %v1928
  %v3029 = vsel %vm3022, %v3028, %v1819
  %v3030 = vsel %vm3019, %v1711, %v1603
  %v3031 = vsel %vm79, %v3030, %v1494
  %v3032 = vsel %vm3022, %v3031, %v1385
  %3035 = vrot.lane.b32.xlu0 %v3023, 80
  %v3036 = vpop.permute.xlu0 %3035
  %3037 = vrot.lane.b32.xlu0 %v3026, 80
  %v3038 = vpop.permute.xlu0 %3037
  %3043 = vrot.lane.b32.xlu0 %v3029, 32
  %v3044 = vpop.permute.xlu0 %3043
  %3045 = vrot.lane.b32.xlu0 %v3032, 32
  %v3046 = vpop.permute.xlu0 %3045
  %v3049 = vsel %vm268, %v3036, %v3044
  %v3050 = vsel %vm268, %v3038, %v3046
  %v3051 = vsel %vm3019, %v2274, %v2380
  %v3052 = vsel %vm79, %v3051, %v2487
  %v3053 = vsel %vm3022, %v3052, %v2594
  %v3054 = vsel %vm3019, %v2698, %v2804
  %v3055 = vsel %vm79, %v3054, %v2911
  %v3056 = vsel %vm3022, %v3055, %v3018
  %v3057 = vld [vmem:[%s15] sm:$0xff]
  %v3058 = vld [vmem:[%s15 + $0x8] sm:$0xff]
  %3061 = vrot.lane.b32.xlu0 %v3053, 32
  %v3062 = vpop.permute.xlu0 %3061
  %3063 = vrot.lane.b32.xlu0 %v3056, 32
  %v3064 = vpop.permute.xlu0 %3063
  %v3065 = vsel %vm2172, %v3062, 0
  %v3067 = vsel %vm2172, %v3064, 0
  %v3070 = vsel %vm2172, %v3049, 0
  %v3073 = vsel %vm2172, %v3050, 0
  %3075 = vmatprep.subr.mxu0 0.0
  %3076 = vmatpush1.xpose.msra.mxu0 0.0
  %3077 = vmatprep.subr.mxu0 0.0
  %3078 = vmatpush1.xpose.msra.mxu0 0.0
  %3079 = vmatprep.subr.mxu0 0.0
  %3080 = vmatpush1.xpose.msra.mxu0 0.0
  %3081 = vmatprep.subr.mxu0 0.0
  %3082 = vmatpush1.xpose.msra.mxu0 0.0
  %3083 = vmatprep.subr.mxu0 0.0
  %3084 = vmatpush1.xpose.msra.mxu0 0.0
  %3085 = vmatprep.subr.mxu0 0.0
  %3086 = vmatpush1.xpose.msra.mxu0 0.0
  %3087 = vmatprep.subr.mxu0 0.0
  %3088 = vmatpush1.xpose.msra.mxu0 0.0
  %3089 = vmatprep.subr.mxu0 0.0
  %3090 = vmatpush1.xpose.msra.mxu0 0.0
  %3091 = vmatprep.subr.mxu0 0.0
  %3092 = vmatpush1.xpose.msra.mxu0 0.0
  %3093 = vmatprep.subr.mxu0 0.0
  %3094 = vmatpush1.xpose.msra.mxu0 0.0
  %3095 = vmatprep.subr.mxu0 0.0
  %3096 = vmatpush1.xpose.msra.mxu0 0.0
  %3097 = vmatprep.subr.mxu0 0.0
  %3098 = vmatpush1.xpose.msra.mxu0 0.0
  %3099 = vmatprep.subr.mxu0 0.0
  %3100 = vmatpush1.xpose.msra.mxu0 0.0
  %3101 = vmatprep.subr.mxu0 0.0
  %3102 = vmatpush1.xpose.msra.mxu0 0.0
  %3103 = vmatprep.subr.mxu0 0.0
  %3104 = vmatpush1.xpose.msra.mxu0 %v3073
  %3105 = vmatprep.subr.mxu0 0.0
  %3106 = vmatpush1.xpose.msra.mxu0 %v3070
  %3107 = vmatprep.subr.mxu0 0.0
  %3108 = vmatpush2.xpose.msra.mxu0 0.0
  %3109 = vmatprep.subr.mxu0 0.0
  %3110 = vmatpush2.xpose.msra.mxu0 0.0
  %3111 = vmatprep.subr.mxu0 0.0
  %3112 = vmatpush2.xpose.msra.mxu0 0.0
  %3113 = vmatprep.subr.mxu0 0.0
  %3114 = vmatpush2.xpose.msra.mxu0 0.0
  %3115 = vmatprep.subr.mxu0 0.0
  %3116 = vmatpush2.xpose.msra.mxu0 0.0
  %3117 = vmatprep.subr.mxu0 0.0
  %3118 = vmatpush2.xpose.msra.mxu0 0.0
  %3119 = vmatprep.subr.mxu0 0.0
  %3120 = vmatpush2.xpose.msra.mxu0 0.0
  %3121 = vmatprep.subr.mxu0 0.0
  %3122 = vmatpush2.xpose.msra.mxu0 0.0
  %3123 = vmatprep.subr.mxu0 0.0
  %3124 = vmatpush2.xpose.msra.mxu0 0.0
  %3125 = vmatprep.subr.mxu0 0.0
  %3126 = vmatpush2.xpose.msra.mxu0 0.0
  %3127 = vmatprep.subr.mxu0 0.0
  %3128 = vmatpush2.xpose.msra.mxu0 0.0
  %3129 = vmatprep.subr.mxu0 0.0
  %3130 = vmatpush2.xpose.msra.mxu0 0.0
  %3131 = vmatprep.subr.mxu0 0.0
  %3132 = vmatpush2.xpose.msra.mxu0 0.0
  %3133 = vmatprep.subr.mxu0 0.0
  %3134 = vmatpush2.xpose.msra.mxu0 0.0
  %3135 = vmatprep.subr.mxu0 0.0
  %3136 = vmatpush2.xpose.msra.mxu0 0.0
  %3137 = vmatprep.subr.mxu0 0.0
  %3138 = vmatpush2.xpose.msra.mxu0 0.0
  %3139 = vmatprep.mubr.f32.mxu0 0.0
  %3140 = vmatmul.mubr.f32.gmra.mxu0 %v3065
  %v3141 = vpop.f32.mrf.mxu0
  %v3142 = vadd.f32 %v3057, %v3141
  %v3143 = vpop.f32.mrf.mxu0
  %3144 = vmatprep.mubr.f32.mxu0 0.0
  %3145 = vmatmul.mubr.f32.gmra.mxu0 %v3067
  %v3146 = vpop.f32.mrf.mxu0
  %v3147 = vadd.f32 %v3058, %v3146
  %v3148 = vpop.f32.mrf.mxu0
  %3149 = vdwg.mxu0
  %v3150 = vsel %vm268, %v3142, -inf
  %3151 = vmax.xlane.f32.xlu0 %v3150
  %v3152 = vpop.xlane.xlu0 %3151
  %v3153 = vsel %vm268, %v3147, -inf
  %3154 = vmax.xlane.f32.xlu0 %v3153
  %v3155 = vpop.xlane.xlu0 %3154
  %v3156 = vsub.f32 %v3142, %v3152
  %v3157 = vsub.f32 %v3147, %v3155
  %v3158 = vmul.f32 %v3156, 1.442695
  %v3159 = vpow.pop %v3158
  %v3160 = vmul.f32 %v3157, 1.442695
  %v3161 = vpow.pop %v3160
  %v3162 = vsel %vm268, %v3159, 0.0
  %3163 = vadd.xlane.f32.xlu0 %v3162
  %v3164 = vpop.xlane.xlu0 %3163
  %v3165 = vsel %vm268, %v3161, 0.0
  %3166 = vadd.xlane.f32.xlu0 %v3165
  %v3167 = vpop.xlane.xlu0 %3166
  %v3168 = vrcp.pop %v3164
  %v3169 = vrcp.pop %v3167
  %v3170 = vmul.f32 %v3159, %v3168
  %v3171 = vmul.f32 %v3161, %v3169
  %v3173 = vsel %vm268, %v3170, 0
  %v3176 = vsel %vm268, %v3171, 0
  %3178 = vmatprep.subr.mxu0 0.0
  %3179 = vmatpush1.msra.mxu0 0.0
  %3180 = vmatprep.subr.mxu0 0.0
  %3181 = vmatpush1.msra.mxu0 0.0
  %3182 = vmatprep.subr.mxu0 0.0
  %3183 = vmatpush1.msra.mxu0 0.0
  %3184 = vmatprep.subr.mxu0 0.0
  %3185 = vmatpush1.msra.mxu0 0.0
  %3186 = vmatprep.subr.mxu0 0.0
  %3187 = vmatpush1.msra.mxu0 0.0
  %3188 = vmatprep.subr.mxu0 0.0
  %3189 = vmatpush1.msra.mxu0 0.0
  %3190 = vmatprep.subr.mxu0 0.0
  %3191 = vmatpush1.msra.mxu0 0.0
  %3192 = vmatprep.subr.mxu0 0.0
  %3193 = vmatpush1.msra.mxu0 0.0
  %3194 = vmatprep.subr.mxu0 0.0
  %3195 = vmatpush1.msra.mxu0 0.0
  %3196 = vmatprep.subr.mxu0 0.0
  %3197 = vmatpush1.msra.mxu0 0.0
  %3198 = vmatprep.subr.mxu0 0.0
  %3199 = vmatpush1.msra.mxu0 0.0
  %3200 = vmatprep.subr.mxu0 0.0
  %3201 = vmatpush1.msra.mxu0 0.0
  %3202 = vmatprep.subr.mxu0 0.0
  %3203 = vmatpush1.msra.mxu0 0.0
  %3204 = vmatprep.subr.mxu0 0.0
  %3205 = vmatpush1.msra.mxu0 0.0
  %3206 = vmatprep.subr.mxu0 0.0
  %3207 = vmatpush1.msra.mxu0 %v3050
  %3208 = vmatprep.subr.mxu0 0.0
  %3209 = vmatpush1.msra.mxu0 %v3049
  %3210 = vmatprep.subr.mxu0 0.0
  %3211 = vmatpush2.msra.mxu0 0.0
  %3212 = vmatprep.subr.mxu0 0.0
  %3213 = vmatpush2.msra.mxu0 0.0
  %3214 = vmatprep.subr.mxu0 0.0
  %3215 = vmatpush2.msra.mxu0 0.0
  %3216 = vmatprep.subr.mxu0 0.0
  %3217 = vmatpush2.msra.mxu0 0.0
  %3218 = vmatprep.subr.mxu0 0.0
  %3219 = vmatpush2.msra.mxu0 0.0
  %3220 = vmatprep.subr.mxu0 0.0
  %3221 = vmatpush2.msra.mxu0 0.0
  %3222 = vmatprep.subr.mxu0 0.0
  %3223 = vmatpush2.msra.mxu0 0.0
  %3224 = vmatprep.subr.mxu0 0.0
  %3225 = vmatpush2.msra.mxu0 0.0
  %3226 = vmatprep.subr.mxu0 0.0
  %3227 = vmatpush2.msra.mxu0 0.0
  %3228 = vmatprep.subr.mxu0 0.0
  %3229 = vmatpush2.msra.mxu0 0.0
  %3230 = vmatprep.subr.mxu0 0.0
  %3231 = vmatpush2.msra.mxu0 0.0
  %3232 = vmatprep.subr.mxu0 0.0
  %3233 = vmatpush2.msra.mxu0 0.0
  %3234 = vmatprep.subr.mxu0 0.0
  %3235 = vmatpush2.msra.mxu0 0.0
  %3236 = vmatprep.subr.mxu0 0.0
  %3237 = vmatpush2.msra.mxu0 0.0
  %3238 = vmatprep.subr.mxu0 0.0
  %3239 = vmatpush2.msra.mxu0 0.0
  %3240 = vmatprep.subr.mxu0 0.0
  %3241 = vmatpush2.msra.mxu0 0.0
  %3242 = vmatprep.mubr.f32.mxu0 0.0
  %3243 = vmatmul.mubr.f32.gmra.mxu0 %v3173
  %v3244 = vpop.f32.mrf.mxu0
  %v3245 = vadd.f32 0.0, %v3244
  %v3246 = vpop.f32.mrf.mxu0
  %3247 = vmatprep.mubr.f32.mxu0 0.0
  %3248 = vmatmul.mubr.f32.gmra.mxu0 %v3176
  %v3249 = vpop.f32.mrf.mxu0
  %v3250 = vadd.f32 0.0, %v3249
  %v3251 = vpop.f32.mrf.mxu0
  %3252 = vdwg.mxu0
  %v3253 = vld [vmem:[%s11] sm:$0xff]
  %v3254 = vld [vmem:[%s11 + $0x8] sm:$0xff]
  %v3255 = vld [vmem:[%s11 + $0x10] sm:$0xff]
  %v3256 = vld [vmem:[%s11 + $0x18] sm:$0xff]
  %v3257 = vld [vmem:[%s12] sm:$0xff]
  %v3258 = vld [vmem:[%s12 + $0x8] sm:$0xff]
  %v3259 = vld [vmem:[%s12 + $0x10] sm:$0xff]
  %v3260 = vld [vmem:[%s12 + $0x18] sm:$0xff]
  %v3262 = vsel %vm2172, %v3245, 0
  %v3265 = vsel %vm2172, %v3250, 0
  %3267 = vmatprep.subr.mxu0 0.0
  %3268 = vmatpush1.msra.mxu0 0.0
  %3269 = vmatprep.subr.mxu0 0.0
  %3270 = vmatpush1.msra.mxu0 0.0
  %3271 = vmatprep.subr.mxu0 0.0
  %3272 = vmatpush1.msra.mxu0 0.0
  %3273 = vmatprep.subr.mxu0 0.0
  %3274 = vmatpush1.msra.mxu0 0.0
  %3275 = vmatprep.subr.mxu0 0.0
  %3276 = vmatpush1.msra.mxu0 0.0
  %3277 = vmatprep.subr.mxu0 0.0
  %3278 = vmatpush1.msra.mxu0 0.0
  %3279 = vmatprep.subr.mxu0 0.0
  %3280 = vmatpush1.msra.mxu0 0.0
  %3281 = vmatprep.subr.mxu0 0.0
  %3282 = vmatpush1.msra.mxu0 0.0
  %3283 = vmatprep.subr.mxu0 0.0
  %3284 = vmatpush1.msra.mxu0 0.0
  %3285 = vmatprep.subr.mxu0 0.0
  %3286 = vmatpush1.msra.mxu0 0.0
  %3287 = vmatprep.subr.mxu0 0.0
  %3288 = vmatpush1.msra.mxu0 0.0
  %3289 = vmatprep.subr.mxu0 0.0
  %3290 = vmatpush1.msra.mxu0 0.0
  %3291 = vmatprep.subr.mxu0 0.0
  %3292 = vmatpush1.msra.mxu0 %v3260
  %3293 = vmatprep.subr.mxu0 0.0
  %3294 = vmatpush1.msra.mxu0 %v3259
  %3295 = vmatprep.subr.mxu0 0.0
  %3296 = vmatpush1.msra.mxu0 %v3258
  %3297 = vmatprep.subr.mxu0 0.0
  %3298 = vmatpush1.msra.mxu0 %v3257
  %3299 = vmatprep.subr.mxu0 0.0
  %3300 = vmatpush2.msra.mxu0 0.0
  %3301 = vmatprep.subr.mxu0 0.0
  %3302 = vmatpush2.msra.mxu0 0.0
  %3303 = vmatprep.subr.mxu0 0.0
  %3304 = vmatpush2.msra.mxu0 0.0
  %3305 = vmatprep.subr.mxu0 0.0
  %3306 = vmatpush2.msra.mxu0 0.0
  %3307 = vmatprep.subr.mxu0 0.0
  %3308 = vmatpush2.msra.mxu0 0.0
  %3309 = vmatprep.subr.mxu0 0.0
  %3310 = vmatpush2.msra.mxu0 0.0
  %3311 = vmatprep.subr.mxu0 0.0
  %3312 = vmatpush2.msra.mxu0 0.0
  %3313 = vmatprep.subr.mxu0 0.0
  %3314 = vmatpush2.msra.mxu0 0.0
  %3315 = vmatprep.subr.mxu0 0.0
  %3316 = vmatpush2.msra.mxu0 0.0
  %3317 = vmatprep.subr.mxu0 0.0
  %3318 = vmatpush2.msra.mxu0 0.0
  %3319 = vmatprep.subr.mxu0 0.0
  %3320 = vmatpush2.msra.mxu0 0.0
  %3321 = vmatprep.subr.mxu0 0.0
  %3322 = vmatpush2.msra.mxu0 0.0
  %3323 = vmatprep.subr.mxu0 0.0
  %3324 = vmatpush2.msra.mxu0 0.0
  %3325 = vmatprep.subr.mxu0 0.0
  %3326 = vmatpush2.msra.mxu0 0.0
  %3327 = vmatprep.subr.mxu0 0.0
  %3328 = vmatpush2.msra.mxu0 0.0
  %3329 = vmatprep.subr.mxu0 0.0
  %3330 = vmatpush2.msra.mxu0 0.0
  %3331 = vmatprep.mubr.f32.mxu0 0.0
  %3332 = vmatmul.mubr.f32.gmra.mxu0 %v3262
  %v3333 = vpop.f32.mrf.mxu0
  %v3334 = vadd.f32 0.0, %v3333
  %v3335 = vpop.f32.mrf.mxu0
  %3336 = vmatprep.mubr.f32.mxu0 0.0
  %3337 = vmatmul.mubr.f32.gmra.mxu0 %v3265
  %v3338 = vpop.f32.mrf.mxu0
  %v3339 = vadd.f32 0.0, %v3338
  %v3340 = vpop.f32.mrf.mxu0
  %3341 = vdwg.mxu0
  %3342 = vmatprep.subr.mxu0 0.0
  %3343 = vmatpush1.msra.mxu0 0.0
  %3344 = vmatprep.subr.mxu0 0.0
  %3345 = vmatpush1.msra.mxu0 0.0
  %3346 = vmatprep.subr.mxu0 0.0
  %3347 = vmatpush1.msra.mxu0 0.0
  %3348 = vmatprep.subr.mxu0 0.0
  %3349 = vmatpush1.msra.mxu0 0.0
  %3350 = vmatprep.subr.mxu0 0.0
  %3351 = vmatpush1.msra.mxu0 0.0
  %3352 = vmatprep.subr.mxu0 0.0
  %3353 = vmatpush1.msra.mxu0 0.0
  %3354 = vmatprep.subr.mxu0 0.0
  %3355 = vmatpush1.msra.mxu0 0.0
  %3356 = vmatprep.subr.mxu0 0.0
  %3357 = vmatpush1.msra.mxu0 0.0
  %3358 = vmatprep.subr.mxu0 0.0
  %3359 = vmatpush1.msra.mxu0 0.0
  %3360 = vmatprep.subr.mxu0 0.0
  %3361 = vmatpush1.msra.mxu0 0.0
  %3362 = vmatprep.subr.mxu0 0.0
  %3363 = vmatpush1.msra.mxu0 0.0
  %3364 = vmatprep.subr.mxu0 0.0
  %3365 = vmatpush1.msra.mxu0 0.0
  %3366 = vmatprep.subr.mxu0 0.0
  %3367 = vmatpush1.msra.mxu0 %v3256
  %3368 = vmatprep.subr.mxu0 0.0
  %3369 = vmatpush1.msra.mxu0 %v3255
  %3370 = vmatprep.subr.mxu0 0.0
  %3371 = vmatpush1.msra.mxu0 %v3254
  %3372 = vmatprep.subr.mxu0 0.0
  %3373 = vmatpush1.msra.mxu0 %v3253
  %3374 = vmatprep.subr.mxu0 0.0
  %3375 = vmatpush2.msra.mxu0 0.0
  %3376 = vmatprep.subr.mxu0 0.0
  %3377 = vmatpush2.msra.mxu0 0.0
  %3378 = vmatprep.subr.mxu0 0.0
  %3379 = vmatpush2.msra.mxu0 0.0
  %3380 = vmatprep.subr.mxu0 0.0
  %3381 = vmatpush2.msra.mxu0 0.0
  %3382 = vmatprep.subr.mxu0 0.0
  %3383 = vmatpush2.msra.mxu0 0.0
  %3384 = vmatprep.subr.mxu0 0.0
  %3385 = vmatpush2.msra.mxu0 0.0
  %3386 = vmatprep.subr.mxu0 0.0
  %3387 = vmatpush2.msra.mxu0 0.0
  %3388 = vmatprep.subr.mxu0 0.0
  %3389 = vmatpush2.msra.mxu0 0.0
  %3390 = vmatprep.subr.mxu0 0.0
  %3391 = vmatpush2.msra.mxu0 0.0
  %3392 = vmatprep.subr.mxu0 0.0
  %3393 = vmatpush2.msra.mxu0 0.0
  %3394 = vmatprep.subr.mxu0 0.0
  %3395 = vmatpush2.msra.mxu0 0.0
  %3396 = vmatprep.subr.mxu0 0.0
  %3397 = vmatpush2.msra.mxu0 0.0
  %3398 = vmatprep.subr.mxu0 0.0
  %3399 = vmatpush2.msra.mxu0 0.0
  %3400 = vmatprep.subr.mxu0 0.0
  %3401 = vmatpush2.msra.mxu0 0.0
  %3402 = vmatprep.subr.mxu0 0.0
  %3403 = vmatpush2.msra.mxu0 0.0
  %3404 = vmatprep.subr.mxu0 0.0
  %3405 = vmatpush2.msra.mxu0 0.0
  %3406 = vmatprep.mubr.f32.mxu0 0.0
  %3407 = vmatmul.mubr.f32.gmra.mxu0 %v3065
  %v3408 = vpop.f32.mrf.mxu0
  %v3409 = vadd.f32 %v3334, %v3408
  %v3410 = vpop.f32.mrf.mxu0
  %3411 = vmatprep.mubr.f32.mxu0 0.0
  %3412 = vmatmul.mubr.f32.gmra.mxu0 %v3067
  %v3413 = vpop.f32.mrf.mxu0
  %v3414 = vadd.f32 %v3339, %v3413
  %v3415 = vpop.f32.mrf.mxu0
  %3416 = vdwg.mxu0
  %v3417 = vtanh.pop %v3409
  %v3418 = vtanh.pop %v3414
  %v3419 = vld [vmem:[%s13] sm:$0xff]
  %v3420 = vld [vmem:[%s13 + $0x8] sm:$0xff]
  %v3421 = vld [vmem:[%s13 + $0x10] sm:$0xff]
  %v3422 = vld [vmem:[%s13 + $0x18] sm:$0xff]
  %v3423 = vld [vmem:[%s14] sm:$0x1]
  %v3425 = vlaneseq
  %v3426 = vshrl.u32 %v3425, 7
  %v3427 = vsub.s32 0, %v3426
  %v3428 = vrot.slane %v3423, %v3427
  %v3431 = vsel %vm2172, %v3417, 0
  %v3434 = vsel %vm2172, %v3418, 0
  %3436 = vmatprep.subr.mxu0 0.0
  %3437 = vmatpush1.msra.mxu0 0.0
  %3438 = vmatprep.subr.mxu0 0.0
  %3439 = vmatpush1.msra.mxu0 0.0
  %3440 = vmatprep.subr.mxu0 0.0
  %3441 = vmatpush1.msra.mxu0 0.0
  %3442 = vmatprep.subr.mxu0 0.0
  %3443 = vmatpush1.msra.mxu0 0.0
  %3444 = vmatprep.subr.mxu0 0.0
  %3445 = vmatpush1.msra.mxu0 0.0
  %3446 = vmatprep.subr.mxu0 0.0
  %3447 = vmatpush1.msra.mxu0 0.0
  %3448 = vmatprep.subr.mxu0 0.0
  %3449 = vmatpush1.msra.mxu0 0.0
  %3450 = vmatprep.subr.mxu0 0.0
  %3451 = vmatpush1.msra.mxu0 0.0
  %3452 = vmatprep.subr.mxu0 0.0
  %3453 = vmatpush1.msra.mxu0 0.0
  %3454 = vmatprep.subr.mxu0 0.0
  %3455 = vmatpush1.msra.mxu0 0.0
  %3456 = vmatprep.subr.mxu0 0.0
  %3457 = vmatpush1.msra.mxu0 0.0
  %3458 = vmatprep.subr.mxu0 0.0
  %3459 = vmatpush1.msra.mxu0 0.0
  %3460 = vmatprep.subr.mxu0 0.0
  %3461 = vmatpush1.msra.mxu0 %v3422
  %3462 = vmatprep.subr.mxu0 0.0
  %3463 = vmatpush1.msra.mxu0 %v3421
  %3464 = vmatprep.subr.mxu0 0.0
  %3465 = vmatpush1.msra.mxu0 %v3420
  %3466 = vmatprep.subr.mxu0 0.0
  %3467 = vmatpush1.msra.mxu0 %v3419
  %3468 = vmatprep.subr.mxu0 0.0
  %3469 = vmatpush2.msra.mxu0 0.0
  %3470 = vmatprep.subr.mxu0 0.0
  %3471 = vmatpush2.msra.mxu0 0.0
  %3472 = vmatprep.subr.mxu0 0.0
  %3473 = vmatpush2.msra.mxu0 0.0
  %3474 = vmatprep.subr.mxu0 0.0
  %3475 = vmatpush2.msra.mxu0 0.0
  %3476 = vmatprep.subr.mxu0 0.0
  %3477 = vmatpush2.msra.mxu0 0.0
  %3478 = vmatprep.subr.mxu0 0.0
  %3479 = vmatpush2.msra.mxu0 0.0
  %3480 = vmatprep.subr.mxu0 0.0
  %3481 = vmatpush2.msra.mxu0 0.0
  %3482 = vmatprep.subr.mxu0 0.0
  %3483 = vmatpush2.msra.mxu0 0.0
  %3484 = vmatprep.subr.mxu0 0.0
  %3485 = vmatpush2.msra.mxu0 0.0
  %3486 = vmatprep.subr.mxu0 0.0
  %3487 = vmatpush2.msra.mxu0 0.0
  %3488 = vmatprep.subr.mxu0 0.0
  %3489 = vmatpush2.msra.mxu0 0.0
  %3490 = vmatprep.subr.mxu0 0.0
  %3491 = vmatpush2.msra.mxu0 0.0
  %3492 = vmatprep.subr.mxu0 0.0
  %3493 = vmatpush2.msra.mxu0 0.0
  %3494 = vmatprep.subr.mxu0 0.0
  %3495 = vmatpush2.msra.mxu0 0.0
  %3496 = vmatprep.subr.mxu0 0.0
  %3497 = vmatpush2.msra.mxu0 0.0
  %3498 = vmatprep.subr.mxu0 0.0
  %3499 = vmatpush2.msra.mxu0 0.0
  %3500 = vmatprep.mubr.f32.mxu0 0.0
  %3501 = vmatmul.mubr.f32.gmra.mxu0 %v3431
  %v3502 = vpop.f32.mrf.mxu0
  %v3503 = vadd.f32 %v3428, %v3502
  %v3504 = vpop.f32.mrf.mxu0
  %3505 = vmatprep.mubr.f32.mxu0 0.0
  %3506 = vmatmul.mubr.f32.gmra.mxu0 %v3434
  %v3507 = vpop.f32.mrf.mxu0
  %v3508 = vadd.f32 %v3428, %v3507
  %v3509 = vpop.f32.mrf.mxu0
  %3510 = vdwg.mxu0
  %3511 = vst [vmem:[%s16] sm:$0xff] %v3503
  %3512 = vst [vmem:[%s16 + $0x8] sm:$0xff] %v3508
  // Predicated region
  $region66: #{seq2seq_forward_pallas.1} parent=0 // pred_check
    _
  $region67: #{seq2seq_forward_pallas.1} parent=0 // pred_check_branch
    %3514 = sbr.rel (0) target = $region69
  $region68: #{seq2seq_forward_pallas.1} parent=0 // pred_region
    _
  $region69: #{seq2seq_forward_pallas.1} parent=0 // pred_fallthru
    _
  // Predicated region
  $region70: #{seq2seq_forward_pallas.1} parent=0 // pred_check
    _
  $region71: #{seq2seq_forward_pallas.1} parent=0 // pred_check_branch
    %3516 = sbr.rel (0) target = $region73
  $region72: #{seq2seq_forward_pallas.1} parent=0 // pred_region
    _
  $region73: #{seq2seq_forward_pallas.1} parent=0 // pred_fallthru
    _

</llo_original>
